<compile_context>
chip_gen: v7x
topology: tpu7x:2x2x1
jax: 0.10.0
libtpu: 0.0.40
codegen_flags: <defaults>
</compile_context>

<pallas_src>
import jax
import jax.numpy as jnp
from jax import lax
from jax.experimental import pallas as pl
from jax.experimental.pallas import tpu as pltpu

# ---------------- model hyper-parameters ----------------
K = 8                      # conv kernel_size
CIN = 4                    # one-hot DNA channels
C1, C2, C3 = 32, 48, 96    # out_channels (scaled down from [320, 480, 960])
L0 = 256                   # inputsize
POOL = 4                   # MaxPool1d(kernel=4, stride=4)
H1 = 925                   # Linear1 hidden size
H1P = 1024                 # H1 zero-padded to a full 128-lane multiple
NOUT = 2                   # Linear2 output size

L1 = L0 - K + 1                 # 249  (after Conv1)
P1 = (L1 - POOL) // POOL + 1    # 62   (after MaxPool)
L2 = P1 - K + 1                 # 55   (after Conv2)
P2 = (L2 - POOL) // POOL + 1    # 13   (after MaxPool)
L3 = P2 - K + 1                 # 6    (after Conv3)
LIN_SIZE = C3 * L3              # 576  (== self.lin_size)


def _round_up(x, m):
    return -(-x // m) * m


# ---------------- Pallas kernel (whole batch in one grid step) ----------------
def _deepsea_kernel(xc_ref, w1_ref, b1_ref, w2_ref, b2_ref, w3_ref, b3_ref,
                    lw1_ref, lb1_ref, lw2t_ref, lb2_ref, out_ref,
                    a1_ref, p1_ref, a2_ref, p2_ref, a3_ref):
    bb = out_ref.shape[0]                  # batch folded into matmul M
    nr2 = a2_ref.shape[0]                  # bb*P1 - (K-1) conv2 output rows
    nr3 = bb * P2 - (K - 1)                # conv3 output rows

    # ---- Conv1 + ReLU: ONE batch-folded matmul over pre-packed im2col ----
    a1 = jnp.dot(xc_ref[...], w1_ref[...], preferred_element_type=jnp.float32)
    a1_ref[...] = jnp.maximum(a1 + b1_ref[...], 0.0)          # (nr1, C1)

    # ---- MaxPool1d(4,4) per batch element via strided sublane reads ----
    for b in range(bb):
        m = a1_ref[pl.ds(b * L1, P1, stride=POOL), :]
        for j in range(1, POOL):
            m = jnp.maximum(m, a1_ref[pl.ds(b * L1 + j, P1, stride=POOL), :])
        p1_ref[pl.ds(b * P1, P1), :] = m                       # (P1, C1)
    # Dropout(p=0.2) is identity in eval mode.
    # TODO(synk): training-mode dropout (pltpu.prng_* masking) not implemented.

    # ---- Conv2 + ReLU: K accumulated tap matmuls (no lane-concat im2col) ----
    # Rows [55, 62) mix batch elements and are ignored downstream.
    acc2 = jnp.zeros((nr2, C2), jnp.float32)
    for k in range(K):
        lhs = p1_ref[pl.ds(k, nr2), :].astype(jnp.bfloat16)
        acc2 = acc2 + jnp.dot(lhs, w2_ref[k * C1:(k + 1) * C1, :],
                              preferred_element_type=jnp.float32)
    a2_ref[...] = jnp.maximum(acc2 + b2_ref[...], 0.0)         # (nr2, C2)

    # ---- MaxPool1d(4,4) ----
    for b in range(bb):
        m = a2_ref[pl.ds(b * P1, P2, stride=POOL), :]
        for j in range(1, POOL):
            m = jnp.maximum(m, a2_ref[pl.ds(b * P1 + j, P2, stride=POOL), :])
        p2_ref[pl.ds(b * P2, P2), :] = m                       # (P2, C2)

    # ---- Conv3 + ReLU: K accumulated tap matmuls ----
    acc3 = jnp.zeros((nr3, C3), jnp.float32)
    for k in range(K):
        lhs = p2_ref[pl.ds(k, nr3), :].astype(jnp.bfloat16)
        acc3 = acc3 + jnp.dot(lhs, w3_ref[k * C2:(k + 1) * C2, :],
                              preferred_element_type=jnp.float32)
    a3_ref[0:nr3, :] = jnp.maximum(acc3 + b3_ref[...], 0.0)    # (nr3, C3)
    # Dropout(p=0.5) is identity in eval mode.

    # ---- Linear1 + ReLU: length-major flatten folded into L3 tap matmuls ----
    # Batch b's conv3 row l lives at flat row b*P2 + l  ->  stride-P2 gather.
    h = jnp.zeros((bb, H1P), jnp.float32)
    for l in range(L3):
        rows = a3_ref[pl.ds(l, bb, stride=P2), :].astype(jnp.bfloat16)
        h = h + jnp.dot(rows, lw1_ref[l], preferred_element_type=jnp.float32)
    h = jnp.maximum(h + lb1_ref[...], 0.0)                     # (bb, H1P)

    # ---- Linear2 (weight stored transposed; padded H1 columns are zero) ----
    out = lax.dot_general(h.astype(jnp.bfloat16), lw2t_ref[...],
                          (((1,), (1,)), ((), ())),
                          preferred_element_type=jnp.float32)
    out_ref[...] = out + lb2_ref[...]                          # (bb, NOUT)


# ---------------- wrapper ----------------
def _prep_params(params):
    """Cast weights to bf16, pad H1->H1P, repack Linear1 as (L3, C3, H1P)."""
    w1, b1, w2, b2, w3, b3, lw1, lb1, lw2t, lb2 = params
    bf16 = jnp.bfloat16
    pad = ((0, 0), (0, H1P - H1))
    lw1_3d = jnp.pad(lw1, pad).reshape(L3, C3, H1P).astype(bf16)
    lb1_p = jnp.pad(lb1, pad)
    lw2t_p = jnp.pad(lw2t, pad).astype(bf16)
    return (w1.astype(bf16), b1, w2.astype(bf16), b2, w3.astype(bf16), b3,
            lw1_3d, lb1_p, lw2t_p, lb2)


@jax.jit
def deepsea_forward(x_ncl, params):
    """x_ncl: (B, CIN, L0) in PyTorch NCL layout.  Returns (B, NOUT) logits."""
    w1, b1, w2, b2, w3, b3, lw1_3d, lb1, lw2t, lb2 = _prep_params(params)
    B = x_ncl.shape[0]
    nr1 = _round_up(B * L1 + POOL, 8)       # padded conv1 rows (keeps strided
                                            # pool reads safely in-bounds)
    nr2 = B * P1 - (K - 1)                  # conv2 output rows
    a3_rows = _round_up(L3 - 1 + B * P2, 8)  # padded conv3 scratch rows

    # Conv1 im2col pre-packed lane-dense and batch-folded: (nr1, K*CIN) bf16.
    x_nlc = jnp.transpose(x_ncl, (0, 2, 1)).astype(jnp.float32)
    x_cols = jnp.concatenate([x_nlc[:, k:k + L1, :] for k in range(K)],
                             axis=-1)
    x_cols = x_cols.reshape(B * L1, K * CIN)
    x_cols = jnp.pad(x_cols, ((0, nr1 - B * L1), (0, 0))).astype(jnp.bfloat16)

    flops = 2 * (nr1 * (K * CIN) * C1 + nr2 * (K * C1) * C2
                 + (B * P2) * (K * C2) * C3 + B * LIN_SIZE * H1P
                 + B * H1P * NOUT)
    bytes_accessed = (2 * (nr1 * K * CIN + K * CIN * C1 + K * C1 * C2
                           + K * C2 * C3 + LIN_SIZE * H1P + NOUT * H1P)
                      + 4 * (C1 + C2 + C3 + H1P + NOUT + B * NOUT))

    out = pl.pallas_call(
        _deepsea_kernel,
        out_shape=jax.ShapeDtypeStruct((B, NOUT), jnp.float32),
        grid_spec=pltpu.PrefetchScalarGridSpec(
            num_scalar_prefetch=0,
            grid=(1,),
            in_specs=[
                pl.BlockSpec((nr1, K * CIN), lambda i: (0, 0)),    # x (im2col)
                pl.BlockSpec((K * CIN, C1), lambda i: (0, 0)),     # conv1 w
                pl.BlockSpec((1, C1), lambda i: (0, 0)),           # conv1 b
                pl.BlockSpec((K * C1, C2), lambda i: (0, 0)),      # conv2 w
                pl.BlockSpec((1, C2), lambda i: (0, 0)),           # conv2 b
                pl.BlockSpec((K * C2, C3), lambda i: (0, 0)),      # conv3 w
                pl.BlockSpec((1, C3), lambda i: (0, 0)),           # conv3 b
                pl.BlockSpec((L3, C3, H1P), lambda i: (0, 0, 0)),  # linear1 w
                pl.BlockSpec((1, H1P), lambda i: (0, 0)),          # linear1 b
                pl.BlockSpec((NOUT, H1P), lambda i: (0, 0)),       # linear2 w^T
                pl.BlockSpec((1, NOUT), lambda i: (0, 0)),         # linear2 b
            ],
            out_specs=pl.BlockSpec((B, NOUT), lambda i: (0, 0)),
            scratch_shapes=[
                pltpu.VMEM((nr1, C1), jnp.float32),       # conv1 activations
                pltpu.VMEM((B * P1, C1), jnp.float32),    # pooled-1
                pltpu.VMEM((nr2, C2), jnp.float32),       # conv2 activations
                pltpu.VMEM((B * P2, C2), jnp.float32),    # pooled-2
                pltpu.VMEM((a3_rows, C3), jnp.float32),   # conv3 activations
            ]),
        compiler_params=pltpu.CompilerParams(
            dimension_semantics=("arbitrary",)),
        cost_estimate=pl.CostEstimate(flops=flops, transcendentals=0,
                                      bytes_accessed=bytes_accessed),
    )(x_cols, w1, b1, w2, b2, w3, b3, lw1_3d, lb1, lw2t, lb2)
    return out


# ---------------- deterministic synthetic parameters ----------------
def init_params(key):
    ks = jax.random.split(key, 10)
    n = lambda k, shape, s: s * jax.random.normal(k, shape, jnp.float32)
    return (
        n(ks[0], (K * CIN, C1), 0.10),   # Conv1 weight  (tap-major packed)
        n(ks[1], (1, C1), 0.10),         # Conv1 bias
        n(ks[2], (K * C1, C2), 0.05),    # Conv2 weight
        n(ks[3], (1, C2), 0.05),         # Conv2 bias
        n(ks[4], (K * C2, C3), 0.05),    # Conv3 weight
        n(ks[5], (1, C3), 0.05),         # Conv3 bias
        n(ks[6], (LIN_SIZE, H1), 0.03),  # Linear1 weight (length-major flat)
        n(ks[7], (1, H1), 0.03),         # Linear1 bias
        n(ks[8], (NOUT, H1), 0.03),      # Linear2 weight (transposed)
        n(ks[9], (1, NOUT), 0.03),       # Linear2 bias
    )


# ---------------- pure-JAX reference (same layout / same params) -------------
def ref_forward(x_ncl, params):
    w1, b1, w2, b2, w3, b3, lw1, lb1, lw2t, lb2 = params
    x = jnp.transpose(x_ncl, (0, 2, 1)).astype(jnp.float32)

    def conv(xx, w, b):
        cin = xx.shape[-1]
        k = w.shape[0] // cin
        lout = xx.shape[1] - k + 1
        cols = jnp.concatenate([xx[:, t:t + lout, :] for t in range(k)],
                               axis=-1)
        return jnp.einsum('bld,dc->blc', cols, w) + b[None]

    def pool(xx):
        bsz, ll, cc = xx.shape
        p = ll // POOL
        return xx[:, :p * POOL, :].reshape(bsz, p, POOL, cc).max(axis=2)

    h = pool(jax.nn.relu(conv(x, w1, b1)))
    h = pool(jax.nn.relu(conv(h, w2, b2)))
    h = jax.nn.relu(conv(h, w3, b3))                   # (B, L3, C3)
    h = h.reshape(x.shape[0], LIN_SIZE)                # length-major flatten
    h = jax.nn.relu(jnp.dot(h, lw1) + lb1[0])
    return jnp.dot(h, lw2t.T) + lb2[0]


if __name__ == "__main__":
    key = jax.random.PRNGKey(0)
    kx, kp = jax.random.split(key)
    B = 2
    x = jax.random.normal(kx, (B, CIN, L0), jnp.float32)   # PyTorch NCL layout
    params = init_params(kp)

    out = jax.block_until_ready(deepsea_forward(x, params))
    assert out.shape == (B, NOUT), out.shape

    ref = ref_forward(x, params)
    max_diff = float(jnp.max(jnp.abs(out - ref)))
    assert jnp.allclose(out, ref, rtol=2e-2, atol=2e-2), f"max diff {max_diff}"

    print("KERNEL_OK")
</pallas_src>

<mosaic_0001>
module attributes {stable_mosaic.version = 11 : i64} {
  func.func @_deepsea_kernel(%arg0: i32, %arg1: memref<504x32xbf16, #tpu.memory_space<vmem>>, %arg2: memref<32x32xbf16, #tpu.memory_space<vmem>>, %arg3: memref<1x32xf32, #tpu.memory_space<vmem>>, %arg4: memref<256x48xbf16, #tpu.memory_space<vmem>>, %arg5: memref<1x48xf32, #tpu.memory_space<vmem>>, %arg6: memref<384x96xbf16, #tpu.memory_space<vmem>>, %arg7: memref<1x96xf32, #tpu.memory_space<vmem>>, %arg8: memref<6x96x1024xbf16, #tpu.memory_space<vmem>>, %arg9: memref<1x1024xf32, #tpu.memory_space<vmem>>, %arg10: memref<2x1024xbf16, #tpu.memory_space<vmem>>, %arg11: memref<1x2xf32, #tpu.memory_space<vmem>>, %arg12: memref<2x2xf32, #tpu.memory_space<vmem>>, %arg13: memref<504x32xf32, #tpu.memory_space<vmem>>, %arg14: memref<124x32xf32, #tpu.memory_space<vmem>>, %arg15: memref<117x48xf32, #tpu.memory_space<vmem>>, %arg16: memref<26x48xf32, #tpu.memory_space<vmem>>, %arg17: memref<32x96xf32, #tpu.memory_space<vmem>>) attributes {dimension_semantics = [#tpu.dimension_semantics<arbitrary>], iteration_bounds = array<i64: 1>, scalar_prefetch = 0 : i64, scratch_operands = 5 : i64, tpu.core_type = #tpu.core_type<tc>, window_params = [{pipeline_mode = #tpu.pipeline_mode<synchronous>, transform_indices = @transform_0, window_bounds = array<i64: 504, 32>}, {pipeline_mode = #tpu.pipeline_mode<synchronous>, transform_indices = @transform_1, window_bounds = array<i64: 32, 32>}, {pipeline_mode = #tpu.pipeline_mode<synchronous>, transform_indices = @transform_2, window_bounds = array<i64: 1, 32>}, {pipeline_mode = #tpu.pipeline_mode<synchronous>, transform_indices = @transform_3, window_bounds = array<i64: 256, 48>}, {pipeline_mode = #tpu.pipeline_mode<synchronous>, transform_indices = @transform_4, window_bounds = array<i64: 1, 48>}, {pipeline_mode = #tpu.pipeline_mode<synchronous>, transform_indices = @transform_5, window_bounds = array<i64: 384, 96>}, {pipeline_mode = #tpu.pipeline_mode<synchronous>, transform_indices = @transform_6, window_bounds = array<i64: 1, 96>}, {pipeline_mode = #tpu.pipeline_mode<synchronous>, transform_indices = @transform_7, window_bounds = array<i64: 6, 96, 1024>}, {pipeline_mode = #tpu.pipeline_mode<synchronous>, transform_indices = @transform_8, window_bounds = array<i64: 1, 1024>}, {pipeline_mode = #tpu.pipeline_mode<synchronous>, transform_indices = @transform_9, window_bounds = array<i64: 2, 1024>}, {pipeline_mode = #tpu.pipeline_mode<synchronous>, transform_indices = @transform_10, window_bounds = array<i64: 1, 2>}, {pipeline_mode = #tpu.pipeline_mode<synchronous>, transform_indices = @transform_11, window_bounds = array<i64: 2, 2>}]} {
    %c0 = arith.constant 0 : index
    %c0_0 = arith.constant 0 : index
    %0 = vector.load %arg1[%c0, %c0_0] : memref<504x32xbf16, #tpu.memory_space<vmem>>, vector<504x32xbf16>
    %c0_1 = arith.constant 0 : index
    %c0_2 = arith.constant 0 : index
    %1 = vector.load %arg2[%c0_1, %c0_2] : memref<32x32xbf16, #tpu.memory_space<vmem>>, vector<32x32xbf16>
    %cst = arith.constant dense<0.000000e+00> : vector<504x32xf32>
    %2 = tpu.matmul %0, %1, %cst {dimension_numbers = #tpu.dot_dimension_numbers<[1], [0], [0], [1], [0, 0, 1, 1], [], []>} : vector<504x32xbf16>, vector<32x32xbf16>, vector<504x32xf32> -> vector<504x32xf32>
    %c0_3 = arith.constant 0 : index
    %c0_4 = arith.constant 0 : index
    %3 = vector.load %arg3[%c0_3, %c0_4] : memref<1x32xf32, #tpu.memory_space<vmem>>, vector<1x32xf32>
    %4 = vector.broadcast %3 : vector<1x32xf32> to vector<504x32xf32>
    %5 = arith.addf %2, %4 : vector<504x32xf32>
    %cst_5 = arith.constant 0.000000e+00 : f32
    %6 = vector.broadcast %cst_5 : f32 to vector<504x32xf32>
    %7 = arith.maximumf %5, %6 : vector<504x32xf32>
    %c0_6 = arith.constant 0 : index
    %c0_7 = arith.constant 0 : index
    %8 = vector.load %arg13[%c0_6, %c0_7] : memref<504x32xf32, #tpu.memory_space<vmem>>, vector<504x32xf32>
    tpu.vector_store %arg13[%c0_6, %c0_7], %7 {strides = array<i32>} : memref<504x32xf32, #tpu.memory_space<vmem>>, vector<504x32xf32>,
    %c0_8 = arith.constant 0 : index
    %c0_9 = arith.constant 0 : index
    %9 = tpu.strided_load %arg13[%c0_8, %c0_9] {strides = array<i32: 4, 1>} : memref<504x32xf32, #tpu.memory_space<vmem>>, vector<62x32xf32>
    %c1 = arith.constant 1 : index
    %c0_10 = arith.constant 0 : index
    %10 = tpu.strided_load %arg13[%c1, %c0_10] {strides = array<i32: 4, 1>} : memref<504x32xf32, #tpu.memory_space<vmem>>, vector<62x32xf32>
    %11 = arith.maximumf %9, %10 : vector<62x32xf32>
    %c2 = arith.constant 2 : index
    %c0_11 = arith.constant 0 : index
    %12 = tpu.strided_load %arg13[%c2, %c0_11] {strides = array<i32: 4, 1>} : memref<504x32xf32, #tpu.memory_space<vmem>>, vector<62x32xf32>
    %13 = arith.maximumf %11, %12 : vector<62x32xf32>
    %c3 = arith.constant 3 : index
    %c0_12 = arith.constant 0 : index
    %14 = tpu.strided_load %arg13[%c3, %c0_12] {strides = array<i32: 4, 1>} : memref<504x32xf32, #tpu.memory_space<vmem>>, vector<62x32xf32>
    %15 = arith.maximumf %13, %14 : vector<62x32xf32>
    %c0_13 = arith.constant 0 : index
    %c0_14 = arith.constant 0 : index
    %16 = vector.load %arg14[%c0_13, %c0_14] : memref<124x32xf32, #tpu.memory_space<vmem>>, vector<62x32xf32>
    tpu.vector_store %arg14[%c0_13, %c0_14], %15 {strides = array<i32>} : memref<124x32xf32, #tpu.memory_space<vmem>>, vector<62x32xf32>,
    %c249 = arith.constant 249 : index
    %c0_15 = arith.constant 0 : index
    %17 = tpu.strided_load %arg13[%c249, %c0_15] {strides = array<i32: 4, 1>} : memref<504x32xf32, #tpu.memory_space<vmem>>, vector<62x32xf32>
    %c250 = arith.constant 250 : index
    %c0_16 = arith.constant 0 : index
    %18 = tpu.strided_load %arg13[%c250, %c0_16] {strides = array<i32: 4, 1>} : memref<504x32xf32, #tpu.memory_space<vmem>>, vector<62x32xf32>
    %19 = arith.maximumf %17, %18 : vector<62x32xf32>
    %c251 = arith.constant 251 : index
    %c0_17 = arith.constant 0 : index
    %20 = tpu.strided_load %arg13[%c251, %c0_17] {strides = array<i32: 4, 1>} : memref<504x32xf32, #tpu.memory_space<vmem>>, vector<62x32xf32>
    %21 = arith.maximumf %19, %20 : vector<62x32xf32>
    %c252 = arith.constant 252 : index
    %c0_18 = arith.constant 0 : index
    %22 = tpu.strided_load %arg13[%c252, %c0_18] {strides = array<i32: 4, 1>} : memref<504x32xf32, #tpu.memory_space<vmem>>, vector<62x32xf32>
    %23 = arith.maximumf %21, %22 : vector<62x32xf32>
    %c62 = arith.constant 62 : index
    %c0_19 = arith.constant 0 : index
    %24 = vector.load %arg14[%c62, %c0_19] : memref<124x32xf32, #tpu.memory_space<vmem>>, vector<62x32xf32>
    tpu.vector_store %arg14[%c62, %c0_19], %23 {strides = array<i32>} : memref<124x32xf32, #tpu.memory_space<vmem>>, vector<62x32xf32>,
    %cst_20 = arith.constant 0.000000e+00 : f32
    %25 = vector.broadcast %cst_20 : f32 to vector<117x48xf32>
    %c0_21 = arith.constant 0 : index
    %c0_22 = arith.constant 0 : index
    %26 = vector.load %arg14[%c0_21, %c0_22] : memref<124x32xf32, #tpu.memory_space<vmem>>, vector<117x32xf32>
    %27 = arith.truncf %26 : vector<117x32xf32> to vector<117x32xbf16>
    %c0_23 = arith.constant 0 : index
    %c0_24 = arith.constant 0 : index
    %28 = vector.load %arg4[%c0_23, %c0_24] : memref<256x48xbf16, #tpu.memory_space<vmem>>, vector<32x48xbf16>
    %cst_25 = arith.constant dense<0.000000e+00> : vector<117x48xf32>
    %29 = tpu.matmul %27, %28, %cst_25 {dimension_numbers = #tpu.dot_dimension_numbers<[1], [0], [0], [1], [0, 0, 1, 1], [], []>} : vector<117x32xbf16>, vector<32x48xbf16>, vector<117x48xf32> -> vector<117x48xf32>
    %30 = arith.addf %25, %29 : vector<117x48xf32>
    %c1_26 = arith.constant 1 : index
    %c0_27 = arith.constant 0 : index
    %31 = vector.load %arg14[%c1_26, %c0_27] : memref<124x32xf32, #tpu.memory_space<vmem>>, vector<117x32xf32>
    %32 = arith.truncf %31 : vector<117x32xf32> to vector<117x32xbf16>
    %c32 = arith.constant 32 : index
    %c0_28 = arith.constant 0 : index
    %33 = vector.load %arg4[%c32, %c0_28] : memref<256x48xbf16, #tpu.memory_space<vmem>>, vector<32x48xbf16>
    %cst_29 = arith.constant dense<0.000000e+00> : vector<117x48xf32>
    %34 = tpu.matmul %32, %33, %cst_29 {dimension_numbers = #tpu.dot_dimension_numbers<[1], [0], [0], [1], [0, 0, 1, 1], [], []>} : vector<117x32xbf16>, vector<32x48xbf16>, vector<117x48xf32> -> vector<117x48xf32>
    %35 = arith.addf %30, %34 : vector<117x48xf32>
    %c2_30 = arith.constant 2 : index
    %c0_31 = arith.constant 0 : index
    %36 = vector.load %arg14[%c2_30, %c0_31] : memref<124x32xf32, #tpu.memory_space<vmem>>, vector<117x32xf32>
    %37 = arith.truncf %36 : vector<117x32xf32> to vector<117x32xbf16>
    %c64 = arith.constant 64 : index
    %c0_32 = arith.constant 0 : index
    %38 = vector.load %arg4[%c64, %c0_32] : memref<256x48xbf16, #tpu.memory_space<vmem>>, vector<32x48xbf16>
    %cst_33 = arith.constant dense<0.000000e+00> : vector<117x48xf32>
    %39 = tpu.matmul %37, %38, %cst_33 {dimension_numbers = #tpu.dot_dimension_numbers<[1], [0], [0], [1], [0, 0, 1, 1], [], []>} : vector<117x32xbf16>, vector<32x48xbf16>, vector<117x48xf32> -> vector<117x48xf32>
    %40 = arith.addf %35, %39 : vector<117x48xf32>
    %c3_34 = arith.constant 3 : index
    %c0_35 = arith.constant 0 : index
    %41 = vector.load %arg14[%c3_34, %c0_35] : memref<124x32xf32, #tpu.memory_space<vmem>>, vector<117x32xf32>
    %42 = arith.truncf %41 : vector<117x32xf32> to vector<117x32xbf16>
    %c96 = arith.constant 96 : index
    %c0_36 = arith.constant 0 : index
    %43 = vector.load %arg4[%c96, %c0_36] : memref<256x48xbf16, #tpu.memory_space<vmem>>, vector<32x48xbf16>
    %cst_37 = arith.constant dense<0.000000e+00> : vector<117x48xf32>
    %44 = tpu.matmul %42, %43, %cst_37 {dimension_numbers = #tpu.dot_dimension_numbers<[1], [0], [0], [1], [0, 0, 1, 1], [], []>} : vector<117x32xbf16>, vector<32x48xbf16>, vector<117x48xf32> -> vector<117x48xf32>
    %45 = arith.addf %40, %44 : vector<117x48xf32>
    %c4 = arith.constant 4 : index
    %c0_38 = arith.constant 0 : index
    %46 = vector.load %arg14[%c4, %c0_38] : memref<124x32xf32, #tpu.memory_space<vmem>>, vector<117x32xf32>
    %47 = arith.truncf %46 : vector<117x32xf32> to vector<117x32xbf16>
    %c128 = arith.constant 128 : index
    %c0_39 = arith.constant 0 : index
    %48 = vector.load %arg4[%c128, %c0_39] : memref<256x48xbf16, #tpu.memory_space<vmem>>, vector<32x48xbf16>
    %cst_40 = arith.constant dense<0.000000e+00> : vector<117x48xf32>
    %49 = tpu.matmul %47, %48, %cst_40 {dimension_numbers = #tpu.dot_dimension_numbers<[1], [0], [0], [1], [0, 0, 1, 1], [], []>} : vector<117x32xbf16>, vector<32x48xbf16>, vector<117x48xf32> -> vector<117x48xf32>
    %50 = arith.addf %45, %49 : vector<117x48xf32>
    %c5 = arith.constant 5 : index
    %c0_41 = arith.constant 0 : index
    %51 = vector.load %arg14[%c5, %c0_41] : memref<124x32xf32, #tpu.memory_space<vmem>>, vector<117x32xf32>
    %52 = arith.truncf %51 : vector<117x32xf32> to vector<117x32xbf16>
    %c160 = arith.constant 160 : index
    %c0_42 = arith.constant 0 : index
    %53 = vector.load %arg4[%c160, %c0_42] : memref<256x48xbf16, #tpu.memory_space<vmem>>, vector<32x48xbf16>
    %cst_43 = arith.constant dense<0.000000e+00> : vector<117x48xf32>
    %54 = tpu.matmul %52, %53, %cst_43 {dimension_numbers = #tpu.dot_dimension_numbers<[1], [0], [0], [1], [0, 0, 1, 1], [], []>} : vector<117x32xbf16>, vector<32x48xbf16>, vector<117x48xf32> -> vector<117x48xf32>
    %55 = arith.addf %50, %54 : vector<117x48xf32>
    %c6 = arith.constant 6 : index
    %c0_44 = arith.constant 0 : index
    %56 = vector.load %arg14[%c6, %c0_44] : memref<124x32xf32, #tpu.memory_space<vmem>>, vector<117x32xf32>
    %57 = arith.truncf %56 : vector<117x32xf32> to vector<117x32xbf16>
    %c192 = arith.constant 192 : index
    %c0_45 = arith.constant 0 : index
    %58 = vector.load %arg4[%c192, %c0_45] : memref<256x48xbf16, #tpu.memory_space<vmem>>, vector<32x48xbf16>
    %cst_46 = arith.constant dense<0.000000e+00> : vector<117x48xf32>
    %59 = tpu.matmul %57, %58, %cst_46 {dimension_numbers = #tpu.dot_dimension_numbers<[1], [0], [0], [1], [0, 0, 1, 1], [], []>} : vector<117x32xbf16>, vector<32x48xbf16>, vector<117x48xf32> -> vector<117x48xf32>
    %60 = arith.addf %55, %59 : vector<117x48xf32>
    %c7 = arith.constant 7 : index
    %c0_47 = arith.constant 0 : index
    %61 = vector.load %arg14[%c7, %c0_47] : memref<124x32xf32, #tpu.memory_space<vmem>>, vector<117x32xf32>
    %62 = arith.truncf %61 : vector<117x32xf32> to vector<117x32xbf16>
    %c224 = arith.constant 224 : index
    %c0_48 = arith.constant 0 : index
    %63 = vector.load %arg4[%c224, %c0_48] : memref<256x48xbf16, #tpu.memory_space<vmem>>, vector<32x48xbf16>
    %cst_49 = arith.constant dense<0.000000e+00> : vector<117x48xf32>
    %64 = tpu.matmul %62, %63, %cst_49 {dimension_numbers = #tpu.dot_dimension_numbers<[1], [0], [0], [1], [0, 0, 1, 1], [], []>} : vector<117x32xbf16>, vector<32x48xbf16>, vector<117x48xf32> -> vector<117x48xf32>
    %65 = arith.addf %60, %64 : vector<117x48xf32>
    %c0_50 = arith.constant 0 : index
    %c0_51 = arith.constant 0 : index
    %66 = vector.load %arg5[%c0_50, %c0_51] : memref<1x48xf32, #tpu.memory_space<vmem>>, vector<1x48xf32>
    %67 = vector.broadcast %66 : vector<1x48xf32> to vector<117x48xf32>
    %68 = arith.addf %65, %67 : vector<117x48xf32>
    %cst_52 = arith.constant 0.000000e+00 : f32
    %69 = vector.broadcast %cst_52 : f32 to vector<117x48xf32>
    %70 = arith.maximumf %68, %69 : vector<117x48xf32>
    %c0_53 = arith.constant 0 : index
    %c0_54 = arith.constant 0 : index
    %71 = vector.load %arg15[%c0_53, %c0_54] : memref<117x48xf32, #tpu.memory_space<vmem>>, vector<117x48xf32>
    tpu.vector_store %arg15[%c0_53, %c0_54], %70 {strides = array<i32>} : memref<117x48xf32, #tpu.memory_space<vmem>>, vector<117x48xf32>,
    %c0_55 = arith.constant 0 : index
    %c0_56 = arith.constant 0 : index
    %72 = tpu.strided_load %arg15[%c0_55, %c0_56] {strides = array<i32: 4, 1>} : memref<117x48xf32, #tpu.memory_space<vmem>>, vector<13x48xf32>
    %c1_57 = arith.constant 1 : index
    %c0_58 = arith.constant 0 : index
    %73 = tpu.strided_load %arg15[%c1_57, %c0_58] {strides = array<i32: 4, 1>} : memref<117x48xf32, #tpu.memory_space<vmem>>, vector<13x48xf32>
    %74 = arith.maximumf %72, %73 : vector<13x48xf32>
    %c2_59 = arith.constant 2 : index
    %c0_60 = arith.constant 0 : index
    %75 = tpu.strided_load %arg15[%c2_59, %c0_60] {strides = array<i32: 4, 1>} : memref<117x48xf32, #tpu.memory_space<vmem>>, vector<13x48xf32>
    %76 = arith.maximumf %74, %75 : vector<13x48xf32>
    %c3_61 = arith.constant 3 : index
    %c0_62 = arith.constant 0 : index
    %77 = tpu.strided_load %arg15[%c3_61, %c0_62] {strides = array<i32: 4, 1>} : memref<117x48xf32, #tpu.memory_space<vmem>>, vector<13x48xf32>
    %78 = arith.maximumf %76, %77 : vector<13x48xf32>
    %c0_63 = arith.constant 0 : index
    %c0_64 = arith.constant 0 : index
    %79 = vector.load %arg16[%c0_63, %c0_64] : memref<26x48xf32, #tpu.memory_space<vmem>>, vector<13x48xf32>
    tpu.vector_store %arg16[%c0_63, %c0_64], %78 {strides = array<i32>} : memref<26x48xf32, #tpu.memory_space<vmem>>, vector<13x48xf32>,
    %c62_65 = arith.constant 62 : index
    %c0_66 = arith.constant 0 : index
    %80 = tpu.strided_load %arg15[%c62_65, %c0_66] {strides = array<i32: 4, 1>} : memref<117x48xf32, #tpu.memory_space<vmem>>, vector<13x48xf32>
    %c63 = arith.constant 63 : index
    %c0_67 = arith.constant 0 : index
    %81 = tpu.strided_load %arg15[%c63, %c0_67] {strides = array<i32: 4, 1>} : memref<117x48xf32, #tpu.memory_space<vmem>>, vector<13x48xf32>
    %82 = arith.maximumf %80, %81 : vector<13x48xf32>
    %c64_68 = arith.constant 64 : index
    %c0_69 = arith.constant 0 : index
    %83 = tpu.strided_load %arg15[%c64_68, %c0_69] {strides = array<i32: 4, 1>} : memref<117x48xf32, #tpu.memory_space<vmem>>, vector<13x48xf32>
    %84 = arith.maximumf %82, %83 : vector<13x48xf32>
    %c65 = arith.constant 65 : index
    %c0_70 = arith.constant 0 : index
    %85 = tpu.strided_load %arg15[%c65, %c0_70] {strides = array<i32: 4, 1>} : memref<117x48xf32, #tpu.memory_space<vmem>>, vector<13x48xf32>
    %86 = arith.maximumf %84, %85 : vector<13x48xf32>
    %c13 = arith.constant 13 : index
    %c0_71 = arith.constant 0 : index
    %87 = vector.load %arg16[%c13, %c0_71] : memref<26x48xf32, #tpu.memory_space<vmem>>, vector<13x48xf32>
    tpu.vector_store %arg16[%c13, %c0_71], %86 {strides = array<i32>} : memref<26x48xf32, #tpu.memory_space<vmem>>, vector<13x48xf32>,
    %cst_72 = arith.constant 0.000000e+00 : f32
    %88 = vector.broadcast %cst_72 : f32 to vector<19x96xf32>
    %c0_73 = arith.constant 0 : index
    %c0_74 = arith.constant 0 : index
    %89 = vector.load %arg16[%c0_73, %c0_74] : memref<26x48xf32, #tpu.memory_space<vmem>>, vector<19x48xf32>
    %90 = arith.truncf %89 : vector<19x48xf32> to vector<19x48xbf16>
    %c0_75 = arith.constant 0 : index
    %c0_76 = arith.constant 0 : index
    %91 = vector.load %arg6[%c0_75, %c0_76] : memref<384x96xbf16, #tpu.memory_space<vmem>>, vector<48x96xbf16>
    %cst_77 = arith.constant dense<0.000000e+00> : vector<19x96xf32>
    %92 = tpu.matmul %90, %91, %cst_77 {dimension_numbers = #tpu.dot_dimension_numbers<[1], [0], [0], [1], [0, 0, 1, 1], [], []>} : vector<19x48xbf16>, vector<48x96xbf16>, vector<19x96xf32> -> vector<19x96xf32>
    %93 = arith.addf %88, %92 : vector<19x96xf32>
    %c1_78 = arith.constant 1 : index
    %c0_79 = arith.constant 0 : index
    %94 = vector.load %arg16[%c1_78, %c0_79] : memref<26x48xf32, #tpu.memory_space<vmem>>, vector<19x48xf32>
    %95 = arith.truncf %94 : vector<19x48xf32> to vector<19x48xbf16>
    %c48 = arith.constant 48 : index
    %c0_80 = arith.constant 0 : index
    %96 = vector.load %arg6[%c48, %c0_80] : memref<384x96xbf16, #tpu.memory_space<vmem>>, vector<48x96xbf16>
    %cst_81 = arith.constant dense<0.000000e+00> : vector<19x96xf32>
    %97 = tpu.matmul %95, %96, %cst_81 {dimension_numbers = #tpu.dot_dimension_numbers<[1], [0], [0], [1], [0, 0, 1, 1], [], []>} : vector<19x48xbf16>, vector<48x96xbf16>, vector<19x96xf32> -> vector<19x96xf32>
    %98 = arith.addf %93, %97 : vector<19x96xf32>
    %c2_82 = arith.constant 2 : index
    %c0_83 = arith.constant 0 : index
    %99 = vector.load %arg16[%c2_82, %c0_83] : memref<26x48xf32, #tpu.memory_space<vmem>>, vector<19x48xf32>
    %100 = arith.truncf %99 : vector<19x48xf32> to vector<19x48xbf16>
    %c96_84 = arith.constant 96 : index
    %c0_85 = arith.constant 0 : index
    %101 = vector.load %arg6[%c96_84, %c0_85] : memref<384x96xbf16, #tpu.memory_space<vmem>>, vector<48x96xbf16>
    %cst_86 = arith.constant dense<0.000000e+00> : vector<19x96xf32>
    %102 = tpu.matmul %100, %101, %cst_86 {dimension_numbers = #tpu.dot_dimension_numbers<[1], [0], [0], [1], [0, 0, 1, 1], [], []>} : vector<19x48xbf16>, vector<48x96xbf16>, vector<19x96xf32> -> vector<19x96xf32>
    %103 = arith.addf %98, %102 : vector<19x96xf32>
    %c3_87 = arith.constant 3 : index
    %c0_88 = arith.constant 0 : index
    %104 = vector.load %arg16[%c3_87, %c0_88] : memref<26x48xf32, #tpu.memory_space<vmem>>, vector<19x48xf32>
    %105 = arith.truncf %104 : vector<19x48xf32> to vector<19x48xbf16>
    %c144 = arith.constant 144 : index
    %c0_89 = arith.constant 0 : index
    %106 = vector.load %arg6[%c144, %c0_89] : memref<384x96xbf16, #tpu.memory_space<vmem>>, vector<48x96xbf16>
    %cst_90 = arith.constant dense<0.000000e+00> : vector<19x96xf32>
    %107 = tpu.matmul %105, %106, %cst_90 {dimension_numbers = #tpu.dot_dimension_numbers<[1], [0], [0], [1], [0, 0, 1, 1], [], []>} : vector<19x48xbf16>, vector<48x96xbf16>, vector<19x96xf32> -> vector<19x96xf32>
    %108 = arith.addf %103, %107 : vector<19x96xf32>
    %c4_91 = arith.constant 4 : index
    %c0_92 = arith.constant 0 : index
    %109 = vector.load %arg16[%c4_91, %c0_92] : memref<26x48xf32, #tpu.memory_space<vmem>>, vector<19x48xf32>
    %110 = arith.truncf %109 : vector<19x48xf32> to vector<19x48xbf16>
    %c192_93 = arith.constant 192 : index
    %c0_94 = arith.constant 0 : index
    %111 = vector.load %arg6[%c192_93, %c0_94] : memref<384x96xbf16, #tpu.memory_space<vmem>>, vector<48x96xbf16>
    %cst_95 = arith.constant dense<0.000000e+00> : vector<19x96xf32>
    %112 = tpu.matmul %110, %111, %cst_95 {dimension_numbers = #tpu.dot_dimension_numbers<[1], [0], [0], [1], [0, 0, 1, 1], [], []>} : vector<19x48xbf16>, vector<48x96xbf16>, vector<19x96xf32> -> vector<19x96xf32>
    %113 = arith.addf %108, %112 : vector<19x96xf32>
    %c5_96 = arith.constant 5 : index
    %c0_97 = arith.constant 0 : index
    %114 = vector.load %arg16[%c5_96, %c0_97] : memref<26x48xf32, #tpu.memory_space<vmem>>, vector<19x48xf32>
    %115 = arith.truncf %114 : vector<19x48xf32> to vector<19x48xbf16>
    %c240 = arith.constant 240 : index
    %c0_98 = arith.constant 0 : index
    %116 = vector.load %arg6[%c240, %c0_98] : memref<384x96xbf16, #tpu.memory_space<vmem>>, vector<48x96xbf16>
    %cst_99 = arith.constant dense<0.000000e+00> : vector<19x96xf32>
    %117 = tpu.matmul %115, %116, %cst_99 {dimension_numbers = #tpu.dot_dimension_numbers<[1], [0], [0], [1], [0, 0, 1, 1], [], []>} : vector<19x48xbf16>, vector<48x96xbf16>, vector<19x96xf32> -> vector<19x96xf32>
    %118 = arith.addf %113, %117 : vector<19x96xf32>
    %c6_100 = arith.constant 6 : index
    %c0_101 = arith.constant 0 : index
    %119 = vector.load %arg16[%c6_100, %c0_101] : memref<26x48xf32, #tpu.memory_space<vmem>>, vector<19x48xf32>
    %120 = arith.truncf %119 : vector<19x48xf32> to vector<19x48xbf16>
    %c288 = arith.constant 288 : index
    %c0_102 = arith.constant 0 : index
    %121 = vector.load %arg6[%c288, %c0_102] : memref<384x96xbf16, #tpu.memory_space<vmem>>, vector<48x96xbf16>
    %cst_103 = arith.constant dense<0.000000e+00> : vector<19x96xf32>
    %122 = tpu.matmul %120, %121, %cst_103 {dimension_numbers = #tpu.dot_dimension_numbers<[1], [0], [0], [1], [0, 0, 1, 1], [], []>} : vector<19x48xbf16>, vector<48x96xbf16>, vector<19x96xf32> -> vector<19x96xf32>
    %123 = arith.addf %118, %122 : vector<19x96xf32>
    %c7_104 = arith.constant 7 : index
    %c0_105 = arith.constant 0 : index
    %124 = vector.load %arg16[%c7_104, %c0_105] : memref<26x48xf32, #tpu.memory_space<vmem>>, vector<19x48xf32>
    %125 = arith.truncf %124 : vector<19x48xf32> to vector<19x48xbf16>
    %c336 = arith.constant 336 : index
    %c0_106 = arith.constant 0 : index
    %126 = vector.load %arg6[%c336, %c0_106] : memref<384x96xbf16, #tpu.memory_space<vmem>>, vector<48x96xbf16>
    %cst_107 = arith.constant dense<0.000000e+00> : vector<19x96xf32>
    %127 = tpu.matmul %125, %126, %cst_107 {dimension_numbers = #tpu.dot_dimension_numbers<[1], [0], [0], [1], [0, 0, 1, 1], [], []>} : vector<19x48xbf16>, vector<48x96xbf16>, vector<19x96xf32> -> vector<19x96xf32>
    %128 = arith.addf %123, %127 : vector<19x96xf32>
    %c0_108 = arith.constant 0 : index
    %c0_109 = arith.constant 0 : index
    %129 = vector.load %arg7[%c0_108, %c0_109] : memref<1x96xf32, #tpu.memory_space<vmem>>, vector<1x96xf32>
    %130 = vector.broadcast %129 : vector<1x96xf32> to vector<19x96xf32>
    %131 = arith.addf %128, %130 : vector<19x96xf32>
    %cst_110 = arith.constant 0.000000e+00 : f32
    %132 = vector.broadcast %cst_110 : f32 to vector<19x96xf32>
    %133 = arith.maximumf %131, %132 : vector<19x96xf32>
    %c0_111 = arith.constant 0 : index
    %c0_112 = arith.constant 0 : index
    %134 = vector.load %arg17[%c0_111, %c0_112] : memref<32x96xf32, #tpu.memory_space<vmem>>, vector<19x96xf32>
    tpu.vector_store %arg17[%c0_111, %c0_112], %133 {strides = array<i32>} : memref<32x96xf32, #tpu.memory_space<vmem>>, vector<19x96xf32>,
    %cst_113 = arith.constant 0.000000e+00 : f32
    %135 = vector.broadcast %cst_113 : f32 to vector<2x1024xf32>
    %c0_114 = arith.constant 0 : index
    %c0_115 = arith.constant 0 : index
    %136 = tpu.strided_load %arg17[%c0_114, %c0_115] {strides = array<i32: 13, 1>} : memref<32x96xf32, #tpu.memory_space<vmem>>, vector<2x96xf32>
    %137 = arith.truncf %136 : vector<2x96xf32> to vector<2x96xbf16>
    %c0_116 = arith.constant 0 : index
    %c0_117 = arith.constant 0 : index
    %c0_118 = arith.constant 0 : index
    %138 = vector.load %arg8[%c0_116, %c0_117, %c0_118] : memref<6x96x1024xbf16, #tpu.memory_space<vmem>>, vector<1x96x1024xbf16>
    %139 = vector.shape_cast %138 : vector<1x96x1024xbf16> to vector<96x1024xbf16>
    %cst_119 = arith.constant dense<0.000000e+00> : vector<2x1024xf32>
    %140 = tpu.matmul %137, %139, %cst_119 {dimension_numbers = #tpu.dot_dimension_numbers<[1], [0], [0], [1], [0, 0, 1, 1], [], []>} : vector<2x96xbf16>, vector<96x1024xbf16>, vector<2x1024xf32> -> vector<2x1024xf32>
    %141 = arith.addf %135, %140 : vector<2x1024xf32>
    %c1_120 = arith.constant 1 : index
    %c0_121 = arith.constant 0 : index
    %142 = tpu.strided_load %arg17[%c1_120, %c0_121] {strides = array<i32: 13, 1>} : memref<32x96xf32, #tpu.memory_space<vmem>>, vector<2x96xf32>
    %143 = arith.truncf %142 : vector<2x96xf32> to vector<2x96xbf16>
    %c1_122 = arith.constant 1 : index
    %c0_123 = arith.constant 0 : index
    %c0_124 = arith.constant 0 : index
    %144 = vector.load %arg8[%c1_122, %c0_123, %c0_124] : memref<6x96x1024xbf16, #tpu.memory_space<vmem>>, vector<1x96x1024xbf16>
    %145 = vector.shape_cast %144 : vector<1x96x1024xbf16> to vector<96x1024xbf16>
    %cst_125 = arith.constant dense<0.000000e+00> : vector<2x1024xf32>
    %146 = tpu.matmul %143, %145, %cst_125 {dimension_numbers = #tpu.dot_dimension_numbers<[1], [0], [0], [1], [0, 0, 1, 1], [], []>} : vector<2x96xbf16>, vector<96x1024xbf16>, vector<2x1024xf32> -> vector<2x1024xf32>
    %147 = arith.addf %141, %146 : vector<2x1024xf32>
    %c2_126 = arith.constant 2 : index
    %c0_127 = arith.constant 0 : index
    %148 = tpu.strided_load %arg17[%c2_126, %c0_127] {strides = array<i32: 13, 1>} : memref<32x96xf32, #tpu.memory_space<vmem>>, vector<2x96xf32>
    %149 = arith.truncf %148 : vector<2x96xf32> to vector<2x96xbf16>
    %c2_128 = arith.constant 2 : index
    %c0_129 = arith.constant 0 : index
    %c0_130 = arith.constant 0 : index
    %150 = vector.load %arg8[%c2_128, %c0_129, %c0_130] : memref<6x96x1024xbf16, #tpu.memory_space<vmem>>, vector<1x96x1024xbf16>
    %151 = vector.shape_cast %150 : vector<1x96x1024xbf16> to vector<96x1024xbf16>
    %cst_131 = arith.constant dense<0.000000e+00> : vector<2x1024xf32>
    %152 = tpu.matmul %149, %151, %cst_131 {dimension_numbers = #tpu.dot_dimension_numbers<[1], [0], [0], [1], [0, 0, 1, 1], [], []>} : vector<2x96xbf16>, vector<96x1024xbf16>, vector<2x1024xf32> -> vector<2x1024xf32>
    %153 = arith.addf %147, %152 : vector<2x1024xf32>
    %c3_132 = arith.constant 3 : index
    %c0_133 = arith.constant 0 : index
    %154 = tpu.strided_load %arg17[%c3_132, %c0_133] {strides = array<i32: 13, 1>} : memref<32x96xf32, #tpu.memory_space<vmem>>, vector<2x96xf32>
    %155 = arith.truncf %154 : vector<2x96xf32> to vector<2x96xbf16>
    %c3_134 = arith.constant 3 : index
    %c0_135 = arith.constant 0 : index
    %c0_136 = arith.constant 0 : index
    %156 = vector.load %arg8[%c3_134, %c0_135, %c0_136] : memref<6x96x1024xbf16, #tpu.memory_space<vmem>>, vector<1x96x1024xbf16>
    %157 = vector.shape_cast %156 : vector<1x96x1024xbf16> to vector<96x1024xbf16>
    %cst_137 = arith.constant dense<0.000000e+00> : vector<2x1024xf32>
    %158 = tpu.matmul %155, %157, %cst_137 {dimension_numbers = #tpu.dot_dimension_numbers<[1], [0], [0], [1], [0, 0, 1, 1], [], []>} : vector<2x96xbf16>, vector<96x1024xbf16>, vector<2x1024xf32> -> vector<2x1024xf32>
    %159 = arith.addf %153, %158 : vector<2x1024xf32>
    %c4_138 = arith.constant 4 : index
    %c0_139 = arith.constant 0 : index
    %160 = tpu.strided_load %arg17[%c4_138, %c0_139] {strides = array<i32: 13, 1>} : memref<32x96xf32, #tpu.memory_space<vmem>>, vector<2x96xf32>
    %161 = arith.truncf %160 : vector<2x96xf32> to vector<2x96xbf16>
    %c4_140 = arith.constant 4 : index
    %c0_141 = arith.constant 0 : index
    %c0_142 = arith.constant 0 : index
    %162 = vector.load %arg8[%c4_140, %c0_141, %c0_142] : memref<6x96x1024xbf16, #tpu.memory_space<vmem>>, vector<1x96x1024xbf16>
    %163 = vector.shape_cast %162 : vector<1x96x1024xbf16> to vector<96x1024xbf16>
    %cst_143 = arith.constant dense<0.000000e+00> : vector<2x1024xf32>
    %164 = tpu.matmul %161, %163, %cst_143 {dimension_numbers = #tpu.dot_dimension_numbers<[1], [0], [0], [1], [0, 0, 1, 1], [], []>} : vector<2x96xbf16>, vector<96x1024xbf16>, vector<2x1024xf32> -> vector<2x1024xf32>
    %165 = arith.addf %159, %164 : vector<2x1024xf32>
    %c5_144 = arith.constant 5 : index
    %c0_145 = arith.constant 0 : index
    %166 = tpu.strided_load %arg17[%c5_144, %c0_145] {strides = array<i32: 13, 1>} : memref<32x96xf32, #tpu.memory_space<vmem>>, vector<2x96xf32>
    %167 = arith.truncf %166 : vector<2x96xf32> to vector<2x96xbf16>
    %c5_146 = arith.constant 5 : index
    %c0_147 = arith.constant 0 : index
    %c0_148 = arith.constant 0 : index
    %168 = vector.load %arg8[%c5_146, %c0_147, %c0_148] : memref<6x96x1024xbf16, #tpu.memory_space<vmem>>, vector<1x96x1024xbf16>
    %169 = vector.shape_cast %168 : vector<1x96x1024xbf16> to vector<96x1024xbf16>
    %cst_149 = arith.constant dense<0.000000e+00> : vector<2x1024xf32>
    %170 = tpu.matmul %167, %169, %cst_149 {dimension_numbers = #tpu.dot_dimension_numbers<[1], [0], [0], [1], [0, 0, 1, 1], [], []>} : vector<2x96xbf16>, vector<96x1024xbf16>, vector<2x1024xf32> -> vector<2x1024xf32>
    %171 = arith.addf %165, %170 : vector<2x1024xf32>
    %c0_150 = arith.constant 0 : index
    %c0_151 = arith.constant 0 : index
    %172 = vector.load %arg9[%c0_150, %c0_151] : memref<1x1024xf32, #tpu.memory_space<vmem>>, vector<1x1024xf32>
    %173 = vector.broadcast %172 : vector<1x1024xf32> to vector<2x1024xf32>
    %174 = arith.addf %171, %173 : vector<2x1024xf32>
    %cst_152 = arith.constant 0.000000e+00 : f32
    %175 = vector.broadcast %cst_152 : f32 to vector<2x1024xf32>
    %176 = arith.maximumf %174, %175 : vector<2x1024xf32>
    %177 = arith.truncf %176 : vector<2x1024xf32> to vector<2x1024xbf16>
    %c0_153 = arith.constant 0 : index
    %c0_154 = arith.constant 0 : index
    %178 = vector.load %arg10[%c0_153, %c0_154] : memref<2x1024xbf16, #tpu.memory_space<vmem>>, vector<2x1024xbf16>
    %cst_155 = arith.constant dense<0.000000e+00> : vector<2x2xf32>
    %179 = tpu.matmul %177, %178, %cst_155 {dimension_numbers = #tpu.dot_dimension_numbers<[1], [1], [0], [0], [0, 0, 1, 0], [], []>} : vector<2x1024xbf16>, vector<2x1024xbf16>, vector<2x2xf32> -> vector<2x2xf32>
    %c0_156 = arith.constant 0 : index
    %c0_157 = arith.constant 0 : index
    %180 = vector.load %arg11[%c0_156, %c0_157] : memref<1x2xf32, #tpu.memory_space<vmem>>, vector<1x2xf32>
    %181 = vector.broadcast %180 : vector<1x2xf32> to vector<2x2xf32>
    %182 = arith.addf %179, %181 : vector<2x2xf32>
    %c0_158 = arith.constant 0 : index
    %c0_159 = arith.constant 0 : index
    %183 = vector.load %arg12[%c0_158, %c0_159] : memref<2x2xf32, #tpu.memory_space<vmem>>, vector<2x2xf32>
    tpu.vector_store %arg12[%c0_158, %c0_159], %182 {strides = array<i32>} : memref<2x2xf32, #tpu.memory_space<vmem>>, vector<2x2xf32>,
    return
  }
  func.func @transform_0(%arg0: i32) -> (i32, i32) {
    %c0_i32 = arith.constant 0 : i32
    %c0_i32_0 = arith.constant 0 : i32
    %c0_i32_1 = arith.constant 0 : i32
    return %c0_i32, %c0_i32_0 : i32, i32
  }
  func.func @transform_1(%arg0: i32) -> (i32, i32) {
    %c0_i32 = arith.constant 0 : i32
    %c0_i32_0 = arith.constant 0 : i32
    %c0_i32_1 = arith.constant 0 : i32
    return %c0_i32, %c0_i32_0 : i32, i32
  }
  func.func @transform_2(%arg0: i32) -> (i32, i32) {
    %c0_i32 = arith.constant 0 : i32
    %c0_i32_0 = arith.constant 0 : i32
    %c0_i32_1 = arith.constant 0 : i32
    return %c0_i32, %c0_i32_0 : i32, i32
  }
  func.func @transform_3(%arg0: i32) -> (i32, i32) {
    %c0_i32 = arith.constant 0 : i32
    %c0_i32_0 = arith.constant 0 : i32
    %c0_i32_1 = arith.constant 0 : i32
    return %c0_i32, %c0_i32_0 : i32, i32
  }
  func.func @transform_4(%arg0: i32) -> (i32, i32) {
    %c0_i32 = arith.constant 0 : i32
    %c0_i32_0 = arith.constant 0 : i32
    %c0_i32_1 = arith.constant 0 : i32
    return %c0_i32, %c0_i32_0 : i32, i32
  }
  func.func @transform_5(%arg0: i32) -> (i32, i32) {
    %c0_i32 = arith.constant 0 : i32
    %c0_i32_0 = arith.constant 0 : i32
    %c0_i32_1 = arith.constant 0 : i32
    return %c0_i32, %c0_i32_0 : i32, i32
  }
  func.func @transform_6(%arg0: i32) -> (i32, i32) {
    %c0_i32 = arith.constant 0 : i32
    %c0_i32_0 = arith.constant 0 : i32
    %c0_i32_1 = arith.constant 0 : i32
    return %c0_i32, %c0_i32_0 : i32, i32
  }
  func.func @transform_7(%arg0: i32) -> (i32, i32, i32) {
    %c0_i32 = arith.constant 0 : i32
    %c0_i32_0 = arith.constant 0 : i32
    %c0_i32_1 = arith.constant 0 : i32
    %c0_i32_2 = arith.constant 0 : i32
    return %c0_i32, %c0_i32_0, %c0_i32_1 : i32, i32, i32
  }
  func.func @transform_8(%arg0: i32) -> (i32, i32) {
    %c0_i32 = arith.constant 0 : i32
    %c0_i32_0 = arith.constant 0 : i32
    %c0_i32_1 = arith.constant 0 : i32
    return %c0_i32, %c0_i32_0 : i32, i32
  }
  func.func @transform_9(%arg0: i32) -> (i32, i32) {
    %c0_i32 = arith.constant 0 : i32
    %c0_i32_0 = arith.constant 0 : i32
    %c0_i32_1 = arith.constant 0 : i32
    return %c0_i32, %c0_i32_0 : i32, i32
  }
  func.func @transform_10(%arg0: i32) -> (i32, i32) {
    %c0_i32 = arith.constant 0 : i32
    %c0_i32_0 = arith.constant 0 : i32
    %c0_i32_1 = arith.constant 0 : i32
    return %c0_i32, %c0_i32_0 : i32, i32
  }
  func.func @transform_11(%arg0: i32) -> (i32, i32) {
    %c0_i32 = arith.constant 0 : i32
    %c0_i32_0 = arith.constant 0 : i32
    %c0_i32_1 = arith.constant 0 : i32
    return %c0_i32, %c0_i32_0 : i32, i32
  }
}

</mosaic_0001>

<llo_original>
// kernel: deepsea_forward.1
$region0: #{deepsea_forward.1}
  #allocation0 [shape = 'u32[]', space=smem, size = 0x4, offset = 0x4, fixed_abs, tag = 'smem constant byte address 0x4 - core index']
  #allocation1 [shape = 'u32[144,128]{1,0:T(1,128)}', space=vmem, size = 0x12000, scoped, tag = 'internal scratch']
  #allocation2 [shape = 'f32[504,32]{1,0:T(8,128)}', space=vmem, size = 0x3f000, scoped, tag = 'scratch operand']
  #allocation3 [shape = 'f32[124,32]{1,0:T(8,128)}', space=vmem, size = 0x10000, scoped, tag = 'scratch operand']
  #allocation4 [shape = 'f32[117,48]{1,0:T(8,128)}', space=vmem, size = 0xf000, scoped, tag = 'scratch operand']
  #allocation5 [shape = 'f32[26,48]{1,0:T(8,128)}', space=vmem, size = 0x4000, scoped, tag = 'scratch operand']
  #allocation6 [shape = 'f32[32,96]{1,0:T(8,128)}', space=vmem, size = 0x4000, scoped, tag = 'scratch operand']
  %s0 = inlined_call_operand.vmem [shape: bf16[504,32], index: 0, kind: input, shape index: {}]
  %s1 = inlined_call_operand.vmem [shape: bf16[32,32], index: 1, kind: input, shape index: {}]
  %s2 = inlined_call_operand.vmem [shape: f32[1,32], index: 2, kind: input, shape index: {}]
  %s3 = inlined_call_operand.vmem [shape: bf16[256,48], index: 3, kind: input, shape index: {}]
  %s4 = inlined_call_operand.vmem [shape: f32[1,48], index: 4, kind: input, shape index: {}]
  %s5 = inlined_call_operand.vmem [shape: bf16[384,96], index: 5, kind: input, shape index: {}]
  %s6 = inlined_call_operand.vmem [shape: f32[1,96], index: 6, kind: input, shape index: {}]
  %s7 = inlined_call_operand.vmem [shape: bf16[6,96,1024], index: 7, kind: input, shape index: {}]
  %s8 = inlined_call_operand.vmem [shape: f32[1,1024], index: 8, kind: input, shape index: {}]
  %s9 = inlined_call_operand.vmem [shape: bf16[2,1024], index: 9, kind: input, shape index: {}]
  %s10 = inlined_call_operand.vmem [shape: f32[1,2], index: 10, kind: input, shape index: {}]
  %s11 = inlined_call_operand.hbm [shape: f32[2,2], index: 11, kind: output, shape index: {}]
  %s12 = sld [smem:[#allocation0]]
  $region54: #{deepsea_forward.1} parent=0
    _
  %s14 = ssub.s32 1, %s12
  %s15 = scalar_select 0, %s14, %s12
  $region1: #{deepsea_forward.1} parent=0
    #allocation7 [shape = 'u8[1024]{0}', space=vmem, size = 0x400, scoped, tag = 'output window, operand 0, single buffered']
    #allocation8 [shape = 's32[1]{0}', space=sflag, size = 0x4, scoped, tag = 'scoped memory for deepsea_forward.1']
    %16 = vsyncpa [#allocation8], 0
    // Predicated region
    $region2: #{deepsea_forward.1} parent=1 // pred_check
      _
    $region3: #{deepsea_forward.1} parent=1 // pred_check_branch
      %18 = sbr.rel (0) target = $region5
    $region4: #{deepsea_forward.1} parent=1 // pred_region
      _
    $region5: #{deepsea_forward.1} parent=1 // pred_fallthru
      _
    // Predicated region
    $region6: #{deepsea_forward.1} parent=1 // pred_check
      _
    $region7: #{deepsea_forward.1} parent=1 // pred_check_branch
      %20 = sbr.rel (0) target = $region9
    $region8: #{deepsea_forward.1} parent=1 // pred_region
      _
    $region9: #{deepsea_forward.1} parent=1 // pred_fallthru
      _
    // Predicated region
    $region10: #{deepsea_forward.1} parent=1 // pred_check
      _
    $region11: #{deepsea_forward.1} parent=1 // pred_check_branch
      %22 = sbr.rel (0) target = $region13
    $region12: #{deepsea_forward.1} parent=1 // pred_region
      _
    $region13: #{deepsea_forward.1} parent=1 // pred_fallthru
      _
    // Predicated region
    $region14: #{deepsea_forward.1} parent=1 // pred_check
      _
    $region15: #{deepsea_forward.1} parent=1 // pred_check_branch
      %24 = sbr.rel (0) target = $region17
    $region16: #{deepsea_forward.1} parent=1 // pred_region
      _
    $region17: #{deepsea_forward.1} parent=1 // pred_fallthru
      _
    // Predicated region
    $region18: #{deepsea_forward.1} parent=1 // pred_check
      _
    $region19: #{deepsea_forward.1} parent=1 // pred_check_branch
      %26 = sbr.rel (0) target = $region21
    $region20: #{deepsea_forward.1} parent=1 // pred_region
      _
    $region21: #{deepsea_forward.1} parent=1 // pred_fallthru
      _
    // Predicated region
    $region22: #{deepsea_forward.1} parent=1 // pred_check
      _
    $region23: #{deepsea_forward.1} parent=1 // pred_check_branch
      %28 = sbr.rel (0) target = $region25
    $region24: #{deepsea_forward.1} parent=1 // pred_region
      _
    $region25: #{deepsea_forward.1} parent=1 // pred_fallthru
      _
    // Predicated region
    $region26: #{deepsea_forward.1} parent=1 // pred_check
      _
    $region27: #{deepsea_forward.1} parent=1 // pred_check_branch
      %30 = sbr.rel (0) target = $region29
    $region28: #{deepsea_forward.1} parent=1 // pred_region
      _
    $region29: #{deepsea_forward.1} parent=1 // pred_fallthru
      _
    // Predicated region
    $region30: #{deepsea_forward.1} parent=1 // pred_check
      _
    $region31: #{deepsea_forward.1} parent=1 // pred_check_branch
      %32 = sbr.rel (0) target = $region33
    $region32: #{deepsea_forward.1} parent=1 // pred_region
      _
    $region33: #{deepsea_forward.1} parent=1 // pred_fallthru
      _
    // Predicated region
    $region34: #{deepsea_forward.1} parent=1 // pred_check
      _
    $region35: #{deepsea_forward.1} parent=1 // pred_check_branch
      %34 = sbr.rel (0) target = $region37
    $region36: #{deepsea_forward.1} parent=1 // pred_region
      _
    $region37: #{deepsea_forward.1} parent=1 // pred_fallthru
      _
    // Predicated region
    $region38: #{deepsea_forward.1} parent=1 // pred_check
      _
    $region39: #{deepsea_forward.1} parent=1 // pred_check_branch
      %36 = sbr.rel (0) target = $region41
    $region40: #{deepsea_forward.1} parent=1 // pred_region
      _
    $region41: #{deepsea_forward.1} parent=1 // pred_fallthru
      _
    // Predicated region
    $region42: #{deepsea_forward.1} parent=1 // pred_check
      _
    $region43: #{deepsea_forward.1} parent=1 // pred_check_branch
      %38 = sbr.rel (0) target = $region45
    $region44: #{deepsea_forward.1} parent=1 // pred_region
      _
    $region45: #{deepsea_forward.1} parent=1 // pred_fallthru
      _
    %v40 = vld [vmem:[%s0] sm:$0xf]
    %v41 = vld [vmem:[%s0 + $0x4] sm:$0xf]
    %v42 = vld [vmem:[%s0 + $0x8] sm:$0xf]
    %v43 = vld [vmem:[%s0 + $0xc] sm:$0xf]
    %v44 = vld [vmem:[%s0 + $0x10] sm:$0xf]
    %v45 = vld [vmem:[%s0 + $0x14] sm:$0xf]
    %v46 = vld [vmem:[%s0 + $0x18] sm:$0xf]
    %v47 = vld [vmem:[%s0 + $0x1c] sm:$0xf]
    %v48 = vld [vmem:[%s0 + $0x20] sm:$0xf]
    %v49 = vld [vmem:[%s0 + $0x24] sm:$0xf]
    %v50 = vld [vmem:[%s0 + $0x28] sm:$0xf]
    %v51 = vld [vmem:[%s0 + $0x2c] sm:$0xf]
    %v52 = vld [vmem:[%s0 + $0x30] sm:$0xf]
    %v53 = vld [vmem:[%s0 + $0x34] sm:$0xf]
    %v54 = vld [vmem:[%s0 + $0x38] sm:$0xf]
    %v55 = vld [vmem:[%s0 + $0x3c] sm:$0xf]
    %v56 = vld [vmem:[%s0 + $0x40] sm:$0xf]
    %v57 = vld [vmem:[%s0 + $0x44] sm:$0xf]
    %v58 = vld [vmem:[%s0 + $0x48] sm:$0xf]
    %v59 = vld [vmem:[%s0 + $0x4c] sm:$0xf]
    %v60 = vld [vmem:[%s0 + $0x50] sm:$0xf]
    %v61 = vld [vmem:[%s0 + $0x54] sm:$0xf]
    %v62 = vld [vmem:[%s0 + $0x58] sm:$0xf]
    %v63 = vld [vmem:[%s0 + $0x5c] sm:$0xf]
    %v64 = vld [vmem:[%s0 + $0x60] sm:$0xf]
    %v65 = vld [vmem:[%s0 + $0x64] sm:$0xf]
    %v66 = vld [vmem:[%s0 + $0x68] sm:$0xf]
    %v67 = vld [vmem:[%s0 + $0x6c] sm:$0xf]
    %v68 = vld [vmem:[%s0 + $0x70] sm:$0xf]
    %v69 = vld [vmem:[%s0 + $0x74] sm:$0xf]
    %v70 = vld [vmem:[%s0 + $0x78] sm:$0xf]
    %v71 = vld [vmem:[%s0 + $0x7c] sm:$0xf]
    %v72 = vld [vmem:[%s0 + $0x80] sm:$0xf]
    %v73 = vld [vmem:[%s0 + $0x84] sm:$0xf]
    %v74 = vld [vmem:[%s0 + $0x88] sm:$0xf]
    %v75 = vld [vmem:[%s0 + $0x8c] sm:$0xf]
    %v76 = vld [vmem:[%s0 + $0x90] sm:$0xf]
    %v77 = vld [vmem:[%s0 + $0x94] sm:$0xf]
    %v78 = vld [vmem:[%s0 + $0x98] sm:$0xf]
    %v79 = vld [vmem:[%s0 + $0x9c] sm:$0xf]
    %v80 = vld [vmem:[%s0 + $0xa0] sm:$0xf]
    %v81 = vld [vmem:[%s0 + $0xa4] sm:$0xf]
    %v82 = vld [vmem:[%s0 + $0xa8] sm:$0xf]
    %v83 = vld [vmem:[%s0 + $0xac] sm:$0xf]
    %v84 = vld [vmem:[%s0 + $0xb0] sm:$0xf]
    %v85 = vld [vmem:[%s0 + $0xb4] sm:$0xf]
    %v86 = vld [vmem:[%s0 + $0xb8] sm:$0xf]
    %v87 = vld [vmem:[%s0 + $0xbc] sm:$0xf]
    %v88 = vld [vmem:[%s0 + $0xc0] sm:$0xf]
    %v89 = vld [vmem:[%s0 + $0xc4] sm:$0xf]
    %v90 = vld [vmem:[%s0 + $0xc8] sm:$0xf]
    %v91 = vld [vmem:[%s0 + $0xcc] sm:$0xf]
    %v92 = vld [vmem:[%s0 + $0xd0] sm:$0xf]
    %v93 = vld [vmem:[%s0 + $0xd4] sm:$0xf]
    %v94 = vld [vmem:[%s0 + $0xd8] sm:$0xf]
    %v95 = vld [vmem:[%s0 + $0xdc] sm:$0xf]
    %v96 = vld [vmem:[%s0 + $0xe0] sm:$0xf]
    %v97 = vld [vmem:[%s0 + $0xe4] sm:$0xf]
    %v98 = vld [vmem:[%s0 + $0xe8] sm:$0xf]
    %v99 = vld [vmem:[%s0 + $0xec] sm:$0xf]
    %v100 = vld [vmem:[%s0 + $0xf0] sm:$0xf]
    %v101 = vld [vmem:[%s0 + $0xf4] sm:$0xf]
    %v102 = vld [vmem:[%s0 + $0xf8] sm:$0xf]
    %v103 = vld [vmem:[%s1] sm:$0xf]
    %v104 = vld [vmem:[%s1 + $0x4] sm:$0xf]
    %v105 = vld [vmem:[%s1 + $0x8] sm:$0xf]
    %v106 = vld [vmem:[%s1 + $0xc] sm:$0xf]
    %v107 = vld [vmem:[%s2] sm:$0x1]
    %v109 = vlaneseq
    %v110 = vshrl.u32 %v109, 7
    %v111 = vsub.s32 0, %v110
    %v112 = vrot.slane %v107, %v111
    %v177 = vunpack.c.l.b16 %v40
    %v178 = vunpack.c.l.b16 %v41
    %v179 = vunpack.c.l.b16 %v42
    %v180 = vunpack.c.l.b16 %v43
    %v181 = vunpack.c.l.b16 %v44
    %v182 = vunpack.c.l.b16 %v45
    %v183 = vunpack.c.l.b16 %v46
    %v184 = vunpack.c.l.b16 %v47
    %v185 = vunpack.c.l.b16 %v48
    %v186 = vunpack.c.l.b16 %v49
    %v187 = vunpack.c.l.b16 %v50
    %v188 = vunpack.c.l.b16 %v51
    %v189 = vunpack.c.l.b16 %v52
    %v190 = vunpack.c.l.b16 %v53
    %v191 = vunpack.c.l.b16 %v54
    %v192 = vunpack.c.l.b16 %v55
    %v193 = vunpack.c.l.b16 %v56
    %v194 = vunpack.c.l.b16 %v57
    %v195 = vunpack.c.l.b16 %v58
    %v196 = vunpack.c.l.b16 %v59
    %v197 = vunpack.c.l.b16 %v60
    %v198 = vunpack.c.l.b16 %v61
    %v199 = vunpack.c.l.b16 %v62
    %v200 = vunpack.c.l.b16 %v63
    %v201 = vunpack.c.l.b16 %v64
    %v202 = vunpack.c.l.b16 %v65
    %v203 = vunpack.c.l.b16 %v66
    %v204 = vunpack.c.l.b16 %v67
    %v205 = vunpack.c.l.b16 %v68
    %v206 = vunpack.c.l.b16 %v69
    %v207 = vunpack.c.l.b16 %v70
    %v208 = vunpack.c.l.b16 %v71
    %v209 = vunpack.c.l.b16 %v72
    %v210 = vunpack.c.l.b16 %v73
    %v211 = vunpack.c.l.b16 %v74
    %v212 = vunpack.c.l.b16 %v75
    %v213 = vunpack.c.l.b16 %v76
    %v214 = vunpack.c.l.b16 %v77
    %v215 = vunpack.c.l.b16 %v78
    %v216 = vunpack.c.l.b16 %v79
    %v217 = vunpack.c.l.b16 %v80
    %v218 = vunpack.c.l.b16 %v81
    %v219 = vunpack.c.l.b16 %v82
    %v220 = vunpack.c.l.b16 %v83
    %v221 = vunpack.c.l.b16 %v84
    %v222 = vunpack.c.l.b16 %v85
    %v223 = vunpack.c.l.b16 %v86
    %v224 = vunpack.c.l.b16 %v87
    %v225 = vunpack.c.l.b16 %v88
    %v226 = vunpack.c.l.b16 %v89
    %v227 = vunpack.c.l.b16 %v90
    %v228 = vunpack.c.l.b16 %v91
    %v229 = vunpack.c.l.b16 %v92
    %v230 = vunpack.c.l.b16 %v93
    %v231 = vunpack.c.l.b16 %v94
    %v232 = vunpack.c.l.b16 %v95
    %v233 = vunpack.c.l.b16 %v96
    %v234 = vunpack.c.l.b16 %v97
    %v235 = vunpack.c.l.b16 %v98
    %v236 = vunpack.c.l.b16 %v99
    %v237 = vunpack.c.l.b16 %v100
    %v238 = vunpack.c.l.b16 %v101
    %v239 = vunpack.c.l.b16 %v102
    %v240 = vpack.c.b16 %v178, %v177
    %v241 = vpack.c.b16 %v180, %v179
    %v242 = vpack.c.b16 %v182, %v181
    %v243 = vpack.c.b16 %v184, %v183
    %v244 = vpack.c.b16 %v186, %v185
    %v245 = vpack.c.b16 %v188, %v187
    %v246 = vpack.c.b16 %v190, %v189
    %v247 = vpack.c.b16 %v192, %v191
    %v248 = vpack.c.b16 %v194, %v193
    %v249 = vpack.c.b16 %v196, %v195
    %v250 = vpack.c.b16 %v198, %v197
    %v251 = vpack.c.b16 %v200, %v199
    %v252 = vpack.c.b16 %v202, %v201
    %v253 = vpack.c.b16 %v204, %v203
    %v254 = vpack.c.b16 %v206, %v205
    %v255 = vpack.c.b16 %v208, %v207
    %v256 = vpack.c.b16 %v210, %v209
    %v257 = vpack.c.b16 %v212, %v211
    %v258 = vpack.c.b16 %v214, %v213
    %v259 = vpack.c.b16 %v216, %v215
    %v260 = vpack.c.b16 %v218, %v217
    %v261 = vpack.c.b16 %v220, %v219
    %v262 = vpack.c.b16 %v222, %v221
    %v263 = vpack.c.b16 %v224, %v223
    %v264 = vpack.c.b16 %v226, %v225
    %v265 = vpack.c.b16 %v228, %v227
    %v266 = vpack.c.b16 %v230, %v229
    %v267 = vpack.c.b16 %v232, %v231
    %v268 = vpack.c.b16 %v234, %v233
    %v269 = vpack.c.b16 %v236, %v235
    %v270 = vpack.c.b16 %v238, %v237
    %v271 = vpack.c.b16 %v239, %v239
    %v276 = vunpack.c.l.b16 %v103
    %v277 = vunpack.c.l.b16 %v104
    %v278 = vunpack.c.l.b16 %v105
    %v279 = vunpack.c.l.b16 %v106
    %v280 = vpack.c.b16 %v277, %v276
    %v281 = vpack.c.b16 %v279, %v278
    %vm284 = vcmask 261120
    %v286 = vsel %vm284, %v240, 0
    %v289 = vsel %vm284, %v241, 0
    %v292 = vsel %vm284, %v242, 0
    %v295 = vsel %vm284, %v243, 0
    %v298 = vsel %vm284, %v244, 0
    %v301 = vsel %vm284, %v245, 0
    %v304 = vsel %vm284, %v246, 0
    %v307 = vsel %vm284, %v247, 0
    %v310 = vsel %vm284, %v248, 0
    %v313 = vsel %vm284, %v249, 0
    %v316 = vsel %vm284, %v250, 0
    %v319 = vsel %vm284, %v251, 0
    %v322 = vsel %vm284, %v252, 0
    %v325 = vsel %vm284, %v253, 0
    %v328 = vsel %vm284, %v254, 0
    %v331 = vsel %vm284, %v255, 0
    %v334 = vsel %vm284, %v256, 0
    %v337 = vsel %vm284, %v257, 0
    %v340 = vsel %vm284, %v258, 0
    %v343 = vsel %vm284, %v259, 0
    %v346 = vsel %vm284, %v260, 0
    %v349 = vsel %vm284, %v261, 0
    %v352 = vsel %vm284, %v262, 0
    %v355 = vsel %vm284, %v263, 0
    %v358 = vsel %vm284, %v264, 0
    %v361 = vsel %vm284, %v265, 0
    %v364 = vsel %vm284, %v266, 0
    %v367 = vsel %vm284, %v267, 0
    %v370 = vsel %vm284, %v268, 0
    %v373 = vsel %vm284, %v269, 0
    %v376 = vsel %vm284, %v270, 0
    %v379 = vsel %vm284, %v271, 0
    %381 = vmatprep.subr.bf16.mxu0 0
    %382 = vmatpush1.bf16.msra.mxu0 %v280
    %383 = vmatprep.subr.bf16.mxu0 0
    %384 = vmatpush1.bf16.msra.mxu0 %v281
    %385 = vmatprep.subr.bf16.mxu0 0
    %386 = vmatpush1.bf16.msra.mxu0 0
    %387 = vmatprep.subr.bf16.mxu0 0
    %388 = vmatpush1.bf16.msra.mxu0 0
    %389 = vmatprep.subr.bf16.mxu0 0
    %390 = vmatpush1.bf16.msra.mxu0 0
    %391 = vmatprep.subr.bf16.mxu0 0
    %392 = vmatpush1.bf16.msra.mxu0 0
    %393 = vmatprep.subr.bf16.mxu0 0
    %394 = vmatpush1.bf16.msra.mxu0 0
    %395 = vmatprep.subr.bf16.mxu0 0
    %396 = vmatpush1.bf16.msra.mxu0 0
    %397 = vmatprep.subr.bf16.mxu0 0
    %398 = vmatpush1.bf16.msra.mxu0 0
    %399 = vmatprep.subr.bf16.mxu0 0
    %400 = vmatpush1.bf16.msra.mxu0 0
    %401 = vmatprep.subr.bf16.mxu0 0
    %402 = vmatpush1.bf16.msra.mxu0 0
    %403 = vmatprep.subr.bf16.mxu0 0
    %404 = vmatpush1.bf16.msra.mxu0 0
    %405 = vmatprep.subr.bf16.mxu0 0
    %406 = vmatpush1.bf16.msra.mxu0 0
    %407 = vmatprep.subr.bf16.mxu0 0
    %408 = vmatpush1.bf16.msra.mxu0 0
    %409 = vmatprep.subr.bf16.mxu0 0
    %410 = vmatpush1.bf16.msra.mxu0 0
    %411 = vmatprep.subr.bf16.mxu0 0
    %412 = vmatpush1.bf16.msra.mxu0 0
    %413 = vmatprep.mubr.bf16.mxu0 0
    %414 = vmatmul.mubr.bf16.gmra.mrb[0].mxu0 %v286
    %v415 = vpop.f32.mrb[0].mxu0
    %v416 = vadd.f32 %v112, %v415
    %v417 = vpop.f32.mrb[0].mxu0
    %v418 = vpop.f32.mrb[0].mxu0
    %v419 = vadd.f32 %v112, %v418
    %v420 = vpop.f32.mrb[0].mxu0
    %421 = vmatprep.mubr.bf16.mxu0 0
    %422 = vmatmul.mubr.bf16.gmra.mrb[0].mxu0 %v289
    %v423 = vpop.f32.mrb[0].mxu0
    %v424 = vadd.f32 %v112, %v423
    %v425 = vpop.f32.mrb[0].mxu0
    %v426 = vpop.f32.mrb[0].mxu0
    %v427 = vadd.f32 %v112, %v426
    %v428 = vpop.f32.mrb[0].mxu0
    %429 = vmatprep.mubr.bf16.mxu0 0
    %430 = vmatmul.mubr.bf16.gmra.mrb[0].mxu0 %v292
    %v431 = vpop.f32.mrb[0].mxu0
    %v432 = vadd.f32 %v112, %v431
    %v433 = vpop.f32.mrb[0].mxu0
    %v434 = vpop.f32.mrb[0].mxu0
    %v435 = vadd.f32 %v112, %v434
    %v436 = vpop.f32.mrb[0].mxu0
    %437 = vmatprep.mubr.bf16.mxu0 0
    %438 = vmatmul.mubr.bf16.gmra.mrb[0].mxu0 %v295
    %v439 = vpop.f32.mrb[0].mxu0
    %v440 = vadd.f32 %v112, %v439
    %v441 = vpop.f32.mrb[0].mxu0
    %v442 = vpop.f32.mrb[0].mxu0
    %v443 = vadd.f32 %v112, %v442
    %v444 = vpop.f32.mrb[0].mxu0
    %445 = vmatprep.mubr.bf16.mxu0 0
    %446 = vmatmul.mubr.bf16.gmra.mrb[0].mxu0 %v298
    %v447 = vpop.f32.mrb[0].mxu0
    %v448 = vadd.f32 %v112, %v447
    %v449 = vpop.f32.mrb[0].mxu0
    %v450 = vpop.f32.mrb[0].mxu0
    %v451 = vadd.f32 %v112, %v450
    %v452 = vpop.f32.mrb[0].mxu0
    %453 = vmatprep.mubr.bf16.mxu0 0
    %454 = vmatmul.mubr.bf16.gmra.mrb[0].mxu0 %v301
    %v455 = vpop.f32.mrb[0].mxu0
    %v456 = vadd.f32 %v112, %v455
    %v457 = vpop.f32.mrb[0].mxu0
    %v458 = vpop.f32.mrb[0].mxu0
    %v459 = vadd.f32 %v112, %v458
    %v460 = vpop.f32.mrb[0].mxu0
    %461 = vmatprep.mubr.bf16.mxu0 0
    %462 = vmatmul.mubr.bf16.gmra.mrb[0].mxu0 %v304
    %v463 = vpop.f32.mrb[0].mxu0
    %v464 = vadd.f32 %v112, %v463
    %v465 = vpop.f32.mrb[0].mxu0
    %v466 = vpop.f32.mrb[0].mxu0
    %v467 = vadd.f32 %v112, %v466
    %v468 = vpop.f32.mrb[0].mxu0
    %469 = vmatprep.mubr.bf16.mxu0 0
    %470 = vmatmul.mubr.bf16.gmra.mrb[0].mxu0 %v307
    %v471 = vpop.f32.mrb[0].mxu0
    %v472 = vadd.f32 %v112, %v471
    %v473 = vpop.f32.mrb[0].mxu0
    %v474 = vpop.f32.mrb[0].mxu0
    %v475 = vadd.f32 %v112, %v474
    %v476 = vpop.f32.mrb[0].mxu0
    %477 = vmatprep.mubr.bf16.mxu0 0
    %478 = vmatmul.mubr.bf16.gmra.mrb[0].mxu0 %v310
    %v479 = vpop.f32.mrb[0].mxu0
    %v480 = vadd.f32 %v112, %v479
    %v481 = vpop.f32.mrb[0].mxu0
    %v482 = vpop.f32.mrb[0].mxu0
    %v483 = vadd.f32 %v112, %v482
    %v484 = vpop.f32.mrb[0].mxu0
    %485 = vmatprep.mubr.bf16.mxu0 0
    %486 = vmatmul.mubr.bf16.gmra.mrb[0].mxu0 %v313
    %v487 = vpop.f32.mrb[0].mxu0
    %v488 = vadd.f32 %v112, %v487
    %v489 = vpop.f32.mrb[0].mxu0
    %v490 = vpop.f32.mrb[0].mxu0
    %v491 = vadd.f32 %v112, %v490
    %v492 = vpop.f32.mrb[0].mxu0
    %493 = vmatprep.mubr.bf16.mxu0 0
    %494 = vmatmul.mubr.bf16.gmra.mrb[0].mxu0 %v316
    %v495 = vpop.f32.mrb[0].mxu0
    %v496 = vadd.f32 %v112, %v495
    %v497 = vpop.f32.mrb[0].mxu0
    %v498 = vpop.f32.mrb[0].mxu0
    %v499 = vadd.f32 %v112, %v498
    %v500 = vpop.f32.mrb[0].mxu0
    %501 = vmatprep.mubr.bf16.mxu0 0
    %502 = vmatmul.mubr.bf16.gmra.mrb[0].mxu0 %v319
    %v503 = vpop.f32.mrb[0].mxu0
    %v504 = vadd.f32 %v112, %v503
    %v505 = vpop.f32.mrb[0].mxu0
    %v506 = vpop.f32.mrb[0].mxu0
    %v507 = vadd.f32 %v112, %v506
    %v508 = vpop.f32.mrb[0].mxu0
    %509 = vmatprep.mubr.bf16.mxu0 0
    %510 = vmatmul.mubr.bf16.gmra.mrb[0].mxu0 %v322
    %v511 = vpop.f32.mrb[0].mxu0
    %v512 = vadd.f32 %v112, %v511
    %v513 = vpop.f32.mrb[0].mxu0
    %v514 = vpop.f32.mrb[0].mxu0
    %v515 = vadd.f32 %v112, %v514
    %v516 = vpop.f32.mrb[0].mxu0
    %517 = vmatprep.mubr.bf16.mxu0 0
    %518 = vmatmul.mubr.bf16.gmra.mrb[0].mxu0 %v325
    %v519 = vpop.f32.mrb[0].mxu0
    %v520 = vadd.f32 %v112, %v519
    %v521 = vpop.f32.mrb[0].mxu0
    %v522 = vpop.f32.mrb[0].mxu0
    %v523 = vadd.f32 %v112, %v522
    %v524 = vpop.f32.mrb[0].mxu0
    %525 = vmatprep.mubr.bf16.mxu0 0
    %526 = vmatmul.mubr.bf16.gmra.mrb[0].mxu0 %v328
    %v527 = vpop.f32.mrb[0].mxu0
    %v528 = vadd.f32 %v112, %v527
    %v529 = vpop.f32.mrb[0].mxu0
    %v530 = vpop.f32.mrb[0].mxu0
    %v531 = vadd.f32 %v112, %v530
    %v532 = vpop.f32.mrb[0].mxu0
    %533 = vmatprep.mubr.bf16.mxu0 0
    %534 = vmatmul.mubr.bf16.gmra.mrb[0].mxu0 %v331
    %v535 = vpop.f32.mrb[0].mxu0
    %v536 = vadd.f32 %v112, %v535
    %v537 = vpop.f32.mrb[0].mxu0
    %v538 = vpop.f32.mrb[0].mxu0
    %v539 = vadd.f32 %v112, %v538
    %v540 = vpop.f32.mrb[0].mxu0
    %541 = vmatprep.mubr.bf16.mxu0 0
    %542 = vmatmul.mubr.bf16.gmra.mrb[0].mxu0 %v334
    %v543 = vpop.f32.mrb[0].mxu0
    %v544 = vadd.f32 %v112, %v543
    %v545 = vpop.f32.mrb[0].mxu0
    %v546 = vpop.f32.mrb[0].mxu0
    %v547 = vadd.f32 %v112, %v546
    %v548 = vpop.f32.mrb[0].mxu0
    %549 = vmatprep.mubr.bf16.mxu0 0
    %550 = vmatmul.mubr.bf16.gmra.mrb[0].mxu0 %v337
    %v551 = vpop.f32.mrb[0].mxu0
    %v552 = vadd.f32 %v112, %v551
    %v553 = vpop.f32.mrb[0].mxu0
    %v554 = vpop.f32.mrb[0].mxu0
    %v555 = vadd.f32 %v112, %v554
    %v556 = vpop.f32.mrb[0].mxu0
    %557 = vmatprep.mubr.bf16.mxu0 0
    %558 = vmatmul.mubr.bf16.gmra.mrb[0].mxu0 %v340
    %v559 = vpop.f32.mrb[0].mxu0
    %v560 = vadd.f32 %v112, %v559
    %v561 = vpop.f32.mrb[0].mxu0
    %v562 = vpop.f32.mrb[0].mxu0
    %v563 = vadd.f32 %v112, %v562
    %v564 = vpop.f32.mrb[0].mxu0
    %565 = vmatprep.mubr.bf16.mxu0 0
    %566 = vmatmul.mubr.bf16.gmra.mrb[0].mxu0 %v343
    %v567 = vpop.f32.mrb[0].mxu0
    %v568 = vadd.f32 %v112, %v567
    %v569 = vpop.f32.mrb[0].mxu0
    %v570 = vpop.f32.mrb[0].mxu0
    %v571 = vadd.f32 %v112, %v570
    %v572 = vpop.f32.mrb[0].mxu0
    %573 = vmatprep.mubr.bf16.mxu0 0
    %574 = vmatmul.mubr.bf16.gmra.mrb[0].mxu0 %v346
    %v575 = vpop.f32.mrb[0].mxu0
    %v576 = vadd.f32 %v112, %v575
    %v577 = vpop.f32.mrb[0].mxu0
    %v578 = vpop.f32.mrb[0].mxu0
    %v579 = vadd.f32 %v112, %v578
    %v580 = vpop.f32.mrb[0].mxu0
    %581 = vmatprep.mubr.bf16.mxu0 0
    %582 = vmatmul.mubr.bf16.gmra.mrb[0].mxu0 %v349
    %v583 = vpop.f32.mrb[0].mxu0
    %v584 = vadd.f32 %v112, %v583
    %v585 = vpop.f32.mrb[0].mxu0
    %v586 = vpop.f32.mrb[0].mxu0
    %v587 = vadd.f32 %v112, %v586
    %v588 = vpop.f32.mrb[0].mxu0
    %589 = vmatprep.mubr.bf16.mxu0 0
    %590 = vmatmul.mubr.bf16.gmra.mrb[0].mxu0 %v352
    %v591 = vpop.f32.mrb[0].mxu0
    %v592 = vadd.f32 %v112, %v591
    %v593 = vpop.f32.mrb[0].mxu0
    %v594 = vpop.f32.mrb[0].mxu0
    %v595 = vadd.f32 %v112, %v594
    %v596 = vpop.f32.mrb[0].mxu0
    %597 = vmatprep.mubr.bf16.mxu0 0
    %598 = vmatmul.mubr.bf16.gmra.mrb[0].mxu0 %v355
    %v599 = vpop.f32.mrb[0].mxu0
    %v600 = vadd.f32 %v112, %v599
    %v601 = vpop.f32.mrb[0].mxu0
    %v602 = vpop.f32.mrb[0].mxu0
    %v603 = vadd.f32 %v112, %v602
    %v604 = vpop.f32.mrb[0].mxu0
    %605 = vmatprep.mubr.bf16.mxu0 0
    %606 = vmatmul.mubr.bf16.gmra.mrb[0].mxu0 %v358
    %v607 = vpop.f32.mrb[0].mxu0
    %v608 = vadd.f32 %v112, %v607
    %v609 = vpop.f32.mrb[0].mxu0
    %v610 = vpop.f32.mrb[0].mxu0
    %v611 = vadd.f32 %v112, %v610
    %v612 = vpop.f32.mrb[0].mxu0
    %613 = vmatprep.mubr.bf16.mxu0 0
    %614 = vmatmul.mubr.bf16.gmra.mrb[0].mxu0 %v361
    %v615 = vpop.f32.mrb[0].mxu0
    %v616 = vadd.f32 %v112, %v615
    %v617 = vpop.f32.mrb[0].mxu0
    %v618 = vpop.f32.mrb[0].mxu0
    %v619 = vadd.f32 %v112, %v618
    %v620 = vpop.f32.mrb[0].mxu0
    %621 = vmatprep.mubr.bf16.mxu0 0
    %622 = vmatmul.mubr.bf16.gmra.mrb[0].mxu0 %v364
    %v623 = vpop.f32.mrb[0].mxu0
    %v624 = vadd.f32 %v112, %v623
    %v625 = vpop.f32.mrb[0].mxu0
    %v626 = vpop.f32.mrb[0].mxu0
    %v627 = vadd.f32 %v112, %v626
    %v628 = vpop.f32.mrb[0].mxu0
    %629 = vmatprep.mubr.bf16.mxu0 0
    %630 = vmatmul.mubr.bf16.gmra.mrb[0].mxu0 %v367
    %v631 = vpop.f32.mrb[0].mxu0
    %v632 = vadd.f32 %v112, %v631
    %v633 = vpop.f32.mrb[0].mxu0
    %v634 = vpop.f32.mrb[0].mxu0
    %v635 = vadd.f32 %v112, %v634
    %v636 = vpop.f32.mrb[0].mxu0
    %637 = vmatprep.mubr.bf16.mxu0 0
    %638 = vmatmul.mubr.bf16.gmra.mrb[0].mxu0 %v370
    %v639 = vpop.f32.mrb[0].mxu0
    %v640 = vadd.f32 %v112, %v639
    %v641 = vpop.f32.mrb[0].mxu0
    %v642 = vpop.f32.mrb[0].mxu0
    %v643 = vadd.f32 %v112, %v642
    %v644 = vpop.f32.mrb[0].mxu0
    %645 = vmatprep.mubr.bf16.mxu0 0
    %646 = vmatmul.mubr.bf16.gmra.mrb[0].mxu0 %v373
    %v647 = vpop.f32.mrb[0].mxu0
    %v648 = vadd.f32 %v112, %v647
    %v649 = vpop.f32.mrb[0].mxu0
    %v650 = vpop.f32.mrb[0].mxu0
    %v651 = vadd.f32 %v112, %v650
    %v652 = vpop.f32.mrb[0].mxu0
    %653 = vmatprep.mubr.bf16.mxu0 0
    %654 = vmatmul.mubr.bf16.gmra.mrb[0].mxu0 %v376
    %v655 = vpop.f32.mrb[0].mxu0
    %v656 = vadd.f32 %v112, %v655
    %v657 = vpop.f32.mrb[0].mxu0
    %v658 = vpop.f32.mrb[0].mxu0
    %v659 = vadd.f32 %v112, %v658
    %v660 = vpop.f32.mrb[0].mxu0
    %661 = vmatprep.mubr.bf16.mxu0 0
    %662 = vmatmul.mubr.bf16.gmra.mrb[0].mxu0 %v379
    %v663 = vpop.f32.mrb[0].mxu0
    %v664 = vadd.f32 %v112, %v663
    %v665 = vpop.f32.mrb[0].mxu0
    %v666 = vpop.f32.mrb[0].mxu0
    %v667 = vpop.f32.mrb[0].mxu0
    %668 = vdwg.mxu0
    %v669 = vmax.f32 %v416, 0.0
    %v670 = vmax.f32 %v419, 0.0
    %v671 = vmax.f32 %v424, 0.0
    %v672 = vmax.f32 %v427, 0.0
    %v673 = vmax.f32 %v432, 0.0
    %v674 = vmax.f32 %v435, 0.0
    %v675 = vmax.f32 %v440, 0.0
    %v676 = vmax.f32 %v443, 0.0
    %v677 = vmax.f32 %v448, 0.0
    %v678 = vmax.f32 %v451, 0.0
    %v679 = vmax.f32 %v456, 0.0
    %v680 = vmax.f32 %v459, 0.0
    %v681 = vmax.f32 %v464, 0.0
    %v682 = vmax.f32 %v467, 0.0
    %v683 = vmax.f32 %v472, 0.0
    %v684 = vmax.f32 %v475, 0.0
    %v685 = vmax.f32 %v480, 0.0
    %v686 = vmax.f32 %v483, 0.0
    %v687 = vmax.f32 %v488, 0.0
    %v688 = vmax.f32 %v491, 0.0
    %v689 = vmax.f32 %v496, 0.0
    %v690 = vmax.f32 %v499, 0.0
    %v691 = vmax.f32 %v504, 0.0
    %v692 = vmax.f32 %v507, 0.0
    %v693 = vmax.f32 %v512, 0.0
    %v694 = vmax.f32 %v515, 0.0
    %v695 = vmax.f32 %v520, 0.0
    %v696 = vmax.f32 %v523, 0.0
    %v697 = vmax.f32 %v528, 0.0
    %v698 = vmax.f32 %v531, 0.0
    %v699 = vmax.f32 %v536, 0.0
    %v700 = vmax.f32 %v539, 0.0
    %v701 = vmax.f32 %v544, 0.0
    %v702 = vmax.f32 %v547, 0.0
    %v703 = vmax.f32 %v552, 0.0
    %v704 = vmax.f32 %v555, 0.0
    %v705 = vmax.f32 %v560, 0.0
    %v706 = vmax.f32 %v563, 0.0
    %v707 = vmax.f32 %v568, 0.0
    %v708 = vmax.f32 %v571, 0.0
    %v709 = vmax.f32 %v576, 0.0
    %v710 = vmax.f32 %v579, 0.0
    %v711 = vmax.f32 %v584, 0.0
    %v712 = vmax.f32 %v587, 0.0
    %v713 = vmax.f32 %v592, 0.0
    %v714 = vmax.f32 %v595, 0.0
    %v715 = vmax.f32 %v600, 0.0
    %v716 = vmax.f32 %v603, 0.0
    %v717 = vmax.f32 %v608, 0.0
    %v718 = vmax.f32 %v611, 0.0
    %v719 = vmax.f32 %v616, 0.0
    %v720 = vmax.f32 %v619, 0.0
    %v721 = vmax.f32 %v624, 0.0
    %v722 = vmax.f32 %v627, 0.0
    %v723 = vmax.f32 %v632, 0.0
    %v724 = vmax.f32 %v635, 0.0
    %v725 = vmax.f32 %v640, 0.0
    %v726 = vmax.f32 %v643, 0.0
    %v727 = vmax.f32 %v648, 0.0
    %v728 = vmax.f32 %v651, 0.0
    %v729 = vmax.f32 %v656, 0.0
    %v730 = vmax.f32 %v659, 0.0
    %v731 = vmax.f32 %v664, 0.0
    %732 = vst.msk [vmem:[#allocation2] sm:$0xff] %vm284, %v669
    %733 = vst.msk [vmem:[#allocation2 + $0x8] sm:$0xff] %vm284, %v670
    %734 = vst.msk [vmem:[#allocation2 + $0x10] sm:$0xff] %vm284, %v671
    %735 = vst.msk [vmem:[#allocation2 + $0x18] sm:$0xff] %vm284, %v672
    %736 = vst.msk [vmem:[#allocation2 + $0x20] sm:$0xff] %vm284, %v673
    %737 = vst.msk [vmem:[#allocation2 + $0x28] sm:$0xff] %vm284, %v674
    %738 = vst.msk [vmem:[#allocation2 + $0x30] sm:$0xff] %vm284, %v675
    %739 = vst.msk [vmem:[#allocation2 + $0x38] sm:$0xff] %vm284, %v676
    %740 = vst.msk [vmem:[#allocation2 + $0x40] sm:$0xff] %vm284, %v677
    %741 = vst.msk [vmem:[#allocation2 + $0x48] sm:$0xff] %vm284, %v678
    %742 = vst.msk [vmem:[#allocation2 + $0x50] sm:$0xff] %vm284, %v679
    %743 = vst.msk [vmem:[#allocation2 + $0x58] sm:$0xff] %vm284, %v680
    %744 = vst.msk [vmem:[#allocation2 + $0x60] sm:$0xff] %vm284, %v681
    %745 = vst.msk [vmem:[#allocation2 + $0x68] sm:$0xff] %vm284, %v682
    %746 = vst.msk [vmem:[#allocation2 + $0x70] sm:$0xff] %vm284, %v683
    %747 = vst.msk [vmem:[#allocation2 + $0x78] sm:$0xff] %vm284, %v684
    %748 = vst.msk [vmem:[#allocation2 + $0x80] sm:$0xff] %vm284, %v685
    %749 = vst.msk [vmem:[#allocation2 + $0x88] sm:$0xff] %vm284, %v686
    %750 = vst.msk [vmem:[#allocation2 + $0x90] sm:$0xff] %vm284, %v687
    %751 = vst.msk [vmem:[#allocation2 + $0x98] sm:$0xff] %vm284, %v688
    %752 = vst.msk [vmem:[#allocation2 + $0xa0] sm:$0xff] %vm284, %v689
    %753 = vst.msk [vmem:[#allocation2 + $0xa8] sm:$0xff] %vm284, %v690
    %754 = vst.msk [vmem:[#allocation2 + $0xb0] sm:$0xff] %vm284, %v691
    %755 = vst.msk [vmem:[#allocation2 + $0xb8] sm:$0xff] %vm284, %v692
    %756 = vst.msk [vmem:[#allocation2 + $0xc0] sm:$0xff] %vm284, %v693
    %757 = vst.msk [vmem:[#allocation2 + $0xc8] sm:$0xff] %vm284, %v694
    %758 = vst.msk [vmem:[#allocation2 + $0xd0] sm:$0xff] %vm284, %v695
    %759 = vst.msk [vmem:[#allocation2 + $0xd8] sm:$0xff] %vm284, %v696
    %760 = vst.msk [vmem:[#allocation2 + $0xe0] sm:$0xff] %vm284, %v697
    %761 = vst.msk [vmem:[#allocation2 + $0xe8] sm:$0xff] %vm284, %v698
    %762 = vst.msk [vmem:[#allocation2 + $0xf0] sm:$0xff] %vm284, %v699
    %763 = vst.msk [vmem:[#allocation2 + $0xf8] sm:$0xff] %vm284, %v700
    %764 = vst.msk [vmem:[#allocation2 + $0x100] sm:$0xff] %vm284, %v701
    %765 = vst.msk [vmem:[#allocation2 + $0x108] sm:$0xff] %vm284, %v702
    %766 = vst.msk [vmem:[#allocation2 + $0x110] sm:$0xff] %vm284, %v703
    %767 = vst.msk [vmem:[#allocation2 + $0x118] sm:$0xff] %vm284, %v704
    %768 = vst.msk [vmem:[#allocation2 + $0x120] sm:$0xff] %vm284, %v705
    %769 = vst.msk [vmem:[#allocation2 + $0x128] sm:$0xff] %vm284, %v706
    %770 = vst.msk [vmem:[#allocation2 + $0x130] sm:$0xff] %vm284, %v707
    %771 = vst.msk [vmem:[#allocation2 + $0x138] sm:$0xff] %vm284, %v708
    %772 = vst.msk [vmem:[#allocation2 + $0x140] sm:$0xff] %vm284, %v709
    %773 = vst.msk [vmem:[#allocation2 + $0x148] sm:$0xff] %vm284, %v710
    %774 = vst.msk [vmem:[#allocation2 + $0x150] sm:$0xff] %vm284, %v711
    %775 = vst.msk [vmem:[#allocation2 + $0x158] sm:$0xff] %vm284, %v712
    %776 = vst.msk [vmem:[#allocation2 + $0x160] sm:$0xff] %vm284, %v713
    %777 = vst.msk [vmem:[#allocation2 + $0x168] sm:$0xff] %vm284, %v714
    %778 = vst.msk [vmem:[#allocation2 + $0x170] sm:$0xff] %vm284, %v715
    %779 = vst.msk [vmem:[#allocation2 + $0x178] sm:$0xff] %vm284, %v716
    %780 = vst.msk [vmem:[#allocation2 + $0x180] sm:$0xff] %vm284, %v717
    %781 = vst.msk [vmem:[#allocation2 + $0x188] sm:$0xff] %vm284, %v718
    %782 = vst.msk [vmem:[#allocation2 + $0x190] sm:$0xff] %vm284, %v719
    %783 = vst.msk [vmem:[#allocation2 + $0x198] sm:$0xff] %vm284, %v720
    %784 = vst.msk [vmem:[#allocation2 + $0x1a0] sm:$0xff] %vm284, %v721
    %785 = vst.msk [vmem:[#allocation2 + $0x1a8] sm:$0xff] %vm284, %v722
    %786 = vst.msk [vmem:[#allocation2 + $0x1b0] sm:$0xff] %vm284, %v723
    %787 = vst.msk [vmem:[#allocation2 + $0x1b8] sm:$0xff] %vm284, %v724
    %788 = vst.msk [vmem:[#allocation2 + $0x1c0] sm:$0xff] %vm284, %v725
    %789 = vst.msk [vmem:[#allocation2 + $0x1c8] sm:$0xff] %vm284, %v726
    %790 = vst.msk [vmem:[#allocation2 + $0x1d0] sm:$0xff] %vm284, %v727
    %791 = vst.msk [vmem:[#allocation2 + $0x1d8] sm:$0xff] %vm284, %v728
    %792 = vst.msk [vmem:[#allocation2 + $0x1e0] sm:$0xff] %vm284, %v729
    %793 = vst.msk [vmem:[#allocation2 + $0x1e8] sm:$0xff] %vm284, %v730
    %794 = vst.msk [vmem:[#allocation2 + $0x1f0] sm:$0xff] %vm284, %v731
    %v795 = vld [vmem:[#allocation2] ss:$4 sm:$0xff]
    %s796 = scalar_lea.vmem [#allocation2], 32
    %v797 = vld [vmem:[%s796] ss:$4 sm:$0xff]
    %s798 = scalar_lea.vmem [#allocation2], 64
    %v799 = vld [vmem:[%s798] ss:$4 sm:$0xff]
    %s800 = scalar_lea.vmem [#allocation2], 96
    %v801 = vld [vmem:[%s800] ss:$4 sm:$0xff]
    %s802 = scalar_lea.vmem [#allocation2], 128
    %v803 = vld [vmem:[%s802] ss:$4 sm:$0xff]
    %s804 = scalar_lea.vmem [#allocation2], 160
    %v805 = vld [vmem:[%s804] ss:$4 sm:$0xff]
    %s806 = scalar_lea.vmem [#allocation2], 192
    %v807 = vld [vmem:[%s806] ss:$4 sm:$0xff]
    %s808 = scalar_lea.vmem [#allocation2], 224
    %v809 = vld [vmem:[%s808] ss:$4 sm:$0x3f]
    %s810 = scalar_lea.vmem [#allocation2], 1
    %v811 = vld [vmem:[%s810] ss:$4 sm:$0xff]
    %s812 = scalar_lea.vmem [#allocation2], 33
    %v813 = vld [vmem:[%s812] ss:$4 sm:$0xff]
    %s814 = scalar_lea.vmem [#allocation2], 65
    %v815 = vld [vmem:[%s814] ss:$4 sm:$0xff]
    %s816 = scalar_lea.vmem [#allocation2], 97
    %v817 = vld [vmem:[%s816] ss:$4 sm:$0xff]
    %s818 = scalar_lea.vmem [#allocation2], 129
    %v819 = vld [vmem:[%s818] ss:$4 sm:$0xff]
    %s820 = scalar_lea.vmem [#allocation2], 161
    %v821 = vld [vmem:[%s820] ss:$4 sm:$0xff]
    %s822 = scalar_lea.vmem [#allocation2], 193
    %v823 = vld [vmem:[%s822] ss:$4 sm:$0xff]
    %s824 = scalar_lea.vmem [#allocation2], 225
    %v825 = vld [vmem:[%s824] ss:$4 sm:$0x3f]
    %v826 = vmax.f32 %v795, %v811
    %v827 = vmax.f32 %v797, %v813
    %v828 = vmax.f32 %v799, %v815
    %v829 = vmax.f32 %v801, %v817
    %v830 = vmax.f32 %v803, %v819
    %v831 = vmax.f32 %v805, %v821
    %v832 = vmax.f32 %v807, %v823
    %v833 = vmax.f32 %v809, %v825
    %s834 = scalar_lea.vmem [#allocation2], 2
    %v835 = vld [vmem:[%s834] ss:$4 sm:$0xff]
    %s836 = scalar_lea.vmem [#allocation2], 34
    %v837 = vld [vmem:[%s836] ss:$4 sm:$0xff]
    %s838 = scalar_lea.vmem [#allocation2], 66
    %v839 = vld [vmem:[%s838] ss:$4 sm:$0xff]
    %s840 = scalar_lea.vmem [#allocation2], 98
    %v841 = vld [vmem:[%s840] ss:$4 sm:$0xff]
    %s842 = scalar_lea.vmem [#allocation2], 130
    %v843 = vld [vmem:[%s842] ss:$4 sm:$0xff]
    %s844 = scalar_lea.vmem [#allocation2], 162
    %v845 = vld [vmem:[%s844] ss:$4 sm:$0xff]
    %s846 = scalar_lea.vmem [#allocation2], 194
    %v847 = vld [vmem:[%s846] ss:$4 sm:$0xff]
    %s848 = scalar_lea.vmem [#allocation2], 226
    %v849 = vld [vmem:[%s848] ss:$4 sm:$0x3f]
    %v850 = vmax.f32 %v826, %v835
    %v851 = vmax.f32 %v827, %v837
    %v852 = vmax.f32 %v828, %v839
    %v853 = vmax.f32 %v829, %v841
    %v854 = vmax.f32 %v830, %v843
    %v855 = vmax.f32 %v831, %v845
    %v856 = vmax.f32 %v832, %v847
    %v857 = vmax.f32 %v833, %v849
    %s858 = scalar_lea.vmem [#allocation2], 3
    %v859 = vld [vmem:[%s858] ss:$4 sm:$0xff]
    %s860 = scalar_lea.vmem [#allocation2], 35
    %v861 = vld [vmem:[%s860] ss:$4 sm:$0xff]
    %s862 = scalar_lea.vmem [#allocation2], 67
    %v863 = vld [vmem:[%s862] ss:$4 sm:$0xff]
    %s864 = scalar_lea.vmem [#allocation2], 99
    %v865 = vld [vmem:[%s864] ss:$4 sm:$0xff]
    %s866 = scalar_lea.vmem [#allocation2], 131
    %v867 = vld [vmem:[%s866] ss:$4 sm:$0xff]
    %s868 = scalar_lea.vmem [#allocation2], 163
    %v869 = vld [vmem:[%s868] ss:$4 sm:$0xff]
    %s870 = scalar_lea.vmem [#allocation2], 195
    %v871 = vld [vmem:[%s870] ss:$4 sm:$0xff]
    %s872 = scalar_lea.vmem [#allocation2], 227
    %v873 = vld [vmem:[%s872] ss:$4 sm:$0x3f]
    %v874 = vmax.f32 %v850, %v859
    %v875 = vmax.f32 %v851, %v861
    %v876 = vmax.f32 %v852, %v863
    %v877 = vmax.f32 %v853, %v865
    %v878 = vmax.f32 %v854, %v867
    %v879 = vmax.f32 %v855, %v869
    %v880 = vmax.f32 %v856, %v871
    %v881 = vmax.f32 %v857, %v873
    %882 = vst.msk [vmem:[#allocation3] sm:$0xff] %vm284, %v874
    %883 = vst.msk [vmem:[#allocation3 + $0x8] sm:$0xff] %vm284, %v875
    %884 = vst.msk [vmem:[#allocation3 + $0x10] sm:$0xff] %vm284, %v876
    %885 = vst.msk [vmem:[#allocation3 + $0x18] sm:$0xff] %vm284, %v877
    %886 = vst.msk [vmem:[#allocation3 + $0x20] sm:$0xff] %vm284, %v878
    %887 = vst.msk [vmem:[#allocation3 + $0x28] sm:$0xff] %vm284, %v879
    %888 = vst.msk [vmem:[#allocation3 + $0x30] sm:$0xff] %vm284, %v880
    %vm889 = vcmask 259072
    %890 = vst.msk [vmem:[#allocation3 + $0x38] sm:$0x3f] %vm889, %v881
    %s891 = scalar_lea.vmem [#allocation2], 249
    %v892 = vld [vmem:[%s891] ss:$4 sm:$0xff]
    %s893 = scalar_lea.vmem [#allocation2], 281
    %v894 = vld [vmem:[%s893] ss:$4 sm:$0xff]
    %s895 = scalar_lea.vmem [#allocation2], 313
    %v896 = vld [vmem:[%s895] ss:$4 sm:$0xff]
    %s897 = scalar_lea.vmem [#allocation2], 345
    %v898 = vld [vmem:[%s897] ss:$4 sm:$0xff]
    %s899 = scalar_lea.vmem [#allocation2], 377
    %v900 = vld [vmem:[%s899] ss:$4 sm:$0xff]
    %s901 = scalar_lea.vmem [#allocation2], 409
    %v902 = vld [vmem:[%s901] ss:$4 sm:$0xff]
    %s903 = scalar_lea.vmem [#allocation2], 441
    %v904 = vld [vmem:[%s903] ss:$4 sm:$0xff]
    %s905 = scalar_lea.vmem [#allocation2], 473
    %v906 = vld [vmem:[%s905] ss:$4 sm:$0x3f]
    %s907 = scalar_lea.vmem [#allocation2], 250
    %v908 = vld [vmem:[%s907] ss:$4 sm:$0xff]
    %s909 = scalar_lea.vmem [#allocation2], 282
    %v910 = vld [vmem:[%s909] ss:$4 sm:$0xff]
    %s911 = scalar_lea.vmem [#allocation2], 314
    %v912 = vld [vmem:[%s911] ss:$4 sm:$0xff]
    %s913 = scalar_lea.vmem [#allocation2], 346
    %v914 = vld [vmem:[%s913] ss:$4 sm:$0xff]
    %s915 = scalar_lea.vmem [#allocation2], 378
    %v916 = vld [vmem:[%s915] ss:$4 sm:$0xff]
    %s917 = scalar_lea.vmem [#allocation2], 410
    %v918 = vld [vmem:[%s917] ss:$4 sm:$0xff]
    %s919 = scalar_lea.vmem [#allocation2], 442
    %v920 = vld [vmem:[%s919] ss:$4 sm:$0xff]
    %s921 = scalar_lea.vmem [#allocation2], 474
    %v922 = vld [vmem:[%s921] ss:$4 sm:$0x3f]
    %v923 = vmax.f32 %v892, %v908
    %v924 = vmax.f32 %v894, %v910
    %v925 = vmax.f32 %v896, %v912
    %v926 = vmax.f32 %v898, %v914
    %v927 = vmax.f32 %v900, %v916
    %v928 = vmax.f32 %v902, %v918
    %v929 = vmax.f32 %v904, %v920
    %v930 = vmax.f32 %v906, %v922
    %s931 = scalar_lea.vmem [#allocation2], 251
    %v932 = vld [vmem:[%s931] ss:$4 sm:$0xff]
    %s933 = scalar_lea.vmem [#allocation2], 283
    %v934 = vld [vmem:[%s933] ss:$4 sm:$0xff]
    %s935 = scalar_lea.vmem [#allocation2], 315
    %v936 = vld [vmem:[%s935] ss:$4 sm:$0xff]
    %s937 = scalar_lea.vmem [#allocation2], 347
    %v938 = vld [vmem:[%s937] ss:$4 sm:$0xff]
    %s939 = scalar_lea.vmem [#allocation2], 379
    %v940 = vld [vmem:[%s939] ss:$4 sm:$0xff]
    %s941 = scalar_lea.vmem [#allocation2], 411
    %v942 = vld [vmem:[%s941] ss:$4 sm:$0xff]
    %s943 = scalar_lea.vmem [#allocation2], 443
    %v944 = vld [vmem:[%s943] ss:$4 sm:$0xff]
    %s945 = scalar_lea.vmem [#allocation2], 475
    %v946 = vld [vmem:[%s945] ss:$4 sm:$0x3f]
    %v947 = vmax.f32 %v923, %v932
    %v948 = vmax.f32 %v924, %v934
    %v949 = vmax.f32 %v925, %v936
    %v950 = vmax.f32 %v926, %v938
    %v951 = vmax.f32 %v927, %v940
    %v952 = vmax.f32 %v928, %v942
    %v953 = vmax.f32 %v929, %v944
    %v954 = vmax.f32 %v930, %v946
    %s955 = scalar_lea.vmem [#allocation2], 252
    %v956 = vld [vmem:[%s955] ss:$4 sm:$0xff]
    %s957 = scalar_lea.vmem [#allocation2], 284
    %v958 = vld [vmem:[%s957] ss:$4 sm:$0xff]
    %s959 = scalar_lea.vmem [#allocation2], 316
    %v960 = vld [vmem:[%s959] ss:$4 sm:$0xff]
    %s961 = scalar_lea.vmem [#allocation2], 348
    %v962 = vld [vmem:[%s961] ss:$4 sm:$0xff]
    %s963 = scalar_lea.vmem [#allocation2], 380
    %v964 = vld [vmem:[%s963] ss:$4 sm:$0xff]
    %s965 = scalar_lea.vmem [#allocation2], 412
    %v966 = vld [vmem:[%s965] ss:$4 sm:$0xff]
    %s967 = scalar_lea.vmem [#allocation2], 444
    %v968 = vld [vmem:[%s967] ss:$4 sm:$0xff]
    %s969 = scalar_lea.vmem [#allocation2], 476
    %v970 = vld [vmem:[%s969] ss:$4 sm:$0x3f]
    %v971 = vmax.f32 %v947, %v956
    %v972 = vmax.f32 %v948, %v958
    %v973 = vmax.f32 %v949, %v960
    %v974 = vmax.f32 %v950, %v962
    %v975 = vmax.f32 %v951, %v964
    %v976 = vmax.f32 %v952, %v966
    %v977 = vmax.f32 %v953, %v968
    %v978 = vmax.f32 %v954, %v970
    %979 = vst.msk [vmem:[#allocation3 + $0x3e] sm:$0xff] %vm284, %v971
    %980 = vst.msk [vmem:[#allocation3 + $0x46] sm:$0xff] %vm284, %v972
    %981 = vst.msk [vmem:[#allocation3 + $0x4e] sm:$0xff] %vm284, %v973
    %982 = vst.msk [vmem:[#allocation3 + $0x56] sm:$0xff] %vm284, %v974
    %983 = vst.msk [vmem:[#allocation3 + $0x5e] sm:$0xff] %vm284, %v975
    %984 = vst.msk [vmem:[#allocation3 + $0x66] sm:$0xff] %vm284, %v976
    %985 = vst.msk [vmem:[#allocation3 + $0x6e] sm:$0xff] %vm284, %v977
    %986 = vst.msk [vmem:[#allocation3 + $0x76] sm:$0x3f] %vm889, %v978
    %v987 = vld [vmem:[#allocation3] sm:$0xff]
    %v988 = vld [vmem:[#allocation3 + $0x8] sm:$0xff]
    %v989 = vld [vmem:[#allocation3 + $0x10] sm:$0xff]
    %v990 = vld [vmem:[#allocation3 + $0x18] sm:$0xff]
    %v991 = vld [vmem:[#allocation3 + $0x20] sm:$0xff]
    %v992 = vld [vmem:[#allocation3 + $0x28] sm:$0xff]
    %v993 = vld [vmem:[#allocation3 + $0x30] sm:$0xff]
    %v994 = vld [vmem:[#allocation3 + $0x38] sm:$0xff]
    %v995 = vld [vmem:[#allocation3 + $0x40] sm:$0xff]
    %v996 = vld [vmem:[#allocation3 + $0x48] sm:$0xff]
    %v997 = vld [vmem:[#allocation3 + $0x50] sm:$0xff]
    %v998 = vld [vmem:[#allocation3 + $0x58] sm:$0xff]
    %v999 = vld [vmem:[#allocation3 + $0x60] sm:$0xff]
    %v1000 = vld [vmem:[#allocation3 + $0x68] sm:$0xff]
    %v1001 = vld [vmem:[#allocation3 + $0x70] sm:$0x1f]
    %v1002 = vpack.c.bf16 %v988, %v987
    %v1003 = vpack.c.bf16 %v990, %v989
    %v1004 = vpack.c.bf16 %v992, %v991
    %v1005 = vpack.c.bf16 %v994, %v993
    %v1006 = vpack.c.bf16 %v996, %v995
    %v1007 = vpack.c.bf16 %v998, %v997
    %v1008 = vpack.c.bf16 %v1000, %v999
    %v1009 = vpack.c.bf16 %v1001, %v1001
    %v1010 = vld [vmem:[%s3] sm:$0xf]
    %v1011 = vld [vmem:[%s3 + $0x4] sm:$0xf]
    %v1012 = vld [vmem:[%s3 + $0x8] sm:$0xf]
    %v1013 = vld [vmem:[%s3 + $0xc] sm:$0xf]
    %v1014 = vld [vmem:[#allocation3 + $0x1] sm:$0xff]
    %v1015 = vld [vmem:[#allocation3 + $0x9] sm:$0xff]
    %v1016 = vld [vmem:[#allocation3 + $0x11] sm:$0xff]
    %v1017 = vld [vmem:[#allocation3 + $0x19] sm:$0xff]
    %v1018 = vld [vmem:[#allocation3 + $0x21] sm:$0xff]
    %v1019 = vld [vmem:[#allocation3 + $0x29] sm:$0xff]
    %v1020 = vld [vmem:[#allocation3 + $0x31] sm:$0xff]
    %v1021 = vld [vmem:[#allocation3 + $0x39] sm:$0xff]
    %v1022 = vld [vmem:[#allocation3 + $0x41] sm:$0xff]
    %v1023 = vld [vmem:[#allocation3 + $0x49] sm:$0xff]
    %v1024 = vld [vmem:[#allocation3 + $0x51] sm:$0xff]
    %v1025 = vld [vmem:[#allocation3 + $0x59] sm:$0xff]
    %v1026 = vld [vmem:[#allocation3 + $0x61] sm:$0xff]
    %v1027 = vld [vmem:[#allocation3 + $0x69] sm:$0xff]
    %v1028 = vld [vmem:[#allocation3 + $0x71] sm:$0x1f]
    %v1029 = vpack.c.bf16 %v1015, %v1014
    %v1030 = vpack.c.bf16 %v1017, %v1016
    %v1031 = vpack.c.bf16 %v1019, %v1018
    %v1032 = vpack.c.bf16 %v1021, %v1020
    %v1033 = vpack.c.bf16 %v1023, %v1022
    %v1034 = vpack.c.bf16 %v1025, %v1024
    %v1035 = vpack.c.bf16 %v1027, %v1026
    %v1036 = vpack.c.bf16 %v1028, %v1028
    %v1037 = vld [vmem:[%s3 + $0x10] sm:$0xf]
    %v1038 = vld [vmem:[%s3 + $0x14] sm:$0xf]
    %v1039 = vld [vmem:[%s3 + $0x18] sm:$0xf]
    %v1040 = vld [vmem:[%s3 + $0x1c] sm:$0xf]
    %v1045 = vunpack.c.l.b16 %v1037
    %v1046 = vunpack.c.l.b16 %v1038
    %v1047 = vunpack.c.l.b16 %v1039
    %v1048 = vunpack.c.l.b16 %v1040
    %v1049 = vpack.c.b16 %v1046, %v1045
    %v1050 = vpack.c.b16 %v1048, %v1047
    %v1054 = vsel %vm284, %v1029, 0
    %v1057 = vsel %vm284, %v1030, 0
    %v1060 = vsel %vm284, %v1031, 0
    %v1063 = vsel %vm284, %v1032, 0
    %v1066 = vsel %vm284, %v1033, 0
    %v1069 = vsel %vm284, %v1034, 0
    %v1072 = vsel %vm284, %v1035, 0
    %v1075 = vsel %vm284, %v1036, 0
    %1077 = vmatprep.subr.bf16.mxu0 0
    %1078 = vmatpush1.bf16.msra.mxu0 %v1049
    %1079 = vmatprep.subr.bf16.mxu0 0
    %1080 = vmatpush1.bf16.msra.mxu0 %v1050
    %1081 = vmatprep.subr.bf16.mxu0 0
    %1082 = vmatpush1.bf16.msra.mxu0 0
    %1083 = vmatprep.subr.bf16.mxu0 0
    %1084 = vmatpush1.bf16.msra.mxu0 0
    %1085 = vmatprep.subr.bf16.mxu0 0
    %1086 = vmatpush1.bf16.msra.mxu0 0
    %1087 = vmatprep.subr.bf16.mxu0 0
    %1088 = vmatpush1.bf16.msra.mxu0 0
    %1089 = vmatprep.subr.bf16.mxu0 0
    %1090 = vmatpush1.bf16.msra.mxu0 0
    %1091 = vmatprep.subr.bf16.mxu0 0
    %1092 = vmatpush1.bf16.msra.mxu0 0
    %1093 = vmatprep.subr.bf16.mxu0 0
    %1094 = vmatpush1.bf16.msra.mxu0 0
    %1095 = vmatprep.subr.bf16.mxu0 0
    %1096 = vmatpush1.bf16.msra.mxu0 0
    %1097 = vmatprep.subr.bf16.mxu0 0
    %1098 = vmatpush1.bf16.msra.mxu0 0
    %1099 = vmatprep.subr.bf16.mxu0 0
    %1100 = vmatpush1.bf16.msra.mxu0 0
    %1101 = vmatprep.subr.bf16.mxu0 0
    %1102 = vmatpush1.bf16.msra.mxu0 0
    %1103 = vmatprep.subr.bf16.mxu0 0
    %1104 = vmatpush1.bf16.msra.mxu0 0
    %1105 = vmatprep.subr.bf16.mxu0 0
    %1106 = vmatpush1.bf16.msra.mxu0 0
    %1107 = vmatprep.subr.bf16.mxu0 0
    %1108 = vmatpush1.bf16.msra.mxu0 0
    %1109 = vmatprep.mubr.bf16.mxu0 0
    %1110 = vmatmul.mubr.bf16.gmra.mrb[0].mxu0 %v1054
    %v1111 = vpop.f32.mrb[0].mxu0
    %v1112 = vadd.f32 0.0, %v1111
    %v1113 = vpop.f32.mrb[0].mxu0
    %v1114 = vpop.f32.mrb[0].mxu0
    %v1115 = vadd.f32 0.0, %v1114
    %v1116 = vpop.f32.mrb[0].mxu0
    %1117 = vmatprep.mubr.bf16.mxu0 0
    %1118 = vmatmul.mubr.bf16.gmra.mrb[0].mxu0 %v1057
    %v1119 = vpop.f32.mrb[0].mxu0
    %v1120 = vadd.f32 0.0, %v1119
    %v1121 = vpop.f32.mrb[0].mxu0
    %v1122 = vpop.f32.mrb[0].mxu0
    %v1123 = vadd.f32 0.0, %v1122
    %v1124 = vpop.f32.mrb[0].mxu0
    %1125 = vmatprep.mubr.bf16.mxu0 0
    %1126 = vmatmul.mubr.bf16.gmra.mrb[0].mxu0 %v1060
    %v1127 = vpop.f32.mrb[0].mxu0
    %v1128 = vadd.f32 0.0, %v1127
    %v1129 = vpop.f32.mrb[0].mxu0
    %v1130 = vpop.f32.mrb[0].mxu0
    %v1131 = vadd.f32 0.0, %v1130
    %v1132 = vpop.f32.mrb[0].mxu0
    %1133 = vmatprep.mubr.bf16.mxu0 0
    %1134 = vmatmul.mubr.bf16.gmra.mrb[0].mxu0 %v1063
    %v1135 = vpop.f32.mrb[0].mxu0
    %v1136 = vadd.f32 0.0, %v1135
    %v1137 = vpop.f32.mrb[0].mxu0
    %v1138 = vpop.f32.mrb[0].mxu0
    %v1139 = vadd.f32 0.0, %v1138
    %v1140 = vpop.f32.mrb[0].mxu0
    %1141 = vmatprep.mubr.bf16.mxu0 0
    %1142 = vmatmul.mubr.bf16.gmra.mrb[0].mxu0 %v1066
    %v1143 = vpop.f32.mrb[0].mxu0
    %v1144 = vadd.f32 0.0, %v1143
    %v1145 = vpop.f32.mrb[0].mxu0
    %v1146 = vpop.f32.mrb[0].mxu0
    %v1147 = vadd.f32 0.0, %v1146
    %v1148 = vpop.f32.mrb[0].mxu0
    %1149 = vmatprep.mubr.bf16.mxu0 0
    %1150 = vmatmul.mubr.bf16.gmra.mrb[0].mxu0 %v1069
    %v1151 = vpop.f32.mrb[0].mxu0
    %v1152 = vadd.f32 0.0, %v1151
    %v1153 = vpop.f32.mrb[0].mxu0
    %v1154 = vpop.f32.mrb[0].mxu0
    %v1155 = vadd.f32 0.0, %v1154
    %v1156 = vpop.f32.mrb[0].mxu0
    %1157 = vmatprep.mubr.bf16.mxu0 0
    %1158 = vmatmul.mubr.bf16.gmra.mrb[0].mxu0 %v1072
    %v1159 = vpop.f32.mrb[0].mxu0
    %v1160 = vadd.f32 0.0, %v1159
    %v1161 = vpop.f32.mrb[0].mxu0
    %v1162 = vpop.f32.mrb[0].mxu0
    %v1163 = vadd.f32 0.0, %v1162
    %v1164 = vpop.f32.mrb[0].mxu0
    %1165 = vmatprep.mubr.bf16.mxu0 0
    %1166 = vmatmul.mubr.bf16.gmra.mrb[0].mxu0 %v1075
    %v1167 = vpop.f32.mrb[0].mxu0
    %v1168 = vadd.f32 0.0, %v1167
    %v1169 = vpop.f32.mrb[0].mxu0
    %v1170 = vpop.f32.mrb[0].mxu0
    %v1171 = vpop.f32.mrb[0].mxu0
    %1172 = vdwg.mxu0
    %v1177 = vunpack.c.l.b16 %v1010
    %v1178 = vunpack.c.l.b16 %v1011
    %v1179 = vunpack.c.l.b16 %v1012
    %v1180 = vunpack.c.l.b16 %v1013
    %v1181 = vpack.c.b16 %v1178, %v1177
    %v1182 = vpack.c.b16 %v1180, %v1179
    %v1186 = vsel %vm284, %v1002, 0
    %v1189 = vsel %vm284, %v1003, 0
    %v1192 = vsel %vm284, %v1004, 0
    %v1195 = vsel %vm284, %v1005, 0
    %v1198 = vsel %vm284, %v1006, 0
    %v1201 = vsel %vm284, %v1007, 0
    %v1204 = vsel %vm284, %v1008, 0
    %v1207 = vsel %vm284, %v1009, 0
    %1209 = vmatprep.subr.bf16.mxu0 0
    %1210 = vmatpush1.bf16.msra.mxu0 %v1181
    %1211 = vmatprep.subr.bf16.mxu0 0
    %1212 = vmatpush1.bf16.msra.mxu0 %v1182
    %1213 = vmatprep.subr.bf16.mxu0 0
    %1214 = vmatpush1.bf16.msra.mxu0 0
    %1215 = vmatprep.subr.bf16.mxu0 0
    %1216 = vmatpush1.bf16.msra.mxu0 0
    %1217 = vmatprep.subr.bf16.mxu0 0
    %1218 = vmatpush1.bf16.msra.mxu0 0
    %1219 = vmatprep.subr.bf16.mxu0 0
    %1220 = vmatpush1.bf16.msra.mxu0 0
    %1221 = vmatprep.subr.bf16.mxu0 0
    %1222 = vmatpush1.bf16.msra.mxu0 0
    %1223 = vmatprep.subr.bf16.mxu0 0
    %1224 = vmatpush1.bf16.msra.mxu0 0
    %1225 = vmatprep.subr.bf16.mxu0 0
    %1226 = vmatpush1.bf16.msra.mxu0 0
    %1227 = vmatprep.subr.bf16.mxu0 0
    %1228 = vmatpush1.bf16.msra.mxu0 0
    %1229 = vmatprep.subr.bf16.mxu0 0
    %1230 = vmatpush1.bf16.msra.mxu0 0
    %1231 = vmatprep.subr.bf16.mxu0 0
    %1232 = vmatpush1.bf16.msra.mxu0 0
    %1233 = vmatprep.subr.bf16.mxu0 0
    %1234 = vmatpush1.bf16.msra.mxu0 0
    %1235 = vmatprep.subr.bf16.mxu0 0
    %1236 = vmatpush1.bf16.msra.mxu0 0
    %1237 = vmatprep.subr.bf16.mxu0 0
    %1238 = vmatpush1.bf16.msra.mxu0 0
    %1239 = vmatprep.subr.bf16.mxu0 0
    %1240 = vmatpush1.bf16.msra.mxu0 0
    %1241 = vmatprep.mubr.bf16.mxu0 0
    %1242 = vmatmul.mubr.bf16.gmra.mrb[0].mxu0 %v1186
    %v1243 = vpop.f32.mrb[0].mxu0
    %v1244 = vadd.f32 %v1112, %v1243
    %v1245 = vpop.f32.mrb[0].mxu0
    %v1246 = vpop.f32.mrb[0].mxu0
    %v1247 = vadd.f32 %v1115, %v1246
    %v1248 = vpop.f32.mrb[0].mxu0
    %1249 = vmatprep.mubr.bf16.mxu0 0
    %1250 = vmatmul.mubr.bf16.gmra.mrb[0].mxu0 %v1189
    %v1251 = vpop.f32.mrb[0].mxu0
    %v1252 = vadd.f32 %v1120, %v1251
    %v1253 = vpop.f32.mrb[0].mxu0
    %v1254 = vpop.f32.mrb[0].mxu0
    %v1255 = vadd.f32 %v1123, %v1254
    %v1256 = vpop.f32.mrb[0].mxu0
    %1257 = vmatprep.mubr.bf16.mxu0 0
    %1258 = vmatmul.mubr.bf16.gmra.mrb[0].mxu0 %v1192
    %v1259 = vpop.f32.mrb[0].mxu0
    %v1260 = vadd.f32 %v1128, %v1259
    %v1261 = vpop.f32.mrb[0].mxu0
    %v1262 = vpop.f32.mrb[0].mxu0
    %v1263 = vadd.f32 %v1131, %v1262
    %v1264 = vpop.f32.mrb[0].mxu0
    %1265 = vmatprep.mubr.bf16.mxu0 0
    %1266 = vmatmul.mubr.bf16.gmra.mrb[0].mxu0 %v1195
    %v1267 = vpop.f32.mrb[0].mxu0
    %v1268 = vadd.f32 %v1136, %v1267
    %v1269 = vpop.f32.mrb[0].mxu0
    %v1270 = vpop.f32.mrb[0].mxu0
    %v1271 = vadd.f32 %v1139, %v1270
    %v1272 = vpop.f32.mrb[0].mxu0
    %1273 = vmatprep.mubr.bf16.mxu0 0
    %1274 = vmatmul.mubr.bf16.gmra.mrb[0].mxu0 %v1198
    %v1275 = vpop.f32.mrb[0].mxu0
    %v1276 = vadd.f32 %v1144, %v1275
    %v1277 = vpop.f32.mrb[0].mxu0
    %v1278 = vpop.f32.mrb[0].mxu0
    %v1279 = vadd.f32 %v1147, %v1278
    %v1280 = vpop.f32.mrb[0].mxu0
    %1281 = vmatprep.mubr.bf16.mxu0 0
    %1282 = vmatmul.mubr.bf16.gmra.mrb[0].mxu0 %v1201
    %v1283 = vpop.f32.mrb[0].mxu0
    %v1284 = vadd.f32 %v1152, %v1283
    %v1285 = vpop.f32.mrb[0].mxu0
    %v1286 = vpop.f32.mrb[0].mxu0
    %v1287 = vadd.f32 %v1155, %v1286
    %v1288 = vpop.f32.mrb[0].mxu0
    %1289 = vmatprep.mubr.bf16.mxu0 0
    %1290 = vmatmul.mubr.bf16.gmra.mrb[0].mxu0 %v1204
    %v1291 = vpop.f32.mrb[0].mxu0
    %v1292 = vadd.f32 %v1160, %v1291
    %v1293 = vpop.f32.mrb[0].mxu0
    %v1294 = vpop.f32.mrb[0].mxu0
    %v1295 = vadd.f32 %v1163, %v1294
    %v1296 = vpop.f32.mrb[0].mxu0
    %1297 = vmatprep.mubr.bf16.mxu0 0
    %1298 = vmatmul.mubr.bf16.gmra.mrb[0].mxu0 %v1207
    %v1299 = vpop.f32.mrb[0].mxu0
    %v1300 = vadd.f32 %v1168, %v1299
    %v1301 = vpop.f32.mrb[0].mxu0
    %v1302 = vpop.f32.mrb[0].mxu0
    %v1303 = vpop.f32.mrb[0].mxu0
    %1304 = vdwg.mxu0
    %v1305 = vld [vmem:[#allocation3 + $0x2] sm:$0xff]
    %v1306 = vld [vmem:[#allocation3 + $0xa] sm:$0xff]
    %v1307 = vld [vmem:[#allocation3 + $0x12] sm:$0xff]
    %v1308 = vld [vmem:[#allocation3 + $0x1a] sm:$0xff]
    %v1309 = vld [vmem:[#allocation3 + $0x22] sm:$0xff]
    %v1310 = vld [vmem:[#allocation3 + $0x2a] sm:$0xff]
    %v1311 = vld [vmem:[#allocation3 + $0x32] sm:$0xff]
    %v1312 = vld [vmem:[#allocation3 + $0x3a] sm:$0xff]
    %v1313 = vld [vmem:[#allocation3 + $0x42] sm:$0xff]
    %v1314 = vld [vmem:[#allocation3 + $0x4a] sm:$0xff]
    %v1315 = vld [vmem:[#allocation3 + $0x52] sm:$0xff]
    %v1316 = vld [vmem:[#allocation3 + $0x5a] sm:$0xff]
    %v1317 = vld [vmem:[#allocation3 + $0x62] sm:$0xff]
    %v1318 = vld [vmem:[#allocation3 + $0x6a] sm:$0xff]
    %v1319 = vld [vmem:[#allocation3 + $0x72] sm:$0x1f]
    %v1320 = vpack.c.bf16 %v1306, %v1305
    %v1321 = vpack.c.bf16 %v1308, %v1307
    %v1322 = vpack.c.bf16 %v1310, %v1309
    %v1323 = vpack.c.bf16 %v1312, %v1311
    %v1324 = vpack.c.bf16 %v1314, %v1313
    %v1325 = vpack.c.bf16 %v1316, %v1315
    %v1326 = vpack.c.bf16 %v1318, %v1317
    %v1327 = vpack.c.bf16 %v1319, %v1319
    %v1328 = vld [vmem:[%s3 + $0x20] sm:$0xf]
    %v1329 = vld [vmem:[%s3 + $0x24] sm:$0xf]
    %v1330 = vld [vmem:[%s3 + $0x28] sm:$0xf]
    %v1331 = vld [vmem:[%s3 + $0x2c] sm:$0xf]
    %v1336 = vunpack.c.l.b16 %v1328
    %v1337 = vunpack.c.l.b16 %v1329
    %v1338 = vunpack.c.l.b16 %v1330
    %v1339 = vunpack.c.l.b16 %v1331
    %v1340 = vpack.c.b16 %v1337, %v1336
    %v1341 = vpack.c.b16 %v1339, %v1338
    %v1345 = vsel %vm284, %v1320, 0
    %v1348 = vsel %vm284, %v1321, 0
    %v1351 = vsel %vm284, %v1322, 0
    %v1354 = vsel %vm284, %v1323, 0
    %v1357 = vsel %vm284, %v1324, 0
    %v1360 = vsel %vm284, %v1325, 0
    %v1363 = vsel %vm284, %v1326, 0
    %v1366 = vsel %vm284, %v1327, 0
    %1368 = vmatprep.subr.bf16.mxu0 0
    %1369 = vmatpush1.bf16.msra.mxu0 %v1340
    %1370 = vmatprep.subr.bf16.mxu0 0
    %1371 = vmatpush1.bf16.msra.mxu0 %v1341
    %1372 = vmatprep.subr.bf16.mxu0 0
    %1373 = vmatpush1.bf16.msra.mxu0 0
    %1374 = vmatprep.subr.bf16.mxu0 0
    %1375 = vmatpush1.bf16.msra.mxu0 0
    %1376 = vmatprep.subr.bf16.mxu0 0
    %1377 = vmatpush1.bf16.msra.mxu0 0
    %1378 = vmatprep.subr.bf16.mxu0 0
    %1379 = vmatpush1.bf16.msra.mxu0 0
    %1380 = vmatprep.subr.bf16.mxu0 0
    %1381 = vmatpush1.bf16.msra.mxu0 0
    %1382 = vmatprep.subr.bf16.mxu0 0
    %1383 = vmatpush1.bf16.msra.mxu0 0
    %1384 = vmatprep.subr.bf16.mxu0 0
    %1385 = vmatpush1.bf16.msra.mxu0 0
    %1386 = vmatprep.subr.bf16.mxu0 0
    %1387 = vmatpush1.bf16.msra.mxu0 0
    %1388 = vmatprep.subr.bf16.mxu0 0
    %1389 = vmatpush1.bf16.msra.mxu0 0
    %1390 = vmatprep.subr.bf16.mxu0 0
    %1391 = vmatpush1.bf16.msra.mxu0 0
    %1392 = vmatprep.subr.bf16.mxu0 0
    %1393 = vmatpush1.bf16.msra.mxu0 0
    %1394 = vmatprep.subr.bf16.mxu0 0
    %1395 = vmatpush1.bf16.msra.mxu0 0
    %1396 = vmatprep.subr.bf16.mxu0 0
    %1397 = vmatpush1.bf16.msra.mxu0 0
    %1398 = vmatprep.subr.bf16.mxu0 0
    %1399 = vmatpush1.bf16.msra.mxu0 0
    %1400 = vmatprep.mubr.bf16.mxu0 0
    %1401 = vmatmul.mubr.bf16.gmra.mrb[0].mxu0 %v1345
    %v1402 = vpop.f32.mrb[0].mxu0
    %v1403 = vadd.f32 0.0, %v1402
    %v1404 = vpop.f32.mrb[0].mxu0
    %v1405 = vpop.f32.mrb[0].mxu0
    %v1406 = vadd.f32 0.0, %v1405
    %v1407 = vpop.f32.mrb[0].mxu0
    %1408 = vmatprep.mubr.bf16.mxu0 0
    %1409 = vmatmul.mubr.bf16.gmra.mrb[0].mxu0 %v1348
    %v1410 = vpop.f32.mrb[0].mxu0
    %v1411 = vadd.f32 0.0, %v1410
    %v1412 = vpop.f32.mrb[0].mxu0
    %v1413 = vpop.f32.mrb[0].mxu0
    %v1414 = vadd.f32 0.0, %v1413
    %v1415 = vpop.f32.mrb[0].mxu0
    %1416 = vmatprep.mubr.bf16.mxu0 0
    %1417 = vmatmul.mubr.bf16.gmra.mrb[0].mxu0 %v1351
    %v1418 = vpop.f32.mrb[0].mxu0
    %v1419 = vadd.f32 0.0, %v1418
    %v1420 = vpop.f32.mrb[0].mxu0
    %v1421 = vpop.f32.mrb[0].mxu0
    %v1422 = vadd.f32 0.0, %v1421
    %v1423 = vpop.f32.mrb[0].mxu0
    %1424 = vmatprep.mubr.bf16.mxu0 0
    %1425 = vmatmul.mubr.bf16.gmra.mrb[0].mxu0 %v1354
    %v1426 = vpop.f32.mrb[0].mxu0
    %v1427 = vadd.f32 0.0, %v1426
    %v1428 = vpop.f32.mrb[0].mxu0
    %v1429 = vpop.f32.mrb[0].mxu0
    %v1430 = vadd.f32 0.0, %v1429
    %v1431 = vpop.f32.mrb[0].mxu0
    %1432 = vmatprep.mubr.bf16.mxu0 0
    %1433 = vmatmul.mubr.bf16.gmra.mrb[0].mxu0 %v1357
    %v1434 = vpop.f32.mrb[0].mxu0
    %v1435 = vadd.f32 0.0, %v1434
    %v1436 = vpop.f32.mrb[0].mxu0
    %v1437 = vpop.f32.mrb[0].mxu0
    %v1438 = vadd.f32 0.0, %v1437
    %v1439 = vpop.f32.mrb[0].mxu0
    %1440 = vmatprep.mubr.bf16.mxu0 0
    %1441 = vmatmul.mubr.bf16.gmra.mrb[0].mxu0 %v1360
    %v1442 = vpop.f32.mrb[0].mxu0
    %v1443 = vadd.f32 0.0, %v1442
    %v1444 = vpop.f32.mrb[0].mxu0
    %v1445 = vpop.f32.mrb[0].mxu0
    %v1446 = vadd.f32 0.0, %v1445
    %v1447 = vpop.f32.mrb[0].mxu0
    %1448 = vmatprep.mubr.bf16.mxu0 0
    %1449 = vmatmul.mubr.bf16.gmra.mrb[0].mxu0 %v1363
    %v1450 = vpop.f32.mrb[0].mxu0
    %v1451 = vadd.f32 0.0, %v1450
    %v1452 = vpop.f32.mrb[0].mxu0
    %v1453 = vpop.f32.mrb[0].mxu0
    %v1454 = vadd.f32 0.0, %v1453
    %v1455 = vpop.f32.mrb[0].mxu0
    %1456 = vmatprep.mubr.bf16.mxu0 0
    %1457 = vmatmul.mubr.bf16.gmra.mrb[0].mxu0 %v1366
    %v1458 = vpop.f32.mrb[0].mxu0
    %v1459 = vadd.f32 0.0, %v1458
    %v1460 = vpop.f32.mrb[0].mxu0
    %v1461 = vpop.f32.mrb[0].mxu0
    %v1462 = vpop.f32.mrb[0].mxu0
    %1463 = vdwg.mxu0
    %v1464 = vadd.f32 %v1244, %v1403
    %v1465 = vadd.f32 %v1247, %v1406
    %v1466 = vadd.f32 %v1252, %v1411
    %v1467 = vadd.f32 %v1255, %v1414
    %v1468 = vadd.f32 %v1260, %v1419
    %v1469 = vadd.f32 %v1263, %v1422
    %v1470 = vadd.f32 %v1268, %v1427
    %v1471 = vadd.f32 %v1271, %v1430
    %v1472 = vadd.f32 %v1276, %v1435
    %v1473 = vadd.f32 %v1279, %v1438
    %v1474 = vadd.f32 %v1284, %v1443
    %v1475 = vadd.f32 %v1287, %v1446
    %v1476 = vadd.f32 %v1292, %v1451
    %v1477 = vadd.f32 %v1295, %v1454
    %v1478 = vadd.f32 %v1300, %v1459
    %v1479 = vld [vmem:[#allocation3 + $0x3] sm:$0xff]
    %v1480 = vld [vmem:[#allocation3 + $0xb] sm:$0xff]
    %v1481 = vld [vmem:[#allocation3 + $0x13] sm:$0xff]
    %v1482 = vld [vmem:[#allocation3 + $0x1b] sm:$0xff]
    %v1483 = vld [vmem:[#allocation3 + $0x23] sm:$0xff]
    %v1484 = vld [vmem:[#allocation3 + $0x2b] sm:$0xff]
    %v1485 = vld [vmem:[#allocation3 + $0x33] sm:$0xff]
    %v1486 = vld [vmem:[#allocation3 + $0x3b] sm:$0xff]
    %v1487 = vld [vmem:[#allocation3 + $0x43] sm:$0xff]
    %v1488 = vld [vmem:[#allocation3 + $0x4b] sm:$0xff]
    %v1489 = vld [vmem:[#allocation3 + $0x53] sm:$0xff]
    %v1490 = vld [vmem:[#allocation3 + $0x5b] sm:$0xff]
    %v1491 = vld [vmem:[#allocation3 + $0x63] sm:$0xff]
    %v1492 = vld [vmem:[#allocation3 + $0x6b] sm:$0xff]
    %v1493 = vld [vmem:[#allocation3 + $0x73] sm:$0x1f]
    %v1494 = vpack.c.bf16 %v1480, %v1479
    %v1495 = vpack.c.bf16 %v1482, %v1481
    %v1496 = vpack.c.bf16 %v1484, %v1483
    %v1497 = vpack.c.bf16 %v1486, %v1485
    %v1498 = vpack.c.bf16 %v1488, %v1487
    %v1499 = vpack.c.bf16 %v1490, %v1489
    %v1500 = vpack.c.bf16 %v1492, %v1491
    %v1501 = vpack.c.bf16 %v1493, %v1493
    %v1502 = vld [vmem:[%s3 + $0x30] sm:$0xf]
    %v1503 = vld [vmem:[%s3 + $0x34] sm:$0xf]
    %v1504 = vld [vmem:[%s3 + $0x38] sm:$0xf]
    %v1505 = vld [vmem:[%s3 + $0x3c] sm:$0xf]
    %v1510 = vunpack.c.l.b16 %v1502
    %v1511 = vunpack.c.l.b16 %v1503
    %v1512 = vunpack.c.l.b16 %v1504
    %v1513 = vunpack.c.l.b16 %v1505
    %v1514 = vpack.c.b16 %v1511, %v1510
    %v1515 = vpack.c.b16 %v1513, %v1512
    %v1519 = vsel %vm284, %v1494, 0
    %v1522 = vsel %vm284, %v1495, 0
    %v1525 = vsel %vm284, %v1496, 0
    %v1528 = vsel %vm284, %v1497, 0
    %v1531 = vsel %vm284, %v1498, 0
    %v1534 = vsel %vm284, %v1499, 0
    %v1537 = vsel %vm284, %v1500, 0
    %v1540 = vsel %vm284, %v1501, 0
    %1542 = vmatprep.subr.bf16.mxu0 0
    %1543 = vmatpush1.bf16.msra.mxu0 %v1514
    %1544 = vmatprep.subr.bf16.mxu0 0
    %1545 = vmatpush1.bf16.msra.mxu0 %v1515
    %1546 = vmatprep.subr.bf16.mxu0 0
    %1547 = vmatpush1.bf16.msra.mxu0 0
    %1548 = vmatprep.subr.bf16.mxu0 0
    %1549 = vmatpush1.bf16.msra.mxu0 0
    %1550 = vmatprep.subr.bf16.mxu0 0
    %1551 = vmatpush1.bf16.msra.mxu0 0
    %1552 = vmatprep.subr.bf16.mxu0 0
    %1553 = vmatpush1.bf16.msra.mxu0 0
    %1554 = vmatprep.subr.bf16.mxu0 0
    %1555 = vmatpush1.bf16.msra.mxu0 0
    %1556 = vmatprep.subr.bf16.mxu0 0
    %1557 = vmatpush1.bf16.msra.mxu0 0
    %1558 = vmatprep.subr.bf16.mxu0 0
    %1559 = vmatpush1.bf16.msra.mxu0 0
    %1560 = vmatprep.subr.bf16.mxu0 0
    %1561 = vmatpush1.bf16.msra.mxu0 0
    %1562 = vmatprep.subr.bf16.mxu0 0
    %1563 = vmatpush1.bf16.msra.mxu0 0
    %1564 = vmatprep.subr.bf16.mxu0 0
    %1565 = vmatpush1.bf16.msra.mxu0 0
    %1566 = vmatprep.subr.bf16.mxu0 0
    %1567 = vmatpush1.bf16.msra.mxu0 0
    %1568 = vmatprep.subr.bf16.mxu0 0
    %1569 = vmatpush1.bf16.msra.mxu0 0
    %1570 = vmatprep.subr.bf16.mxu0 0
    %1571 = vmatpush1.bf16.msra.mxu0 0
    %1572 = vmatprep.subr.bf16.mxu0 0
    %1573 = vmatpush1.bf16.msra.mxu0 0
    %1574 = vmatprep.mubr.bf16.mxu0 0
    %1575 = vmatmul.mubr.bf16.gmra.mrb[0].mxu0 %v1519
    %v1576 = vpop.f32.mrb[0].mxu0
    %v1577 = vadd.f32 0.0, %v1576
    %v1578 = vpop.f32.mrb[0].mxu0
    %v1579 = vpop.f32.mrb[0].mxu0
    %v1580 = vadd.f32 0.0, %v1579
    %v1581 = vpop.f32.mrb[0].mxu0
    %1582 = vmatprep.mubr.bf16.mxu0 0
    %1583 = vmatmul.mubr.bf16.gmra.mrb[0].mxu0 %v1522
    %v1584 = vpop.f32.mrb[0].mxu0
    %v1585 = vadd.f32 0.0, %v1584
    %v1586 = vpop.f32.mrb[0].mxu0
    %v1587 = vpop.f32.mrb[0].mxu0
    %v1588 = vadd.f32 0.0, %v1587
    %v1589 = vpop.f32.mrb[0].mxu0
    %1590 = vmatprep.mubr.bf16.mxu0 0
    %1591 = vmatmul.mubr.bf16.gmra.mrb[0].mxu0 %v1525
    %v1592 = vpop.f32.mrb[0].mxu0
    %v1593 = vadd.f32 0.0, %v1592
    %v1594 = vpop.f32.mrb[0].mxu0
    %v1595 = vpop.f32.mrb[0].mxu0
    %v1596 = vadd.f32 0.0, %v1595
    %v1597 = vpop.f32.mrb[0].mxu0
    %1598 = vmatprep.mubr.bf16.mxu0 0
    %1599 = vmatmul.mubr.bf16.gmra.mrb[0].mxu0 %v1528
    %v1600 = vpop.f32.mrb[0].mxu0
    %v1601 = vadd.f32 0.0, %v1600
    %v1602 = vpop.f32.mrb[0].mxu0
    %v1603 = vpop.f32.mrb[0].mxu0
    %v1604 = vadd.f32 0.0, %v1603
    %v1605 = vpop.f32.mrb[0].mxu0
    %1606 = vmatprep.mubr.bf16.mxu0 0
    %1607 = vmatmul.mubr.bf16.gmra.mrb[0].mxu0 %v1531
    %v1608 = vpop.f32.mrb[0].mxu0
    %v1609 = vadd.f32 0.0, %v1608
    %v1610 = vpop.f32.mrb[0].mxu0
    %v1611 = vpop.f32.mrb[0].mxu0
    %v1612 = vadd.f32 0.0, %v1611
    %v1613 = vpop.f32.mrb[0].mxu0
    %1614 = vmatprep.mubr.bf16.mxu0 0
    %1615 = vmatmul.mubr.bf16.gmra.mrb[0].mxu0 %v1534
    %v1616 = vpop.f32.mrb[0].mxu0
    %v1617 = vadd.f32 0.0, %v1616
    %v1618 = vpop.f32.mrb[0].mxu0
    %v1619 = vpop.f32.mrb[0].mxu0
    %v1620 = vadd.f32 0.0, %v1619
    %v1621 = vpop.f32.mrb[0].mxu0
    %1622 = vmatprep.mubr.bf16.mxu0 0
    %1623 = vmatmul.mubr.bf16.gmra.mrb[0].mxu0 %v1537
    %v1624 = vpop.f32.mrb[0].mxu0
    %v1625 = vadd.f32 0.0, %v1624
    %v1626 = vpop.f32.mrb[0].mxu0
    %v1627 = vpop.f32.mrb[0].mxu0
    %v1628 = vadd.f32 0.0, %v1627
    %v1629 = vpop.f32.mrb[0].mxu0
    %1630 = vmatprep.mubr.bf16.mxu0 0
    %1631 = vmatmul.mubr.bf16.gmra.mrb[0].mxu0 %v1540
    %v1632 = vpop.f32.mrb[0].mxu0
    %v1633 = vadd.f32 0.0, %v1632
    %v1634 = vpop.f32.mrb[0].mxu0
    %v1635 = vpop.f32.mrb[0].mxu0
    %v1636 = vpop.f32.mrb[0].mxu0
    %1637 = vdwg.mxu0
    %v1638 = vadd.f32 %v1464, %v1577
    %v1639 = vadd.f32 %v1465, %v1580
    %v1640 = vadd.f32 %v1466, %v1585
    %v1641 = vadd.f32 %v1467, %v1588
    %v1642 = vadd.f32 %v1468, %v1593
    %v1643 = vadd.f32 %v1469, %v1596
    %v1644 = vadd.f32 %v1470, %v1601
    %v1645 = vadd.f32 %v1471, %v1604
    %v1646 = vadd.f32 %v1472, %v1609
    %v1647 = vadd.f32 %v1473, %v1612
    %v1648 = vadd.f32 %v1474, %v1617
    %v1649 = vadd.f32 %v1475, %v1620
    %v1650 = vadd.f32 %v1476, %v1625
    %v1651 = vadd.f32 %v1477, %v1628
    %v1652 = vadd.f32 %v1478, %v1633
    %v1653 = vld [vmem:[#allocation3 + $0x4] sm:$0xff]
    %v1654 = vld [vmem:[#allocation3 + $0xc] sm:$0xff]
    %v1655 = vld [vmem:[#allocation3 + $0x14] sm:$0xff]
    %v1656 = vld [vmem:[#allocation3 + $0x1c] sm:$0xff]
    %v1657 = vld [vmem:[#allocation3 + $0x24] sm:$0xff]
    %v1658 = vld [vmem:[#allocation3 + $0x2c] sm:$0xff]
    %v1659 = vld [vmem:[#allocation3 + $0x34] sm:$0xff]
    %v1660 = vld [vmem:[#allocation3 + $0x3c] sm:$0xff]
    %v1661 = vld [vmem:[#allocation3 + $0x44] sm:$0xff]
    %v1662 = vld [vmem:[#allocation3 + $0x4c] sm:$0xff]
    %v1663 = vld [vmem:[#allocation3 + $0x54] sm:$0xff]
    %v1664 = vld [vmem:[#allocation3 + $0x5c] sm:$0xff]
    %v1665 = vld [vmem:[#allocation3 + $0x64] sm:$0xff]
    %v1666 = vld [vmem:[#allocation3 + $0x6c] sm:$0xff]
    %v1667 = vld [vmem:[#allocation3 + $0x74] sm:$0x1f]
    %v1668 = vpack.c.bf16 %v1654, %v1653
    %v1669 = vpack.c.bf16 %v1656, %v1655
    %v1670 = vpack.c.bf16 %v1658, %v1657
    %v1671 = vpack.c.bf16 %v1660, %v1659
    %v1672 = vpack.c.bf16 %v1662, %v1661
    %v1673 = vpack.c.bf16 %v1664, %v1663
    %v1674 = vpack.c.bf16 %v1666, %v1665
    %v1675 = vpack.c.bf16 %v1667, %v1667
    %v1676 = vld [vmem:[%s3 + $0x40] sm:$0xf]
    %v1677 = vld [vmem:[%s3 + $0x44] sm:$0xf]
    %v1678 = vld [vmem:[%s3 + $0x48] sm:$0xf]
    %v1679 = vld [vmem:[%s3 + $0x4c] sm:$0xf]
    %v1684 = vunpack.c.l.b16 %v1676
    %v1685 = vunpack.c.l.b16 %v1677
    %v1686 = vunpack.c.l.b16 %v1678
    %v1687 = vunpack.c.l.b16 %v1679
    %v1688 = vpack.c.b16 %v1685, %v1684
    %v1689 = vpack.c.b16 %v1687, %v1686
    %v1693 = vsel %vm284, %v1668, 0
    %v1696 = vsel %vm284, %v1669, 0
    %v1699 = vsel %vm284, %v1670, 0
    %v1702 = vsel %vm284, %v1671, 0
    %v1705 = vsel %vm284, %v1672, 0
    %v1708 = vsel %vm284, %v1673, 0
    %v1711 = vsel %vm284, %v1674, 0
    %v1714 = vsel %vm284, %v1675, 0
    %1716 = vmatprep.subr.bf16.mxu0 0
    %1717 = vmatpush1.bf16.msra.mxu0 %v1688
    %1718 = vmatprep.subr.bf16.mxu0 0
    %1719 = vmatpush1.bf16.msra.mxu0 %v1689
    %1720 = vmatprep.subr.bf16.mxu0 0
    %1721 = vmatpush1.bf16.msra.mxu0 0
    %1722 = vmatprep.subr.bf16.mxu0 0
    %1723 = vmatpush1.bf16.msra.mxu0 0
    %1724 = vmatprep.subr.bf16.mxu0 0
    %1725 = vmatpush1.bf16.msra.mxu0 0
    %1726 = vmatprep.subr.bf16.mxu0 0
    %1727 = vmatpush1.bf16.msra.mxu0 0
    %1728 = vmatprep.subr.bf16.mxu0 0
    %1729 = vmatpush1.bf16.msra.mxu0 0
    %1730 = vmatprep.subr.bf16.mxu0 0
    %1731 = vmatpush1.bf16.msra.mxu0 0
    %1732 = vmatprep.subr.bf16.mxu0 0
    %1733 = vmatpush1.bf16.msra.mxu0 0
    %1734 = vmatprep.subr.bf16.mxu0 0
    %1735 = vmatpush1.bf16.msra.mxu0 0
    %1736 = vmatprep.subr.bf16.mxu0 0
    %1737 = vmatpush1.bf16.msra.mxu0 0
    %1738 = vmatprep.subr.bf16.mxu0 0
    %1739 = vmatpush1.bf16.msra.mxu0 0
    %1740 = vmatprep.subr.bf16.mxu0 0
    %1741 = vmatpush1.bf16.msra.mxu0 0
    %1742 = vmatprep.subr.bf16.mxu0 0
    %1743 = vmatpush1.bf16.msra.mxu0 0
    %1744 = vmatprep.subr.bf16.mxu0 0
    %1745 = vmatpush1.bf16.msra.mxu0 0
    %1746 = vmatprep.subr.bf16.mxu0 0
    %1747 = vmatpush1.bf16.msra.mxu0 0
    %1748 = vmatprep.mubr.bf16.mxu0 0
    %1749 = vmatmul.mubr.bf16.gmra.mrb[0].mxu0 %v1693
    %v1750 = vpop.f32.mrb[0].mxu0
    %v1751 = vadd.f32 0.0, %v1750
    %v1752 = vpop.f32.mrb[0].mxu0
    %v1753 = vpop.f32.mrb[0].mxu0
    %v1754 = vadd.f32 0.0, %v1753
    %v1755 = vpop.f32.mrb[0].mxu0
    %1756 = vmatprep.mubr.bf16.mxu0 0
    %1757 = vmatmul.mubr.bf16.gmra.mrb[0].mxu0 %v1696
    %v1758 = vpop.f32.mrb[0].mxu0
    %v1759 = vadd.f32 0.0, %v1758
    %v1760 = vpop.f32.mrb[0].mxu0
    %v1761 = vpop.f32.mrb[0].mxu0
    %v1762 = vadd.f32 0.0, %v1761
    %v1763 = vpop.f32.mrb[0].mxu0
    %1764 = vmatprep.mubr.bf16.mxu0 0
    %1765 = vmatmul.mubr.bf16.gmra.mrb[0].mxu0 %v1699
    %v1766 = vpop.f32.mrb[0].mxu0
    %v1767 = vadd.f32 0.0, %v1766
    %v1768 = vpop.f32.mrb[0].mxu0
    %v1769 = vpop.f32.mrb[0].mxu0
    %v1770 = vadd.f32 0.0, %v1769
    %v1771 = vpop.f32.mrb[0].mxu0
    %1772 = vmatprep.mubr.bf16.mxu0 0
    %1773 = vmatmul.mubr.bf16.gmra.mrb[0].mxu0 %v1702
    %v1774 = vpop.f32.mrb[0].mxu0
    %v1775 = vadd.f32 0.0, %v1774
    %v1776 = vpop.f32.mrb[0].mxu0
    %v1777 = vpop.f32.mrb[0].mxu0
    %v1778 = vadd.f32 0.0, %v1777
    %v1779 = vpop.f32.mrb[0].mxu0
    %1780 = vmatprep.mubr.bf16.mxu0 0
    %1781 = vmatmul.mubr.bf16.gmra.mrb[0].mxu0 %v1705
    %v1782 = vpop.f32.mrb[0].mxu0
    %v1783 = vadd.f32 0.0, %v1782
    %v1784 = vpop.f32.mrb[0].mxu0
    %v1785 = vpop.f32.mrb[0].mxu0
    %v1786 = vadd.f32 0.0, %v1785
    %v1787 = vpop.f32.mrb[0].mxu0
    %1788 = vmatprep.mubr.bf16.mxu0 0
    %1789 = vmatmul.mubr.bf16.gmra.mrb[0].mxu0 %v1708
    %v1790 = vpop.f32.mrb[0].mxu0
    %v1791 = vadd.f32 0.0, %v1790
    %v1792 = vpop.f32.mrb[0].mxu0
    %v1793 = vpop.f32.mrb[0].mxu0
    %v1794 = vadd.f32 0.0, %v1793
    %v1795 = vpop.f32.mrb[0].mxu0
    %1796 = vmatprep.mubr.bf16.mxu0 0
    %1797 = vmatmul.mubr.bf16.gmra.mrb[0].mxu0 %v1711
    %v1798 = vpop.f32.mrb[0].mxu0
    %v1799 = vadd.f32 0.0, %v1798
    %v1800 = vpop.f32.mrb[0].mxu0
    %v1801 = vpop.f32.mrb[0].mxu0
    %v1802 = vadd.f32 0.0, %v1801
    %v1803 = vpop.f32.mrb[0].mxu0
    %1804 = vmatprep.mubr.bf16.mxu0 0
    %1805 = vmatmul.mubr.bf16.gmra.mrb[0].mxu0 %v1714
    %v1806 = vpop.f32.mrb[0].mxu0
    %v1807 = vadd.f32 0.0, %v1806
    %v1808 = vpop.f32.mrb[0].mxu0
    %v1809 = vpop.f32.mrb[0].mxu0
    %v1810 = vpop.f32.mrb[0].mxu0
    %1811 = vdwg.mxu0
    %v1812 = vadd.f32 %v1638, %v1751
    %v1813 = vadd.f32 %v1639, %v1754
    %v1814 = vadd.f32 %v1640, %v1759
    %v1815 = vadd.f32 %v1641, %v1762
    %v1816 = vadd.f32 %v1642, %v1767
    %v1817 = vadd.f32 %v1643, %v1770
    %v1818 = vadd.f32 %v1644, %v1775
    %v1819 = vadd.f32 %v1645, %v1778
    %v1820 = vadd.f32 %v1646, %v1783
    %v1821 = vadd.f32 %v1647, %v1786
    %v1822 = vadd.f32 %v1648, %v1791
    %v1823 = vadd.f32 %v1649, %v1794
    %v1824 = vadd.f32 %v1650, %v1799
    %v1825 = vadd.f32 %v1651, %v1802
    %v1826 = vadd.f32 %v1652, %v1807
    %v1827 = vld [vmem:[#allocation3 + $0x5] sm:$0xff]
    %v1828 = vld [vmem:[#allocation3 + $0xd] sm:$0xff]
    %v1829 = vld [vmem:[#allocation3 + $0x15] sm:$0xff]
    %v1830 = vld [vmem:[#allocation3 + $0x1d] sm:$0xff]
    %v1831 = vld [vmem:[#allocation3 + $0x25] sm:$0xff]
    %v1832 = vld [vmem:[#allocation3 + $0x2d] sm:$0xff]
    %v1833 = vld [vmem:[#allocation3 + $0x35] sm:$0xff]
    %v1834 = vld [vmem:[#allocation3 + $0x3d] sm:$0xff]
    %v1835 = vld [vmem:[#allocation3 + $0x45] sm:$0xff]
    %v1836 = vld [vmem:[#allocation3 + $0x4d] sm:$0xff]
    %v1837 = vld [vmem:[#allocation3 + $0x55] sm:$0xff]
    %v1838 = vld [vmem:[#allocation3 + $0x5d] sm:$0xff]
    %v1839 = vld [vmem:[#allocation3 + $0x65] sm:$0xff]
    %v1840 = vld [vmem:[#allocation3 + $0x6d] sm:$0xff]
    %v1841 = vld [vmem:[#allocation3 + $0x75] sm:$0x1f]
    %v1842 = vpack.c.bf16 %v1828, %v1827
    %v1843 = vpack.c.bf16 %v1830, %v1829
    %v1844 = vpack.c.bf16 %v1832, %v1831
    %v1845 = vpack.c.bf16 %v1834, %v1833
    %v1846 = vpack.c.bf16 %v1836, %v1835
    %v1847 = vpack.c.bf16 %v1838, %v1837
    %v1848 = vpack.c.bf16 %v1840, %v1839
    %v1849 = vpack.c.bf16 %v1841, %v1841
    %v1850 = vld [vmem:[%s3 + $0x50] sm:$0xf]
    %v1851 = vld [vmem:[%s3 + $0x54] sm:$0xf]
    %v1852 = vld [vmem:[%s3 + $0x58] sm:$0xf]
    %v1853 = vld [vmem:[%s3 + $0x5c] sm:$0xf]
    %v1858 = vunpack.c.l.b16 %v1850
    %v1859 = vunpack.c.l.b16 %v1851
    %v1860 = vunpack.c.l.b16 %v1852
    %v1861 = vunpack.c.l.b16 %v1853
    %v1862 = vpack.c.b16 %v1859, %v1858
    %v1863 = vpack.c.b16 %v1861, %v1860
    %v1867 = vsel %vm284, %v1842, 0
    %v1870 = vsel %vm284, %v1843, 0
    %v1873 = vsel %vm284, %v1844, 0
    %v1876 = vsel %vm284, %v1845, 0
    %v1879 = vsel %vm284, %v1846, 0
    %v1882 = vsel %vm284, %v1847, 0
    %v1885 = vsel %vm284, %v1848, 0
    %v1888 = vsel %vm284, %v1849, 0
    %1890 = vmatprep.subr.bf16.mxu0 0
    %1891 = vmatpush1.bf16.msra.mxu0 %v1862
    %1892 = vmatprep.subr.bf16.mxu0 0
    %1893 = vmatpush1.bf16.msra.mxu0 %v1863
    %1894 = vmatprep.subr.bf16.mxu0 0
    %1895 = vmatpush1.bf16.msra.mxu0 0
    %1896 = vmatprep.subr.bf16.mxu0 0
    %1897 = vmatpush1.bf16.msra.mxu0 0
    %1898 = vmatprep.subr.bf16.mxu0 0
    %1899 = vmatpush1.bf16.msra.mxu0 0
    %1900 = vmatprep.subr.bf16.mxu0 0
    %1901 = vmatpush1.bf16.msra.mxu0 0
    %1902 = vmatprep.subr.bf16.mxu0 0
    %1903 = vmatpush1.bf16.msra.mxu0 0
    %1904 = vmatprep.subr.bf16.mxu0 0
    %1905 = vmatpush1.bf16.msra.mxu0 0
    %1906 = vmatprep.subr.bf16.mxu0 0
    %1907 = vmatpush1.bf16.msra.mxu0 0
    %1908 = vmatprep.subr.bf16.mxu0 0
    %1909 = vmatpush1.bf16.msra.mxu0 0
    %1910 = vmatprep.subr.bf16.mxu0 0
    %1911 = vmatpush1.bf16.msra.mxu0 0
    %1912 = vmatprep.subr.bf16.mxu0 0
    %1913 = vmatpush1.bf16.msra.mxu0 0
    %1914 = vmatprep.subr.bf16.mxu0 0
    %1915 = vmatpush1.bf16.msra.mxu0 0
    %1916 = vmatprep.subr.bf16.mxu0 0
    %1917 = vmatpush1.bf16.msra.mxu0 0
    %1918 = vmatprep.subr.bf16.mxu0 0
    %1919 = vmatpush1.bf16.msra.mxu0 0
    %1920 = vmatprep.subr.bf16.mxu0 0
    %1921 = vmatpush1.bf16.msra.mxu0 0
    %1922 = vmatprep.mubr.bf16.mxu0 0
    %1923 = vmatmul.mubr.bf16.gmra.mrb[0].mxu0 %v1867
    %v1924 = vpop.f32.mrb[0].mxu0
    %v1925 = vadd.f32 0.0, %v1924
    %v1926 = vpop.f32.mrb[0].mxu0
    %v1927 = vpop.f32.mrb[0].mxu0
    %v1928 = vadd.f32 0.0, %v1927
    %v1929 = vpop.f32.mrb[0].mxu0
    %1930 = vmatprep.mubr.bf16.mxu0 0
    %1931 = vmatmul.mubr.bf16.gmra.mrb[0].mxu0 %v1870
    %v1932 = vpop.f32.mrb[0].mxu0
    %v1933 = vadd.f32 0.0, %v1932
    %v1934 = vpop.f32.mrb[0].mxu0
    %v1935 = vpop.f32.mrb[0].mxu0
    %v1936 = vadd.f32 0.0, %v1935
    %v1937 = vpop.f32.mrb[0].mxu0
    %1938 = vmatprep.mubr.bf16.mxu0 0
    %1939 = vmatmul.mubr.bf16.gmra.mrb[0].mxu0 %v1873
    %v1940 = vpop.f32.mrb[0].mxu0
    %v1941 = vadd.f32 0.0, %v1940
    %v1942 = vpop.f32.mrb[0].mxu0
    %v1943 = vpop.f32.mrb[0].mxu0
    %v1944 = vadd.f32 0.0, %v1943
    %v1945 = vpop.f32.mrb[0].mxu0
    %1946 = vmatprep.mubr.bf16.mxu0 0
    %1947 = vmatmul.mubr.bf16.gmra.mrb[0].mxu0 %v1876
    %v1948 = vpop.f32.mrb[0].mxu0
    %v1949 = vadd.f32 0.0, %v1948
    %v1950 = vpop.f32.mrb[0].mxu0
    %v1951 = vpop.f32.mrb[0].mxu0
    %v1952 = vadd.f32 0.0, %v1951
    %v1953 = vpop.f32.mrb[0].mxu0
    %1954 = vmatprep.mubr.bf16.mxu0 0
    %1955 = vmatmul.mubr.bf16.gmra.mrb[0].mxu0 %v1879
    %v1956 = vpop.f32.mrb[0].mxu0
    %v1957 = vadd.f32 0.0, %v1956
    %v1958 = vpop.f32.mrb[0].mxu0
    %v1959 = vpop.f32.mrb[0].mxu0
    %v1960 = vadd.f32 0.0, %v1959
    %v1961 = vpop.f32.mrb[0].mxu0
    %1962 = vmatprep.mubr.bf16.mxu0 0
    %1963 = vmatmul.mubr.bf16.gmra.mrb[0].mxu0 %v1882
    %v1964 = vpop.f32.mrb[0].mxu0
    %v1965 = vadd.f32 0.0, %v1964
    %v1966 = vpop.f32.mrb[0].mxu0
    %v1967 = vpop.f32.mrb[0].mxu0
    %v1968 = vadd.f32 0.0, %v1967
    %v1969 = vpop.f32.mrb[0].mxu0
    %1970 = vmatprep.mubr.bf16.mxu0 0
    %1971 = vmatmul.mubr.bf16.gmra.mrb[0].mxu0 %v1885
    %v1972 = vpop.f32.mrb[0].mxu0
    %v1973 = vadd.f32 0.0, %v1972
    %v1974 = vpop.f32.mrb[0].mxu0
    %v1975 = vpop.f32.mrb[0].mxu0
    %v1976 = vadd.f32 0.0, %v1975
    %v1977 = vpop.f32.mrb[0].mxu0
    %1978 = vmatprep.mubr.bf16.mxu0 0
    %1979 = vmatmul.mubr.bf16.gmra.mrb[0].mxu0 %v1888
    %v1980 = vpop.f32.mrb[0].mxu0
    %v1981 = vadd.f32 0.0, %v1980
    %v1982 = vpop.f32.mrb[0].mxu0
    %v1983 = vpop.f32.mrb[0].mxu0
    %v1984 = vpop.f32.mrb[0].mxu0
    %1985 = vdwg.mxu0
    %v1986 = vadd.f32 %v1812, %v1925
    %v1987 = vadd.f32 %v1813, %v1928
    %v1988 = vadd.f32 %v1814, %v1933
    %v1989 = vadd.f32 %v1815, %v1936
    %v1990 = vadd.f32 %v1816, %v1941
    %v1991 = vadd.f32 %v1817, %v1944
    %v1992 = vadd.f32 %v1818, %v1949
    %v1993 = vadd.f32 %v1819, %v1952
    %v1994 = vadd.f32 %v1820, %v1957
    %v1995 = vadd.f32 %v1821, %v1960
    %v1996 = vadd.f32 %v1822, %v1965
    %v1997 = vadd.f32 %v1823, %v1968
    %v1998 = vadd.f32 %v1824, %v1973
    %v1999 = vadd.f32 %v1825, %v1976
    %v2000 = vadd.f32 %v1826, %v1981
    %v2001 = vld [vmem:[#allocation3 + $0x6] sm:$0xff]
    %v2002 = vld [vmem:[#allocation3 + $0xe] sm:$0xff]
    %v2003 = vld [vmem:[#allocation3 + $0x16] sm:$0xff]
    %v2004 = vld [vmem:[#allocation3 + $0x1e] sm:$0xff]
    %v2005 = vld [vmem:[#allocation3 + $0x26] sm:$0xff]
    %v2006 = vld [vmem:[#allocation3 + $0x2e] sm:$0xff]
    %v2007 = vld [vmem:[#allocation3 + $0x36] sm:$0xff]
    %v2008 = vld [vmem:[#allocation3 + $0x3e] sm:$0xff]
    %v2009 = vld [vmem:[#allocation3 + $0x46] sm:$0xff]
    %v2010 = vld [vmem:[#allocation3 + $0x4e] sm:$0xff]
    %v2011 = vld [vmem:[#allocation3 + $0x56] sm:$0xff]
    %v2012 = vld [vmem:[#allocation3 + $0x5e] sm:$0xff]
    %v2013 = vld [vmem:[#allocation3 + $0x66] sm:$0xff]
    %v2014 = vld [vmem:[#allocation3 + $0x6e] sm:$0xff]
    %v2015 = vld [vmem:[#allocation3 + $0x76] sm:$0x1f]
    %v2016 = vpack.c.bf16 %v2002, %v2001
    %v2017 = vpack.c.bf16 %v2004, %v2003
    %v2018 = vpack.c.bf16 %v2006, %v2005
    %v2019 = vpack.c.bf16 %v2008, %v2007
    %v2020 = vpack.c.bf16 %v2010, %v2009
    %v2021 = vpack.c.bf16 %v2012, %v2011
    %v2022 = vpack.c.bf16 %v2014, %v2013
    %v2023 = vpack.c.bf16 %v2015, %v2015
    %v2024 = vld [vmem:[%s3 + $0x60] sm:$0xf]
    %v2025 = vld [vmem:[%s3 + $0x64] sm:$0xf]
    %v2026 = vld [vmem:[%s3 + $0x68] sm:$0xf]
    %v2027 = vld [vmem:[%s3 + $0x6c] sm:$0xf]
    %v2032 = vunpack.c.l.b16 %v2024
    %v2033 = vunpack.c.l.b16 %v2025
    %v2034 = vunpack.c.l.b16 %v2026
    %v2035 = vunpack.c.l.b16 %v2027
    %v2036 = vpack.c.b16 %v2033, %v2032
    %v2037 = vpack.c.b16 %v2035, %v2034
    %v2041 = vsel %vm284, %v2016, 0
    %v2044 = vsel %vm284, %v2017, 0
    %v2047 = vsel %vm284, %v2018, 0
    %v2050 = vsel %vm284, %v2019, 0
    %v2053 = vsel %vm284, %v2020, 0
    %v2056 = vsel %vm284, %v2021, 0
    %v2059 = vsel %vm284, %v2022, 0
    %v2062 = vsel %vm284, %v2023, 0
    %2064 = vmatprep.subr.bf16.mxu0 0
    %2065 = vmatpush1.bf16.msra.mxu0 %v2036
    %2066 = vmatprep.subr.bf16.mxu0 0
    %2067 = vmatpush1.bf16.msra.mxu0 %v2037
    %2068 = vmatprep.subr.bf16.mxu0 0
    %2069 = vmatpush1.bf16.msra.mxu0 0
    %2070 = vmatprep.subr.bf16.mxu0 0
    %2071 = vmatpush1.bf16.msra.mxu0 0
    %2072 = vmatprep.subr.bf16.mxu0 0
    %2073 = vmatpush1.bf16.msra.mxu0 0
    %2074 = vmatprep.subr.bf16.mxu0 0
    %2075 = vmatpush1.bf16.msra.mxu0 0
    %2076 = vmatprep.subr.bf16.mxu0 0
    %2077 = vmatpush1.bf16.msra.mxu0 0
    %2078 = vmatprep.subr.bf16.mxu0 0
    %2079 = vmatpush1.bf16.msra.mxu0 0
    %2080 = vmatprep.subr.bf16.mxu0 0
    %2081 = vmatpush1.bf16.msra.mxu0 0
    %2082 = vmatprep.subr.bf16.mxu0 0
    %2083 = vmatpush1.bf16.msra.mxu0 0
    %2084 = vmatprep.subr.bf16.mxu0 0
    %2085 = vmatpush1.bf16.msra.mxu0 0
    %2086 = vmatprep.subr.bf16.mxu0 0
    %2087 = vmatpush1.bf16.msra.mxu0 0
    %2088 = vmatprep.subr.bf16.mxu0 0
    %2089 = vmatpush1.bf16.msra.mxu0 0
    %2090 = vmatprep.subr.bf16.mxu0 0
    %2091 = vmatpush1.bf16.msra.mxu0 0
    %2092 = vmatprep.subr.bf16.mxu0 0
    %2093 = vmatpush1.bf16.msra.mxu0 0
    %2094 = vmatprep.subr.bf16.mxu0 0
    %2095 = vmatpush1.bf16.msra.mxu0 0
    %2096 = vmatprep.mubr.bf16.mxu0 0
    %2097 = vmatmul.mubr.bf16.gmra.mrb[0].mxu0 %v2041
    %v2098 = vpop.f32.mrb[0].mxu0
    %v2099 = vadd.f32 0.0, %v2098
    %v2100 = vpop.f32.mrb[0].mxu0
    %v2101 = vpop.f32.mrb[0].mxu0
    %v2102 = vadd.f32 0.0, %v2101
    %v2103 = vpop.f32.mrb[0].mxu0
    %2104 = vmatprep.mubr.bf16.mxu0 0
    %2105 = vmatmul.mubr.bf16.gmra.mrb[0].mxu0 %v2044
    %v2106 = vpop.f32.mrb[0].mxu0
    %v2107 = vadd.f32 0.0, %v2106
    %v2108 = vpop.f32.mrb[0].mxu0
    %v2109 = vpop.f32.mrb[0].mxu0
    %v2110 = vadd.f32 0.0, %v2109
    %v2111 = vpop.f32.mrb[0].mxu0
    %2112 = vmatprep.mubr.bf16.mxu0 0
    %2113 = vmatmul.mubr.bf16.gmra.mrb[0].mxu0 %v2047
    %v2114 = vpop.f32.mrb[0].mxu0
    %v2115 = vadd.f32 0.0, %v2114
    %v2116 = vpop.f32.mrb[0].mxu0
    %v2117 = vpop.f32.mrb[0].mxu0
    %v2118 = vadd.f32 0.0, %v2117
    %v2119 = vpop.f32.mrb[0].mxu0
    %2120 = vmatprep.mubr.bf16.mxu0 0
    %2121 = vmatmul.mubr.bf16.gmra.mrb[0].mxu0 %v2050
    %v2122 = vpop.f32.mrb[0].mxu0
    %v2123 = vadd.f32 0.0, %v2122
    %v2124 = vpop.f32.mrb[0].mxu0
    %v2125 = vpop.f32.mrb[0].mxu0
    %v2126 = vadd.f32 0.0, %v2125
    %v2127 = vpop.f32.mrb[0].mxu0
    %2128 = vmatprep.mubr.bf16.mxu0 0
    %2129 = vmatmul.mubr.bf16.gmra.mrb[0].mxu0 %v2053
    %v2130 = vpop.f32.mrb[0].mxu0
    %v2131 = vadd.f32 0.0, %v2130
    %v2132 = vpop.f32.mrb[0].mxu0
    %v2133 = vpop.f32.mrb[0].mxu0
    %v2134 = vadd.f32 0.0, %v2133
    %v2135 = vpop.f32.mrb[0].mxu0
    %2136 = vmatprep.mubr.bf16.mxu0 0
    %2137 = vmatmul.mubr.bf16.gmra.mrb[0].mxu0 %v2056
    %v2138 = vpop.f32.mrb[0].mxu0
    %v2139 = vadd.f32 0.0, %v2138
    %v2140 = vpop.f32.mrb[0].mxu0
    %v2141 = vpop.f32.mrb[0].mxu0
    %v2142 = vadd.f32 0.0, %v2141
    %v2143 = vpop.f32.mrb[0].mxu0
    %2144 = vmatprep.mubr.bf16.mxu0 0
    %2145 = vmatmul.mubr.bf16.gmra.mrb[0].mxu0 %v2059
    %v2146 = vpop.f32.mrb[0].mxu0
    %v2147 = vadd.f32 0.0, %v2146
    %v2148 = vpop.f32.mrb[0].mxu0
    %v2149 = vpop.f32.mrb[0].mxu0
    %v2150 = vadd.f32 0.0, %v2149
    %v2151 = vpop.f32.mrb[0].mxu0
    %2152 = vmatprep.mubr.bf16.mxu0 0
    %2153 = vmatmul.mubr.bf16.gmra.mrb[0].mxu0 %v2062
    %v2154 = vpop.f32.mrb[0].mxu0
    %v2155 = vadd.f32 0.0, %v2154
    %v2156 = vpop.f32.mrb[0].mxu0
    %v2157 = vpop.f32.mrb[0].mxu0
    %v2158 = vpop.f32.mrb[0].mxu0
    %2159 = vdwg.mxu0
    %v2160 = vadd.f32 %v1986, %v2099
    %v2161 = vadd.f32 %v1987, %v2102
    %v2162 = vadd.f32 %v1988, %v2107
    %v2163 = vadd.f32 %v1989, %v2110
    %v2164 = vadd.f32 %v1990, %v2115
    %v2165 = vadd.f32 %v1991, %v2118
    %v2166 = vadd.f32 %v1992, %v2123
    %v2167 = vadd.f32 %v1993, %v2126
    %v2168 = vadd.f32 %v1994, %v2131
    %v2169 = vadd.f32 %v1995, %v2134
    %v2170 = vadd.f32 %v1996, %v2139
    %v2171 = vadd.f32 %v1997, %v2142
    %v2172 = vadd.f32 %v1998, %v2147
    %v2173 = vadd.f32 %v1999, %v2150
    %v2174 = vadd.f32 %v2000, %v2155
    %v2175 = vld [vmem:[#allocation3 + $0x7] sm:$0xff]
    %v2176 = vld [vmem:[#allocation3 + $0xf] sm:$0xff]
    %v2177 = vld [vmem:[#allocation3 + $0x17] sm:$0xff]
    %v2178 = vld [vmem:[#allocation3 + $0x1f] sm:$0xff]
    %v2179 = vld [vmem:[#allocation3 + $0x27] sm:$0xff]
    %v2180 = vld [vmem:[#allocation3 + $0x2f] sm:$0xff]
    %v2181 = vld [vmem:[#allocation3 + $0x37] sm:$0xff]
    %v2182 = vld [vmem:[#allocation3 + $0x3f] sm:$0xff]
    %v2183 = vld [vmem:[#allocation3 + $0x47] sm:$0xff]
    %v2184 = vld [vmem:[#allocation3 + $0x4f] sm:$0xff]
    %v2185 = vld [vmem:[#allocation3 + $0x57] sm:$0xff]
    %v2186 = vld [vmem:[#allocation3 + $0x5f] sm:$0xff]
    %v2187 = vld [vmem:[#allocation3 + $0x67] sm:$0xff]
    %v2188 = vld [vmem:[#allocation3 + $0x6f] sm:$0xff]
    %v2189 = vld [vmem:[#allocation3 + $0x77] sm:$0x1f]
    %v2190 = vpack.c.bf16 %v2176, %v2175
    %v2191 = vpack.c.bf16 %v2178, %v2177
    %v2192 = vpack.c.bf16 %v2180, %v2179
    %v2193 = vpack.c.bf16 %v2182, %v2181
    %v2194 = vpack.c.bf16 %v2184, %v2183
    %v2195 = vpack.c.bf16 %v2186, %v2185
    %v2196 = vpack.c.bf16 %v2188, %v2187
    %v2197 = vpack.c.bf16 %v2189, %v2189
    %v2198 = vld [vmem:[%s3 + $0x70] sm:$0xf]
    %v2199 = vld [vmem:[%s3 + $0x74] sm:$0xf]
    %v2200 = vld [vmem:[%s3 + $0x78] sm:$0xf]
    %v2201 = vld [vmem:[%s3 + $0x7c] sm:$0xf]
    %v2206 = vunpack.c.l.b16 %v2198
    %v2207 = vunpack.c.l.b16 %v2199
    %v2208 = vunpack.c.l.b16 %v2200
    %v2209 = vunpack.c.l.b16 %v2201
    %v2210 = vpack.c.b16 %v2207, %v2206
    %v2211 = vpack.c.b16 %v2209, %v2208
    %v2215 = vsel %vm284, %v2190, 0
    %v2218 = vsel %vm284, %v2191, 0
    %v2221 = vsel %vm284, %v2192, 0
    %v2224 = vsel %vm284, %v2193, 0
    %v2227 = vsel %vm284, %v2194, 0
    %v2230 = vsel %vm284, %v2195, 0
    %v2233 = vsel %vm284, %v2196, 0
    %v2236 = vsel %vm284, %v2197, 0
    %2238 = vmatprep.subr.bf16.mxu0 0
    %2239 = vmatpush1.bf16.msra.mxu0 %v2210
    %2240 = vmatprep.subr.bf16.mxu0 0
    %2241 = vmatpush1.bf16.msra.mxu0 %v2211
    %2242 = vmatprep.subr.bf16.mxu0 0
    %2243 = vmatpush1.bf16.msra.mxu0 0
    %2244 = vmatprep.subr.bf16.mxu0 0
    %2245 = vmatpush1.bf16.msra.mxu0 0
    %2246 = vmatprep.subr.bf16.mxu0 0
    %2247 = vmatpush1.bf16.msra.mxu0 0
    %2248 = vmatprep.subr.bf16.mxu0 0
    %2249 = vmatpush1.bf16.msra.mxu0 0
    %2250 = vmatprep.subr.bf16.mxu0 0
    %2251 = vmatpush1.bf16.msra.mxu0 0
    %2252 = vmatprep.subr.bf16.mxu0 0
    %2253 = vmatpush1.bf16.msra.mxu0 0
    %2254 = vmatprep.subr.bf16.mxu0 0
    %2255 = vmatpush1.bf16.msra.mxu0 0
    %2256 = vmatprep.subr.bf16.mxu0 0
    %2257 = vmatpush1.bf16.msra.mxu0 0
    %2258 = vmatprep.subr.bf16.mxu0 0
    %2259 = vmatpush1.bf16.msra.mxu0 0
    %2260 = vmatprep.subr.bf16.mxu0 0
    %2261 = vmatpush1.bf16.msra.mxu0 0
    %2262 = vmatprep.subr.bf16.mxu0 0
    %2263 = vmatpush1.bf16.msra.mxu0 0
    %2264 = vmatprep.subr.bf16.mxu0 0
    %2265 = vmatpush1.bf16.msra.mxu0 0
    %2266 = vmatprep.subr.bf16.mxu0 0
    %2267 = vmatpush1.bf16.msra.mxu0 0
    %2268 = vmatprep.subr.bf16.mxu0 0
    %2269 = vmatpush1.bf16.msra.mxu0 0
    %2270 = vmatprep.mubr.bf16.mxu0 0
    %2271 = vmatmul.mubr.bf16.gmra.mrb[0].mxu0 %v2215
    %v2272 = vpop.f32.mrb[0].mxu0
    %v2273 = vadd.f32 0.0, %v2272
    %v2274 = vpop.f32.mrb[0].mxu0
    %v2275 = vpop.f32.mrb[0].mxu0
    %v2276 = vadd.f32 0.0, %v2275
    %v2277 = vpop.f32.mrb[0].mxu0
    %2278 = vmatprep.mubr.bf16.mxu0 0
    %2279 = vmatmul.mubr.bf16.gmra.mrb[0].mxu0 %v2218
    %v2280 = vpop.f32.mrb[0].mxu0
    %v2281 = vadd.f32 0.0, %v2280
    %v2282 = vpop.f32.mrb[0].mxu0
    %v2283 = vpop.f32.mrb[0].mxu0
    %v2284 = vadd.f32 0.0, %v2283
    %v2285 = vpop.f32.mrb[0].mxu0
    %2286 = vmatprep.mubr.bf16.mxu0 0
    %2287 = vmatmul.mubr.bf16.gmra.mrb[0].mxu0 %v2221
    %v2288 = vpop.f32.mrb[0].mxu0
    %v2289 = vadd.f32 0.0, %v2288
    %v2290 = vpop.f32.mrb[0].mxu0
    %v2291 = vpop.f32.mrb[0].mxu0
    %v2292 = vadd.f32 0.0, %v2291
    %v2293 = vpop.f32.mrb[0].mxu0
    %2294 = vmatprep.mubr.bf16.mxu0 0
    %2295 = vmatmul.mubr.bf16.gmra.mrb[0].mxu0 %v2224
    %v2296 = vpop.f32.mrb[0].mxu0
    %v2297 = vadd.f32 0.0, %v2296
    %v2298 = vpop.f32.mrb[0].mxu0
    %v2299 = vpop.f32.mrb[0].mxu0
    %v2300 = vadd.f32 0.0, %v2299
    %v2301 = vpop.f32.mrb[0].mxu0
    %2302 = vmatprep.mubr.bf16.mxu0 0
    %2303 = vmatmul.mubr.bf16.gmra.mrb[0].mxu0 %v2227
    %v2304 = vpop.f32.mrb[0].mxu0
    %v2305 = vadd.f32 0.0, %v2304
    %v2306 = vpop.f32.mrb[0].mxu0
    %v2307 = vpop.f32.mrb[0].mxu0
    %v2308 = vadd.f32 0.0, %v2307
    %v2309 = vpop.f32.mrb[0].mxu0
    %2310 = vmatprep.mubr.bf16.mxu0 0
    %2311 = vmatmul.mubr.bf16.gmra.mrb[0].mxu0 %v2230
    %v2312 = vpop.f32.mrb[0].mxu0
    %v2313 = vadd.f32 0.0, %v2312
    %v2314 = vpop.f32.mrb[0].mxu0
    %v2315 = vpop.f32.mrb[0].mxu0
    %v2316 = vadd.f32 0.0, %v2315
    %v2317 = vpop.f32.mrb[0].mxu0
    %2318 = vmatprep.mubr.bf16.mxu0 0
    %2319 = vmatmul.mubr.bf16.gmra.mrb[0].mxu0 %v2233
    %v2320 = vpop.f32.mrb[0].mxu0
    %v2321 = vadd.f32 0.0, %v2320
    %v2322 = vpop.f32.mrb[0].mxu0
    %v2323 = vpop.f32.mrb[0].mxu0
    %v2324 = vadd.f32 0.0, %v2323
    %v2325 = vpop.f32.mrb[0].mxu0
    %2326 = vmatprep.mubr.bf16.mxu0 0
    %2327 = vmatmul.mubr.bf16.gmra.mrb[0].mxu0 %v2236
    %v2328 = vpop.f32.mrb[0].mxu0
    %v2329 = vadd.f32 0.0, %v2328
    %v2330 = vpop.f32.mrb[0].mxu0
    %v2331 = vpop.f32.mrb[0].mxu0
    %v2332 = vpop.f32.mrb[0].mxu0
    %2333 = vdwg.mxu0
    %v2334 = vadd.f32 %v2160, %v2273
    %v2335 = vadd.f32 %v2161, %v2276
    %v2336 = vadd.f32 %v2162, %v2281
    %v2337 = vadd.f32 %v2163, %v2284
    %v2338 = vadd.f32 %v2164, %v2289
    %v2339 = vadd.f32 %v2165, %v2292
    %v2340 = vadd.f32 %v2166, %v2297
    %v2341 = vadd.f32 %v2167, %v2300
    %v2342 = vadd.f32 %v2168, %v2305
    %v2343 = vadd.f32 %v2169, %v2308
    %v2344 = vadd.f32 %v2170, %v2313
    %v2345 = vadd.f32 %v2171, %v2316
    %v2346 = vadd.f32 %v2172, %v2321
    %v2347 = vadd.f32 %v2173, %v2324
    %v2348 = vadd.f32 %v2174, %v2329
    %v2349 = vld [vmem:[%s4] sm:$0x1]
    %v2351 = vlaneseq
    %v2352 = vshrl.u32 %v2351, 7
    %v2353 = vsub.s32 0, %v2352
    %v2354 = vrot.slane %v2349, %v2353
    %v2356 = vadd.f32 %v2334, %v2354
    %v2357 = vadd.f32 %v2335, %v2354
    %v2358 = vadd.f32 %v2336, %v2354
    %v2359 = vadd.f32 %v2337, %v2354
    %v2360 = vadd.f32 %v2338, %v2354
    %v2361 = vadd.f32 %v2339, %v2354
    %v2362 = vadd.f32 %v2340, %v2354
    %v2363 = vadd.f32 %v2341, %v2354
    %v2364 = vadd.f32 %v2342, %v2354
    %v2365 = vadd.f32 %v2343, %v2354
    %v2366 = vadd.f32 %v2344, %v2354
    %v2367 = vadd.f32 %v2345, %v2354
    %v2368 = vadd.f32 %v2346, %v2354
    %v2369 = vadd.f32 %v2347, %v2354
    %v2370 = vadd.f32 %v2348, %v2354
    %v2371 = vmax.f32 %v2356, 0.0
    %v2372 = vmax.f32 %v2357, 0.0
    %v2373 = vmax.f32 %v2358, 0.0
    %v2374 = vmax.f32 %v2359, 0.0
    %v2375 = vmax.f32 %v2360, 0.0
    %v2376 = vmax.f32 %v2361, 0.0
    %v2377 = vmax.f32 %v2362, 0.0
    %v2378 = vmax.f32 %v2363, 0.0
    %v2379 = vmax.f32 %v2364, 0.0
    %v2380 = vmax.f32 %v2365, 0.0
    %v2381 = vmax.f32 %v2366, 0.0
    %v2382 = vmax.f32 %v2367, 0.0
    %v2383 = vmax.f32 %v2368, 0.0
    %v2384 = vmax.f32 %v2369, 0.0
    %v2385 = vmax.f32 %v2370, 0.0
    %vm2386 = vcmask 392192
    %2387 = vst.msk [vmem:[#allocation4] sm:$0xff] %vm2386, %v2371
    %2388 = vst.msk [vmem:[#allocation4 + $0x8] sm:$0xff] %vm2386, %v2372
    %2389 = vst.msk [vmem:[#allocation4 + $0x10] sm:$0xff] %vm2386, %v2373
    %2390 = vst.msk [vmem:[#allocation4 + $0x18] sm:$0xff] %vm2386, %v2374
    %2391 = vst.msk [vmem:[#allocation4 + $0x20] sm:$0xff] %vm2386, %v2375
    %2392 = vst.msk [vmem:[#allocation4 + $0x28] sm:$0xff] %vm2386, %v2376
    %2393 = vst.msk [vmem:[#allocation4 + $0x30] sm:$0xff] %vm2386, %v2377
    %2394 = vst.msk [vmem:[#allocation4 + $0x38] sm:$0xff] %vm2386, %v2378
    %2395 = vst.msk [vmem:[#allocation4 + $0x40] sm:$0xff] %vm2386, %v2379
    %2396 = vst.msk [vmem:[#allocation4 + $0x48] sm:$0xff] %vm2386, %v2380
    %2397 = vst.msk [vmem:[#allocation4 + $0x50] sm:$0xff] %vm2386, %v2381
    %2398 = vst.msk [vmem:[#allocation4 + $0x58] sm:$0xff] %vm2386, %v2382
    %2399 = vst.msk [vmem:[#allocation4 + $0x60] sm:$0xff] %vm2386, %v2383
    %2400 = vst.msk [vmem:[#allocation4 + $0x68] sm:$0xff] %vm2386, %v2384
    %vm2401 = vcmask 389120
    %2402 = vst.msk [vmem:[#allocation4 + $0x70] sm:$0x1f] %vm2401, %v2385
    %v2403 = vld [vmem:[#allocation4] ss:$4 sm:$0xff]
    %s2404 = scalar_lea.vmem [#allocation4], 32
    %v2405 = vld [vmem:[%s2404] ss:$4 sm:$0x1f]
    %s2406 = scalar_lea.vmem [#allocation4], 1
    %v2407 = vld [vmem:[%s2406] ss:$4 sm:$0xff]
    %s2408 = scalar_lea.vmem [#allocation4], 33
    %v2409 = vld [vmem:[%s2408] ss:$4 sm:$0x1f]
    %v2410 = vmax.f32 %v2403, %v2407
    %v2411 = vmax.f32 %v2405, %v2409
    %s2412 = scalar_lea.vmem [#allocation4], 2
    %v2413 = vld [vmem:[%s2412] ss:$4 sm:$0xff]
    %s2414 = scalar_lea.vmem [#allocation4], 34
    %v2415 = vld [vmem:[%s2414] ss:$4 sm:$0x1f]
    %v2416 = vmax.f32 %v2410, %v2413
    %v2417 = vmax.f32 %v2411, %v2415
    %s2418 = scalar_lea.vmem [#allocation4], 3
    %v2419 = vld [vmem:[%s2418] ss:$4 sm:$0xff]
    %s2420 = scalar_lea.vmem [#allocation4], 35
    %v2421 = vld [vmem:[%s2420] ss:$4 sm:$0x1f]
    %v2422 = vmax.f32 %v2416, %v2419
    %v2423 = vmax.f32 %v2417, %v2421
    %2424 = vst.msk [vmem:[#allocation5] sm:$0xff] %vm2386, %v2422
    %2425 = vst.msk [vmem:[#allocation5 + $0x8] sm:$0x1f] %vm2401, %v2423
    %s2426 = scalar_lea.vmem [#allocation4], 62
    %v2427 = vld [vmem:[%s2426] ss:$4 sm:$0xff]
    %s2428 = scalar_lea.vmem [#allocation4], 94
    %v2429 = vld [vmem:[%s2428] ss:$4 sm:$0x1f]
    %s2430 = scalar_lea.vmem [#allocation4], 63
    %v2431 = vld [vmem:[%s2430] ss:$4 sm:$0xff]
    %s2432 = scalar_lea.vmem [#allocation4], 95
    %v2433 = vld [vmem:[%s2432] ss:$4 sm:$0x1f]
    %v2434 = vmax.f32 %v2427, %v2431
    %v2435 = vmax.f32 %v2429, %v2433
    %s2436 = scalar_lea.vmem [#allocation4], 64
    %v2437 = vld [vmem:[%s2436] ss:$4 sm:$0xff]
    %s2438 = scalar_lea.vmem [#allocation4], 96
    %v2439 = vld [vmem:[%s2438] ss:$4 sm:$0x1f]
    %v2440 = vmax.f32 %v2434, %v2437
    %v2441 = vmax.f32 %v2435, %v2439
    %s2442 = scalar_lea.vmem [#allocation4], 65
    %v2443 = vld [vmem:[%s2442] ss:$4 sm:$0xff]
    %s2444 = scalar_lea.vmem [#allocation4], 97
    %v2445 = vld [vmem:[%s2444] ss:$4 sm:$0x1f]
    %v2446 = vmax.f32 %v2440, %v2443
    %v2447 = vmax.f32 %v2441, %v2445
    %2448 = vst.msk [vmem:[#allocation5 + $0xd] sm:$0xff] %vm2386, %v2446
    %2449 = vst.msk [vmem:[#allocation5 + $0x15] sm:$0x1f] %vm2401, %v2447
    %v2450 = vld [vmem:[#allocation5] sm:$0xff]
    %v2451 = vld [vmem:[#allocation5 + $0x8] sm:$0xff]
    %v2452 = vld [vmem:[#allocation5 + $0x10] sm:$0x7]
    %v2453 = vpack.c.bf16 %v2451, %v2450
    %v2454 = vpack.c.bf16 %v2452, %v2452
    %v2455 = vld [vmem:[%s5] sm:$0xf]
    %v2456 = vld [vmem:[%s5 + $0x4] sm:$0xf]
    %v2457 = vld [vmem:[%s5 + $0x8] sm:$0xf]
    %v2458 = vld [vmem:[%s5 + $0xc] sm:$0xf]
    %v2459 = vld [vmem:[%s5 + $0x10] sm:$0xf]
    %v2460 = vld [vmem:[%s5 + $0x14] sm:$0xf]
    %v2461 = vld [vmem:[#allocation5 + $0x1] sm:$0xff]
    %v2462 = vld [vmem:[#allocation5 + $0x9] sm:$0xff]
    %v2463 = vld [vmem:[#allocation5 + $0x11] sm:$0x7]
    %v2464 = vpack.c.bf16 %v2462, %v2461
    %v2465 = vpack.c.bf16 %v2463, %v2463
    %v2466 = vld [vmem:[%s5 + $0x18] sm:$0xf]
    %v2467 = vld [vmem:[%s5 + $0x1c] sm:$0xf]
    %v2468 = vld [vmem:[%s5 + $0x20] sm:$0xf]
    %v2469 = vld [vmem:[%s5 + $0x24] sm:$0xf]
    %v2470 = vld [vmem:[%s5 + $0x28] sm:$0xf]
    %v2471 = vld [vmem:[%s5 + $0x2c] sm:$0xf]
    %v2478 = vunpack.c.l.b16 %v2466
    %v2479 = vunpack.c.l.b16 %v2467
    %v2480 = vunpack.c.l.b16 %v2468
    %v2481 = vunpack.c.l.b16 %v2469
    %v2482 = vunpack.c.l.b16 %v2470
    %v2483 = vunpack.c.l.b16 %v2471
    %v2484 = vpack.c.b16 %v2479, %v2478
    %v2485 = vpack.c.b16 %v2481, %v2480
    %v2486 = vpack.c.b16 %v2483, %v2482
    %v2491 = vsel %vm2386, %v2464, 0
    %v2494 = vsel %vm2386, %v2465, 0
    %2496 = vmatprep.subr.bf16.mxu0 0
    %2497 = vmatpush1.bf16.msra.mxu0 %v2484
    %2498 = vmatprep.subr.bf16.mxu0 0
    %2499 = vmatpush1.bf16.msra.mxu0 %v2485
    %2500 = vmatprep.subr.bf16.mxu0 0
    %2501 = vmatpush1.bf16.msra.mxu0 %v2486
    %2502 = vmatprep.subr.bf16.mxu0 0
    %2503 = vmatpush1.bf16.msra.mxu0 0
    %2504 = vmatprep.subr.bf16.mxu0 0
    %2505 = vmatpush1.bf16.msra.mxu0 0
    %2506 = vmatprep.subr.bf16.mxu0 0
    %2507 = vmatpush1.bf16.msra.mxu0 0
    %2508 = vmatprep.subr.bf16.mxu0 0
    %2509 = vmatpush1.bf16.msra.mxu0 0
    %2510 = vmatprep.subr.bf16.mxu0 0
    %2511 = vmatpush1.bf16.msra.mxu0 0
    %2512 = vmatprep.subr.bf16.mxu0 0
    %2513 = vmatpush1.bf16.msra.mxu0 0
    %2514 = vmatprep.subr.bf16.mxu0 0
    %2515 = vmatpush1.bf16.msra.mxu0 0
    %2516 = vmatprep.subr.bf16.mxu0 0
    %2517 = vmatpush1.bf16.msra.mxu0 0
    %2518 = vmatprep.subr.bf16.mxu0 0
    %2519 = vmatpush1.bf16.msra.mxu0 0
    %2520 = vmatprep.subr.bf16.mxu0 0
    %2521 = vmatpush1.bf16.msra.mxu0 0
    %2522 = vmatprep.subr.bf16.mxu0 0
    %2523 = vmatpush1.bf16.msra.mxu0 0
    %2524 = vmatprep.subr.bf16.mxu0 0
    %2525 = vmatpush1.bf16.msra.mxu0 0
    %2526 = vmatprep.subr.bf16.mxu0 0
    %2527 = vmatpush1.bf16.msra.mxu0 0
    %2528 = vmatprep.mubr.bf16.mxu0 0
    %2529 = vmatmul.mubr.bf16.gmra.mrb[0].mxu0 %v2491
    %v2530 = vpop.f32.mrb[0].mxu0
    %v2531 = vadd.f32 0.0, %v2530
    %v2532 = vpop.f32.mrb[0].mxu0
    %v2533 = vpop.f32.mrb[0].mxu0
    %v2534 = vadd.f32 0.0, %v2533
    %v2535 = vpop.f32.mrb[0].mxu0
    %2536 = vmatprep.mubr.bf16.mxu0 0
    %2537 = vmatmul.mubr.bf16.gmra.mrb[0].mxu0 %v2494
    %v2538 = vpop.f32.mrb[0].mxu0
    %v2539 = vadd.f32 0.0, %v2538
    %v2540 = vpop.f32.mrb[0].mxu0
    %v2541 = vpop.f32.mrb[0].mxu0
    %v2542 = vpop.f32.mrb[0].mxu0
    %2543 = vdwg.mxu0
    %v2550 = vunpack.c.l.b16 %v2455
    %v2551 = vunpack.c.l.b16 %v2456
    %v2552 = vunpack.c.l.b16 %v2457
    %v2553 = vunpack.c.l.b16 %v2458
    %v2554 = vunpack.c.l.b16 %v2459
    %v2555 = vunpack.c.l.b16 %v2460
    %v2556 = vpack.c.b16 %v2551, %v2550
    %v2557 = vpack.c.b16 %v2553, %v2552
    %v2558 = vpack.c.b16 %v2555, %v2554
    %v2563 = vsel %vm2386, %v2453, 0
    %v2566 = vsel %vm2386, %v2454, 0
    %2568 = vmatprep.subr.bf16.mxu0 0
    %2569 = vmatpush1.bf16.msra.mxu0 %v2556
    %2570 = vmatprep.subr.bf16.mxu0 0
    %2571 = vmatpush1.bf16.msra.mxu0 %v2557
    %2572 = vmatprep.subr.bf16.mxu0 0
    %2573 = vmatpush1.bf16.msra.mxu0 %v2558
    %2574 = vmatprep.subr.bf16.mxu0 0
    %2575 = vmatpush1.bf16.msra.mxu0 0
    %2576 = vmatprep.subr.bf16.mxu0 0
    %2577 = vmatpush1.bf16.msra.mxu0 0
    %2578 = vmatprep.subr.bf16.mxu0 0
    %2579 = vmatpush1.bf16.msra.mxu0 0
    %2580 = vmatprep.subr.bf16.mxu0 0
    %2581 = vmatpush1.bf16.msra.mxu0 0
    %2582 = vmatprep.subr.bf16.mxu0 0
    %2583 = vmatpush1.bf16.msra.mxu0 0
    %2584 = vmatprep.subr.bf16.mxu0 0
    %2585 = vmatpush1.bf16.msra.mxu0 0
    %2586 = vmatprep.subr.bf16.mxu0 0
    %2587 = vmatpush1.bf16.msra.mxu0 0
    %2588 = vmatprep.subr.bf16.mxu0 0
    %2589 = vmatpush1.bf16.msra.mxu0 0
    %2590 = vmatprep.subr.bf16.mxu0 0
    %2591 = vmatpush1.bf16.msra.mxu0 0
    %2592 = vmatprep.subr.bf16.mxu0 0
    %2593 = vmatpush1.bf16.msra.mxu0 0
    %2594 = vmatprep.subr.bf16.mxu0 0
    %2595 = vmatpush1.bf16.msra.mxu0 0
    %2596 = vmatprep.subr.bf16.mxu0 0
    %2597 = vmatpush1.bf16.msra.mxu0 0
    %2598 = vmatprep.subr.bf16.mxu0 0
    %2599 = vmatpush1.bf16.msra.mxu0 0
    %2600 = vmatprep.mubr.bf16.mxu0 0
    %2601 = vmatmul.mubr.bf16.gmra.mrb[0].mxu0 %v2563
    %v2602 = vpop.f32.mrb[0].mxu0
    %v2603 = vadd.f32 %v2531, %v2602
    %v2604 = vpop.f32.mrb[0].mxu0
    %v2605 = vpop.f32.mrb[0].mxu0
    %v2606 = vadd.f32 %v2534, %v2605
    %v2607 = vpop.f32.mrb[0].mxu0
    %2608 = vmatprep.mubr.bf16.mxu0 0
    %2609 = vmatmul.mubr.bf16.gmra.mrb[0].mxu0 %v2566
    %v2610 = vpop.f32.mrb[0].mxu0
    %v2611 = vadd.f32 %v2539, %v2610
    %v2612 = vpop.f32.mrb[0].mxu0
    %v2613 = vpop.f32.mrb[0].mxu0
    %v2614 = vpop.f32.mrb[0].mxu0
    %2615 = vdwg.mxu0
    %v2616 = vld [vmem:[#allocation5 + $0x2] sm:$0xff]
    %v2617 = vld [vmem:[#allocation5 + $0xa] sm:$0xff]
    %v2618 = vld [vmem:[#allocation5 + $0x12] sm:$0x7]
    %v2619 = vpack.c.bf16 %v2617, %v2616
    %v2620 = vpack.c.bf16 %v2618, %v2618
    %v2621 = vld [vmem:[%s5 + $0x30] sm:$0xf]
    %v2622 = vld [vmem:[%s5 + $0x34] sm:$0xf]
    %v2623 = vld [vmem:[%s5 + $0x38] sm:$0xf]
    %v2624 = vld [vmem:[%s5 + $0x3c] sm:$0xf]
    %v2625 = vld [vmem:[%s5 + $0x40] sm:$0xf]
    %v2626 = vld [vmem:[%s5 + $0x44] sm:$0xf]
    %v2633 = vunpack.c.l.b16 %v2621
    %v2634 = vunpack.c.l.b16 %v2622
    %v2635 = vunpack.c.l.b16 %v2623
    %v2636 = vunpack.c.l.b16 %v2624
    %v2637 = vunpack.c.l.b16 %v2625
    %v2638 = vunpack.c.l.b16 %v2626
    %v2639 = vpack.c.b16 %v2634, %v2633
    %v2640 = vpack.c.b16 %v2636, %v2635
    %v2641 = vpack.c.b16 %v2638, %v2637
    %v2646 = vsel %vm2386, %v2619, 0
    %v2649 = vsel %vm2386, %v2620, 0
    %2651 = vmatprep.subr.bf16.mxu0 0
    %2652 = vmatpush1.bf16.msra.mxu0 %v2639
    %2653 = vmatprep.subr.bf16.mxu0 0
    %2654 = vmatpush1.bf16.msra.mxu0 %v2640
    %2655 = vmatprep.subr.bf16.mxu0 0
    %2656 = vmatpush1.bf16.msra.mxu0 %v2641
    %2657 = vmatprep.subr.bf16.mxu0 0
    %2658 = vmatpush1.bf16.msra.mxu0 0
    %2659 = vmatprep.subr.bf16.mxu0 0
    %2660 = vmatpush1.bf16.msra.mxu0 0
    %2661 = vmatprep.subr.bf16.mxu0 0
    %2662 = vmatpush1.bf16.msra.mxu0 0
    %2663 = vmatprep.subr.bf16.mxu0 0
    %2664 = vmatpush1.bf16.msra.mxu0 0
    %2665 = vmatprep.subr.bf16.mxu0 0
    %2666 = vmatpush1.bf16.msra.mxu0 0
    %2667 = vmatprep.subr.bf16.mxu0 0
    %2668 = vmatpush1.bf16.msra.mxu0 0
    %2669 = vmatprep.subr.bf16.mxu0 0
    %2670 = vmatpush1.bf16.msra.mxu0 0
    %2671 = vmatprep.subr.bf16.mxu0 0
    %2672 = vmatpush1.bf16.msra.mxu0 0
    %2673 = vmatprep.subr.bf16.mxu0 0
    %2674 = vmatpush1.bf16.msra.mxu0 0
    %2675 = vmatprep.subr.bf16.mxu0 0
    %2676 = vmatpush1.bf16.msra.mxu0 0
    %2677 = vmatprep.subr.bf16.mxu0 0
    %2678 = vmatpush1.bf16.msra.mxu0 0
    %2679 = vmatprep.subr.bf16.mxu0 0
    %2680 = vmatpush1.bf16.msra.mxu0 0
    %2681 = vmatprep.subr.bf16.mxu0 0
    %2682 = vmatpush1.bf16.msra.mxu0 0
    %2683 = vmatprep.mubr.bf16.mxu0 0
    %2684 = vmatmul.mubr.bf16.gmra.mrb[0].mxu0 %v2646
    %v2685 = vpop.f32.mrb[0].mxu0
    %v2686 = vadd.f32 0.0, %v2685
    %v2687 = vpop.f32.mrb[0].mxu0
    %v2688 = vpop.f32.mrb[0].mxu0
    %v2689 = vadd.f32 0.0, %v2688
    %v2690 = vpop.f32.mrb[0].mxu0
    %2691 = vmatprep.mubr.bf16.mxu0 0
    %2692 = vmatmul.mubr.bf16.gmra.mrb[0].mxu0 %v2649
    %v2693 = vpop.f32.mrb[0].mxu0
    %v2694 = vadd.f32 0.0, %v2693
    %v2695 = vpop.f32.mrb[0].mxu0
    %v2696 = vpop.f32.mrb[0].mxu0
    %v2697 = vpop.f32.mrb[0].mxu0
    %2698 = vdwg.mxu0
    %v2699 = vadd.f32 %v2603, %v2686
    %v2700 = vadd.f32 %v2606, %v2689
    %v2701 = vadd.f32 %v2611, %v2694
    %v2702 = vld [vmem:[#allocation5 + $0x3] sm:$0xff]
    %v2703 = vld [vmem:[#allocation5 + $0xb] sm:$0xff]
    %v2704 = vld [vmem:[#allocation5 + $0x13] sm:$0x7]
    %v2705 = vpack.c.bf16 %v2703, %v2702
    %v2706 = vpack.c.bf16 %v2704, %v2704
    %v2707 = vld [vmem:[%s5 + $0x48] sm:$0xf]
    %v2708 = vld [vmem:[%s5 + $0x4c] sm:$0xf]
    %v2709 = vld [vmem:[%s5 + $0x50] sm:$0xf]
    %v2710 = vld [vmem:[%s5 + $0x54] sm:$0xf]
    %v2711 = vld [vmem:[%s5 + $0x58] sm:$0xf]
    %v2712 = vld [vmem:[%s5 + $0x5c] sm:$0xf]
    %v2719 = vunpack.c.l.b16 %v2707
    %v2720 = vunpack.c.l.b16 %v2708
    %v2721 = vunpack.c.l.b16 %v2709
    %v2722 = vunpack.c.l.b16 %v2710
    %v2723 = vunpack.c.l.b16 %v2711
    %v2724 = vunpack.c.l.b16 %v2712
    %v2725 = vpack.c.b16 %v2720, %v2719
    %v2726 = vpack.c.b16 %v2722, %v2721
    %v2727 = vpack.c.b16 %v2724, %v2723
    %v2732 = vsel %vm2386, %v2705, 0
    %v2735 = vsel %vm2386, %v2706, 0
    %2737 = vmatprep.subr.bf16.mxu0 0
    %2738 = vmatpush1.bf16.msra.mxu0 %v2725
    %2739 = vmatprep.subr.bf16.mxu0 0
    %2740 = vmatpush1.bf16.msra.mxu0 %v2726
    %2741 = vmatprep.subr.bf16.mxu0 0
    %2742 = vmatpush1.bf16.msra.mxu0 %v2727
    %2743 = vmatprep.subr.bf16.mxu0 0
    %2744 = vmatpush1.bf16.msra.mxu0 0
    %2745 = vmatprep.subr.bf16.mxu0 0
    %2746 = vmatpush1.bf16.msra.mxu0 0
    %2747 = vmatprep.subr.bf16.mxu0 0
    %2748 = vmatpush1.bf16.msra.mxu0 0
    %2749 = vmatprep.subr.bf16.mxu0 0
    %2750 = vmatpush1.bf16.msra.mxu0 0
    %2751 = vmatprep.subr.bf16.mxu0 0
    %2752 = vmatpush1.bf16.msra.mxu0 0
    %2753 = vmatprep.subr.bf16.mxu0 0
    %2754 = vmatpush1.bf16.msra.mxu0 0
    %2755 = vmatprep.subr.bf16.mxu0 0
    %2756 = vmatpush1.bf16.msra.mxu0 0
    %2757 = vmatprep.subr.bf16.mxu0 0
    %2758 = vmatpush1.bf16.msra.mxu0 0
    %2759 = vmatprep.subr.bf16.mxu0 0
    %2760 = vmatpush1.bf16.msra.mxu0 0
    %2761 = vmatprep.subr.bf16.mxu0 0
    %2762 = vmatpush1.bf16.msra.mxu0 0
    %2763 = vmatprep.subr.bf16.mxu0 0
    %2764 = vmatpush1.bf16.msra.mxu0 0
    %2765 = vmatprep.subr.bf16.mxu0 0
    %2766 = vmatpush1.bf16.msra.mxu0 0
    %2767 = vmatprep.subr.bf16.mxu0 0
    %2768 = vmatpush1.bf16.msra.mxu0 0
    %2769 = vmatprep.mubr.bf16.mxu0 0
    %2770 = vmatmul.mubr.bf16.gmra.mrb[0].mxu0 %v2732
    %v2771 = vpop.f32.mrb[0].mxu0
    %v2772 = vadd.f32 0.0, %v2771
    %v2773 = vpop.f32.mrb[0].mxu0
    %v2774 = vpop.f32.mrb[0].mxu0
    %v2775 = vadd.f32 0.0, %v2774
    %v2776 = vpop.f32.mrb[0].mxu0
    %2777 = vmatprep.mubr.bf16.mxu0 0
    %2778 = vmatmul.mubr.bf16.gmra.mrb[0].mxu0 %v2735
    %v2779 = vpop.f32.mrb[0].mxu0
    %v2780 = vadd.f32 0.0, %v2779
    %v2781 = vpop.f32.mrb[0].mxu0
    %v2782 = vpop.f32.mrb[0].mxu0
    %v2783 = vpop.f32.mrb[0].mxu0
    %2784 = vdwg.mxu0
    %v2785 = vadd.f32 %v2699, %v2772
    %v2786 = vadd.f32 %v2700, %v2775
    %v2787 = vadd.f32 %v2701, %v2780
    %v2788 = vld [vmem:[#allocation5 + $0x4] sm:$0xff]
    %v2789 = vld [vmem:[#allocation5 + $0xc] sm:$0xff]
    %v2790 = vld [vmem:[#allocation5 + $0x14] sm:$0x7]
    %v2791 = vpack.c.bf16 %v2789, %v2788
    %v2792 = vpack.c.bf16 %v2790, %v2790
    %v2793 = vld [vmem:[%s5 + $0x60] sm:$0xf]
    %v2794 = vld [vmem:[%s5 + $0x64] sm:$0xf]
    %v2795 = vld [vmem:[%s5 + $0x68] sm:$0xf]
    %v2796 = vld [vmem:[%s5 + $0x6c] sm:$0xf]
    %v2797 = vld [vmem:[%s5 + $0x70] sm:$0xf]
    %v2798 = vld [vmem:[%s5 + $0x74] sm:$0xf]
    %v2805 = vunpack.c.l.b16 %v2793
    %v2806 = vunpack.c.l.b16 %v2794
    %v2807 = vunpack.c.l.b16 %v2795
    %v2808 = vunpack.c.l.b16 %v2796
    %v2809 = vunpack.c.l.b16 %v2797
    %v2810 = vunpack.c.l.b16 %v2798
    %v2811 = vpack.c.b16 %v2806, %v2805
    %v2812 = vpack.c.b16 %v2808, %v2807
    %v2813 = vpack.c.b16 %v2810, %v2809
    %v2818 = vsel %vm2386, %v2791, 0
    %v2821 = vsel %vm2386, %v2792, 0
    %2823 = vmatprep.subr.bf16.mxu0 0
    %2824 = vmatpush1.bf16.msra.mxu0 %v2811
    %2825 = vmatprep.subr.bf16.mxu0 0
    %2826 = vmatpush1.bf16.msra.mxu0 %v2812
    %2827 = vmatprep.subr.bf16.mxu0 0
    %2828 = vmatpush1.bf16.msra.mxu0 %v2813
    %2829 = vmatprep.subr.bf16.mxu0 0
    %2830 = vmatpush1.bf16.msra.mxu0 0
    %2831 = vmatprep.subr.bf16.mxu0 0
    %2832 = vmatpush1.bf16.msra.mxu0 0
    %2833 = vmatprep.subr.bf16.mxu0 0
    %2834 = vmatpush1.bf16.msra.mxu0 0
    %2835 = vmatprep.subr.bf16.mxu0 0
    %2836 = vmatpush1.bf16.msra.mxu0 0
    %2837 = vmatprep.subr.bf16.mxu0 0
    %2838 = vmatpush1.bf16.msra.mxu0 0
    %2839 = vmatprep.subr.bf16.mxu0 0
    %2840 = vmatpush1.bf16.msra.mxu0 0
    %2841 = vmatprep.subr.bf16.mxu0 0
    %2842 = vmatpush1.bf16.msra.mxu0 0
    %2843 = vmatprep.subr.bf16.mxu0 0
    %2844 = vmatpush1.bf16.msra.mxu0 0
    %2845 = vmatprep.subr.bf16.mxu0 0
    %2846 = vmatpush1.bf16.msra.mxu0 0
    %2847 = vmatprep.subr.bf16.mxu0 0
    %2848 = vmatpush1.bf16.msra.mxu0 0
    %2849 = vmatprep.subr.bf16.mxu0 0
    %2850 = vmatpush1.bf16.msra.mxu0 0
    %2851 = vmatprep.subr.bf16.mxu0 0
    %2852 = vmatpush1.bf16.msra.mxu0 0
    %2853 = vmatprep.subr.bf16.mxu0 0
    %2854 = vmatpush1.bf16.msra.mxu0 0
    %2855 = vmatprep.mubr.bf16.mxu0 0
    %2856 = vmatmul.mubr.bf16.gmra.mrb[0].mxu0 %v2818
    %v2857 = vpop.f32.mrb[0].mxu0
    %v2858 = vadd.f32 0.0, %v2857
    %v2859 = vpop.f32.mrb[0].mxu0
    %v2860 = vpop.f32.mrb[0].mxu0
    %v2861 = vadd.f32 0.0, %v2860
    %v2862 = vpop.f32.mrb[0].mxu0
    %2863 = vmatprep.mubr.bf16.mxu0 0
    %2864 = vmatmul.mubr.bf16.gmra.mrb[0].mxu0 %v2821
    %v2865 = vpop.f32.mrb[0].mxu0
    %v2866 = vadd.f32 0.0, %v2865
    %v2867 = vpop.f32.mrb[0].mxu0
    %v2868 = vpop.f32.mrb[0].mxu0
    %v2869 = vpop.f32.mrb[0].mxu0
    %2870 = vdwg.mxu0
    %v2871 = vadd.f32 %v2785, %v2858
    %v2872 = vadd.f32 %v2786, %v2861
    %v2873 = vadd.f32 %v2787, %v2866
    %v2874 = vld [vmem:[#allocation5 + $0x5] sm:$0xff]
    %v2875 = vld [vmem:[#allocation5 + $0xd] sm:$0xff]
    %v2876 = vld [vmem:[#allocation5 + $0x15] sm:$0x7]
    %v2877 = vpack.c.bf16 %v2875, %v2874
    %v2878 = vpack.c.bf16 %v2876, %v2876
    %v2879 = vld [vmem:[%s5 + $0x78] sm:$0xf]
    %v2880 = vld [vmem:[%s5 + $0x7c] sm:$0xf]
    %v2881 = vld [vmem:[%s5 + $0x80] sm:$0xf]
    %v2882 = vld [vmem:[%s5 + $0x84] sm:$0xf]
    %v2883 = vld [vmem:[%s5 + $0x88] sm:$0xf]
    %v2884 = vld [vmem:[%s5 + $0x8c] sm:$0xf]
    %v2891 = vunpack.c.l.b16 %v2879
    %v2892 = vunpack.c.l.b16 %v2880
    %v2893 = vunpack.c.l.b16 %v2881
    %v2894 = vunpack.c.l.b16 %v2882
    %v2895 = vunpack.c.l.b16 %v2883
    %v2896 = vunpack.c.l.b16 %v2884
    %v2897 = vpack.c.b16 %v2892, %v2891
    %v2898 = vpack.c.b16 %v2894, %v2893
    %v2899 = vpack.c.b16 %v2896, %v2895
    %v2904 = vsel %vm2386, %v2877, 0
    %v2907 = vsel %vm2386, %v2878, 0
    %2909 = vmatprep.subr.bf16.mxu0 0
    %2910 = vmatpush1.bf16.msra.mxu0 %v2897
    %2911 = vmatprep.subr.bf16.mxu0 0
    %2912 = vmatpush1.bf16.msra.mxu0 %v2898
    %2913 = vmatprep.subr.bf16.mxu0 0
    %2914 = vmatpush1.bf16.msra.mxu0 %v2899
    %2915 = vmatprep.subr.bf16.mxu0 0
    %2916 = vmatpush1.bf16.msra.mxu0 0
    %2917 = vmatprep.subr.bf16.mxu0 0
    %2918 = vmatpush1.bf16.msra.mxu0 0
    %2919 = vmatprep.subr.bf16.mxu0 0
    %2920 = vmatpush1.bf16.msra.mxu0 0
    %2921 = vmatprep.subr.bf16.mxu0 0
    %2922 = vmatpush1.bf16.msra.mxu0 0
    %2923 = vmatprep.subr.bf16.mxu0 0
    %2924 = vmatpush1.bf16.msra.mxu0 0
    %2925 = vmatprep.subr.bf16.mxu0 0
    %2926 = vmatpush1.bf16.msra.mxu0 0
    %2927 = vmatprep.subr.bf16.mxu0 0
    %2928 = vmatpush1.bf16.msra.mxu0 0
    %2929 = vmatprep.subr.bf16.mxu0 0
    %2930 = vmatpush1.bf16.msra.mxu0 0
    %2931 = vmatprep.subr.bf16.mxu0 0
    %2932 = vmatpush1.bf16.msra.mxu0 0
    %2933 = vmatprep.subr.bf16.mxu0 0
    %2934 = vmatpush1.bf16.msra.mxu0 0
    %2935 = vmatprep.subr.bf16.mxu0 0
    %2936 = vmatpush1.bf16.msra.mxu0 0
    %2937 = vmatprep.subr.bf16.mxu0 0
    %2938 = vmatpush1.bf16.msra.mxu0 0
    %2939 = vmatprep.subr.bf16.mxu0 0
    %2940 = vmatpush1.bf16.msra.mxu0 0
    %2941 = vmatprep.mubr.bf16.mxu0 0
    %2942 = vmatmul.mubr.bf16.gmra.mrb[0].mxu0 %v2904
    %v2943 = vpop.f32.mrb[0].mxu0
    %v2944 = vadd.f32 0.0, %v2943
    %v2945 = vpop.f32.mrb[0].mxu0
    %v2946 = vpop.f32.mrb[0].mxu0
    %v2947 = vadd.f32 0.0, %v2946
    %v2948 = vpop.f32.mrb[0].mxu0
    %2949 = vmatprep.mubr.bf16.mxu0 0
    %2950 = vmatmul.mubr.bf16.gmra.mrb[0].mxu0 %v2907
    %v2951 = vpop.f32.mrb[0].mxu0
    %v2952 = vadd.f32 0.0, %v2951
    %v2953 = vpop.f32.mrb[0].mxu0
    %v2954 = vpop.f32.mrb[0].mxu0
    %v2955 = vpop.f32.mrb[0].mxu0
    %2956 = vdwg.mxu0
    %v2957 = vadd.f32 %v2871, %v2944
    %v2958 = vadd.f32 %v2872, %v2947
    %v2959 = vadd.f32 %v2873, %v2952
    %v2960 = vld [vmem:[#allocation5 + $0x6] sm:$0xff]
    %v2961 = vld [vmem:[#allocation5 + $0xe] sm:$0xff]
    %v2962 = vld [vmem:[#allocation5 + $0x16] sm:$0x7]
    %v2963 = vpack.c.bf16 %v2961, %v2960
    %v2964 = vpack.c.bf16 %v2962, %v2962
    %v2965 = vld [vmem:[%s5 + $0x90] sm:$0xf]
    %v2966 = vld [vmem:[%s5 + $0x94] sm:$0xf]
    %v2967 = vld [vmem:[%s5 + $0x98] sm:$0xf]
    %v2968 = vld [vmem:[%s5 + $0x9c] sm:$0xf]
    %v2969 = vld [vmem:[%s5 + $0xa0] sm:$0xf]
    %v2970 = vld [vmem:[%s5 + $0xa4] sm:$0xf]
    %v2977 = vunpack.c.l.b16 %v2965
    %v2978 = vunpack.c.l.b16 %v2966
    %v2979 = vunpack.c.l.b16 %v2967
    %v2980 = vunpack.c.l.b16 %v2968
    %v2981 = vunpack.c.l.b16 %v2969
    %v2982 = vunpack.c.l.b16 %v2970
    %v2983 = vpack.c.b16 %v2978, %v2977
    %v2984 = vpack.c.b16 %v2980, %v2979
    %v2985 = vpack.c.b16 %v2982, %v2981
    %v2990 = vsel %vm2386, %v2963, 0
    %v2993 = vsel %vm2386, %v2964, 0
    %2995 = vmatprep.subr.bf16.mxu0 0
    %2996 = vmatpush1.bf16.msra.mxu0 %v2983
    %2997 = vmatprep.subr.bf16.mxu0 0
    %2998 = vmatpush1.bf16.msra.mxu0 %v2984
    %2999 = vmatprep.subr.bf16.mxu0 0
    %3000 = vmatpush1.bf16.msra.mxu0 %v2985
    %3001 = vmatprep.subr.bf16.mxu0 0
    %3002 = vmatpush1.bf16.msra.mxu0 0
    %3003 = vmatprep.subr.bf16.mxu0 0
    %3004 = vmatpush1.bf16.msra.mxu0 0
    %3005 = vmatprep.subr.bf16.mxu0 0
    %3006 = vmatpush1.bf16.msra.mxu0 0
    %3007 = vmatprep.subr.bf16.mxu0 0
    %3008 = vmatpush1.bf16.msra.mxu0 0
    %3009 = vmatprep.subr.bf16.mxu0 0
    %3010 = vmatpush1.bf16.msra.mxu0 0
    %3011 = vmatprep.subr.bf16.mxu0 0
    %3012 = vmatpush1.bf16.msra.mxu0 0
    %3013 = vmatprep.subr.bf16.mxu0 0
    %3014 = vmatpush1.bf16.msra.mxu0 0
    %3015 = vmatprep.subr.bf16.mxu0 0
    %3016 = vmatpush1.bf16.msra.mxu0 0
    %3017 = vmatprep.subr.bf16.mxu0 0
    %3018 = vmatpush1.bf16.msra.mxu0 0
    %3019 = vmatprep.subr.bf16.mxu0 0
    %3020 = vmatpush1.bf16.msra.mxu0 0
    %3021 = vmatprep.subr.bf16.mxu0 0
    %3022 = vmatpush1.bf16.msra.mxu0 0
    %3023 = vmatprep.subr.bf16.mxu0 0
    %3024 = vmatpush1.bf16.msra.mxu0 0
    %3025 = vmatprep.subr.bf16.mxu0 0
    %3026 = vmatpush1.bf16.msra.mxu0 0
    %3027 = vmatprep.mubr.bf16.mxu0 0
    %3028 = vmatmul.mubr.bf16.gmra.mrb[0].mxu0 %v2990
    %v3029 = vpop.f32.mrb[0].mxu0
    %v3030 = vadd.f32 0.0, %v3029
    %v3031 = vpop.f32.mrb[0].mxu0
    %v3032 = vpop.f32.mrb[0].mxu0
    %v3033 = vadd.f32 0.0, %v3032
    %v3034 = vpop.f32.mrb[0].mxu0
    %3035 = vmatprep.mubr.bf16.mxu0 0
    %3036 = vmatmul.mubr.bf16.gmra.mrb[0].mxu0 %v2993
    %v3037 = vpop.f32.mrb[0].mxu0
    %v3038 = vadd.f32 0.0, %v3037
    %v3039 = vpop.f32.mrb[0].mxu0
    %v3040 = vpop.f32.mrb[0].mxu0
    %v3041 = vpop.f32.mrb[0].mxu0
    %3042 = vdwg.mxu0
    %v3043 = vadd.f32 %v2957, %v3030
    %v3044 = vadd.f32 %v2958, %v3033
    %v3045 = vadd.f32 %v2959, %v3038
    %v3046 = vld [vmem:[#allocation5 + $0x7] sm:$0xff]
    %v3047 = vld [vmem:[#allocation5 + $0xf] sm:$0xff]
    %v3048 = vld [vmem:[#allocation5 + $0x17] sm:$0x7]
    %v3049 = vpack.c.bf16 %v3047, %v3046
    %v3050 = vpack.c.bf16 %v3048, %v3048
    %v3051 = vld [vmem:[%s5 + $0xa8] sm:$0xf]
    %v3052 = vld [vmem:[%s5 + $0xac] sm:$0xf]
    %v3053 = vld [vmem:[%s5 + $0xb0] sm:$0xf]
    %v3054 = vld [vmem:[%s5 + $0xb4] sm:$0xf]
    %v3055 = vld [vmem:[%s5 + $0xb8] sm:$0xf]
    %v3056 = vld [vmem:[%s5 + $0xbc] sm:$0xf]
    %v3063 = vunpack.c.l.b16 %v3051
    %v3064 = vunpack.c.l.b16 %v3052
    %v3065 = vunpack.c.l.b16 %v3053
    %v3066 = vunpack.c.l.b16 %v3054
    %v3067 = vunpack.c.l.b16 %v3055
    %v3068 = vunpack.c.l.b16 %v3056
    %v3069 = vpack.c.b16 %v3064, %v3063
    %v3070 = vpack.c.b16 %v3066, %v3065
    %v3071 = vpack.c.b16 %v3068, %v3067
    %v3076 = vsel %vm2386, %v3049, 0
    %v3079 = vsel %vm2386, %v3050, 0
    %3081 = vmatprep.subr.bf16.mxu0 0
    %3082 = vmatpush1.bf16.msra.mxu0 %v3069
    %3083 = vmatprep.subr.bf16.mxu0 0
    %3084 = vmatpush1.bf16.msra.mxu0 %v3070
    %3085 = vmatprep.subr.bf16.mxu0 0
    %3086 = vmatpush1.bf16.msra.mxu0 %v3071
    %3087 = vmatprep.subr.bf16.mxu0 0
    %3088 = vmatpush1.bf16.msra.mxu0 0
    %3089 = vmatprep.subr.bf16.mxu0 0
    %3090 = vmatpush1.bf16.msra.mxu0 0
    %3091 = vmatprep.subr.bf16.mxu0 0
    %3092 = vmatpush1.bf16.msra.mxu0 0
    %3093 = vmatprep.subr.bf16.mxu0 0
    %3094 = vmatpush1.bf16.msra.mxu0 0
    %3095 = vmatprep.subr.bf16.mxu0 0
    %3096 = vmatpush1.bf16.msra.mxu0 0
    %3097 = vmatprep.subr.bf16.mxu0 0
    %3098 = vmatpush1.bf16.msra.mxu0 0
    %3099 = vmatprep.subr.bf16.mxu0 0
    %3100 = vmatpush1.bf16.msra.mxu0 0
    %3101 = vmatprep.subr.bf16.mxu0 0
    %3102 = vmatpush1.bf16.msra.mxu0 0
    %3103 = vmatprep.subr.bf16.mxu0 0
    %3104 = vmatpush1.bf16.msra.mxu0 0
    %3105 = vmatprep.subr.bf16.mxu0 0
    %3106 = vmatpush1.bf16.msra.mxu0 0
    %3107 = vmatprep.subr.bf16.mxu0 0
    %3108 = vmatpush1.bf16.msra.mxu0 0
    %3109 = vmatprep.subr.bf16.mxu0 0
    %3110 = vmatpush1.bf16.msra.mxu0 0
    %3111 = vmatprep.subr.bf16.mxu0 0
    %3112 = vmatpush1.bf16.msra.mxu0 0
    %3113 = vmatprep.mubr.bf16.mxu0 0
    %3114 = vmatmul.mubr.bf16.gmra.mrb[0].mxu0 %v3076
    %v3115 = vpop.f32.mrb[0].mxu0
    %v3116 = vadd.f32 0.0, %v3115
    %v3117 = vpop.f32.mrb[0].mxu0
    %v3118 = vpop.f32.mrb[0].mxu0
    %v3119 = vadd.f32 0.0, %v3118
    %v3120 = vpop.f32.mrb[0].mxu0
    %3121 = vmatprep.mubr.bf16.mxu0 0
    %3122 = vmatmul.mubr.bf16.gmra.mrb[0].mxu0 %v3079
    %v3123 = vpop.f32.mrb[0].mxu0
    %v3124 = vadd.f32 0.0, %v3123
    %v3125 = vpop.f32.mrb[0].mxu0
    %v3126 = vpop.f32.mrb[0].mxu0
    %v3127 = vpop.f32.mrb[0].mxu0
    %3128 = vdwg.mxu0
    %v3129 = vadd.f32 %v3043, %v3116
    %v3130 = vadd.f32 %v3044, %v3119
    %v3131 = vadd.f32 %v3045, %v3124
    %v3132 = vld [vmem:[%s6] sm:$0x1]
    %v3134 = vlaneseq
    %v3135 = vshrl.u32 %v3134, 7
    %v3136 = vsub.s32 0, %v3135
    %v3137 = vrot.slane %v3132, %v3136
    %v3139 = vadd.f32 %v3129, %v3137
    %v3140 = vadd.f32 %v3130, %v3137
    %v3141 = vadd.f32 %v3131, %v3137
    %v3142 = vmax.f32 %v3139, 0.0
    %v3143 = vmax.f32 %v3140, 0.0
    %v3144 = vmax.f32 %v3141, 0.0
    %vm3145 = vcmask 785408
    %3146 = vst.msk [vmem:[#allocation6] sm:$0xff] %vm3145, %v3142
    %3147 = vst.msk [vmem:[#allocation6 + $0x8] sm:$0xff] %vm3145, %v3143
    %vm3148 = vcmask 780288
    %3149 = vst.msk [vmem:[#allocation6 + $0x10] sm:$0x7] %vm3148, %v3144
    %v3150 = vld [vmem:[#allocation6] ss:$13 sm:$0x3]
    %v3151 = vpack.c.bf16 %v3150, %v3150
    %v3152 = vld [vmem:[%s7] sm:$0xff]
    %v3153 = vld [vmem:[%s7 + $0x8] sm:$0xff]
    %v3154 = vld [vmem:[%s7 + $0x10] sm:$0xff]
    %v3155 = vld [vmem:[%s7 + $0x18] sm:$0xff]
    %v3156 = vld [vmem:[%s7 + $0x20] sm:$0xff]
    %v3157 = vld [vmem:[%s7 + $0x28] sm:$0xff]
    %v3158 = vld [vmem:[%s7 + $0x30] sm:$0xff]
    %v3159 = vld [vmem:[%s7 + $0x38] sm:$0xff]
    %v3160 = vld [vmem:[%s7 + $0x40] sm:$0xff]
    %v3161 = vld [vmem:[%s7 + $0x48] sm:$0xff]
    %v3162 = vld [vmem:[%s7 + $0x50] sm:$0xff]
    %v3163 = vld [vmem:[%s7 + $0x58] sm:$0xff]
    %v3164 = vld [vmem:[%s7 + $0x60] sm:$0xff]
    %v3165 = vld [vmem:[%s7 + $0x68] sm:$0xff]
    %v3166 = vld [vmem:[%s7 + $0x70] sm:$0xff]
    %v3167 = vld [vmem:[%s7 + $0x78] sm:$0xff]
    %v3168 = vld [vmem:[%s7 + $0x80] sm:$0xff]
    %v3169 = vld [vmem:[%s7 + $0x88] sm:$0xff]
    %v3170 = vld [vmem:[%s7 + $0x90] sm:$0xff]
    %v3171 = vld [vmem:[%s7 + $0x98] sm:$0xff]
    %v3172 = vld [vmem:[%s7 + $0xa0] sm:$0xff]
    %v3173 = vld [vmem:[%s7 + $0xa8] sm:$0xff]
    %v3174 = vld [vmem:[%s7 + $0xb0] sm:$0xff]
    %v3175 = vld [vmem:[%s7 + $0xb8] sm:$0xff]
    %v3176 = vld [vmem:[%s7 + $0xc0] sm:$0xff]
    %v3177 = vld [vmem:[%s7 + $0xc8] sm:$0xff]
    %v3178 = vld [vmem:[%s7 + $0xd0] sm:$0xff]
    %v3179 = vld [vmem:[%s7 + $0xd8] sm:$0xff]
    %v3180 = vld [vmem:[%s7 + $0xe0] sm:$0xff]
    %v3181 = vld [vmem:[%s7 + $0xe8] sm:$0xff]
    %v3182 = vld [vmem:[%s7 + $0xf0] sm:$0xff]
    %v3183 = vld [vmem:[%s7 + $0xf8] sm:$0xff]
    %v3184 = vld [vmem:[%s7 + $0x100] sm:$0xff]
    %v3185 = vld [vmem:[%s7 + $0x108] sm:$0xff]
    %v3186 = vld [vmem:[%s7 + $0x110] sm:$0xff]
    %v3187 = vld [vmem:[%s7 + $0x118] sm:$0xff]
    %v3188 = vld [vmem:[%s7 + $0x120] sm:$0xff]
    %v3189 = vld [vmem:[%s7 + $0x128] sm:$0xff]
    %v3190 = vld [vmem:[%s7 + $0x130] sm:$0xff]
    %v3191 = vld [vmem:[%s7 + $0x138] sm:$0xff]
    %v3192 = vld [vmem:[%s7 + $0x140] sm:$0xff]
    %v3193 = vld [vmem:[%s7 + $0x148] sm:$0xff]
    %v3194 = vld [vmem:[%s7 + $0x150] sm:$0xff]
    %v3195 = vld [vmem:[%s7 + $0x158] sm:$0xff]
    %v3196 = vld [vmem:[%s7 + $0x160] sm:$0xff]
    %v3197 = vld [vmem:[%s7 + $0x168] sm:$0xff]
    %v3198 = vld [vmem:[%s7 + $0x170] sm:$0xff]
    %v3199 = vld [vmem:[%s7 + $0x178] sm:$0xff]
    %s3200 = scalar_lea.vmem [#allocation6], 1
    %v3201 = vld [vmem:[%s3200] ss:$13 sm:$0x3]
    %v3202 = vpack.c.bf16 %v3201, %v3201
    %s3203 = scalar_lea.vmem %s7, 384
    %v3204 = vld [vmem:[%s3203] sm:$0xff]
    %v3205 = vld [vmem:[%s3203 + $0x8] sm:$0xff]
    %v3206 = vld [vmem:[%s3203 + $0x10] sm:$0xff]
    %v3207 = vld [vmem:[%s3203 + $0x18] sm:$0xff]
    %v3208 = vld [vmem:[%s3203 + $0x20] sm:$0xff]
    %v3209 = vld [vmem:[%s3203 + $0x28] sm:$0xff]
    %v3210 = vld [vmem:[%s3203 + $0x30] sm:$0xff]
    %v3211 = vld [vmem:[%s3203 + $0x38] sm:$0xff]
    %v3212 = vld [vmem:[%s3203 + $0x40] sm:$0xff]
    %v3213 = vld [vmem:[%s3203 + $0x48] sm:$0xff]
    %v3214 = vld [vmem:[%s3203 + $0x50] sm:$0xff]
    %v3215 = vld [vmem:[%s3203 + $0x58] sm:$0xff]
    %v3216 = vld [vmem:[%s3203 + $0x60] sm:$0xff]
    %v3217 = vld [vmem:[%s3203 + $0x68] sm:$0xff]
    %v3218 = vld [vmem:[%s3203 + $0x70] sm:$0xff]
    %v3219 = vld [vmem:[%s3203 + $0x78] sm:$0xff]
    %v3220 = vld [vmem:[%s3203 + $0x80] sm:$0xff]
    %v3221 = vld [vmem:[%s3203 + $0x88] sm:$0xff]
    %v3222 = vld [vmem:[%s3203 + $0x90] sm:$0xff]
    %v3223 = vld [vmem:[%s3203 + $0x98] sm:$0xff]
    %v3224 = vld [vmem:[%s3203 + $0xa0] sm:$0xff]
    %v3225 = vld [vmem:[%s3203 + $0xa8] sm:$0xff]
    %v3226 = vld [vmem:[%s3203 + $0xb0] sm:$0xff]
    %v3227 = vld [vmem:[%s3203 + $0xb8] sm:$0xff]
    %v3228 = vld [vmem:[%s3203 + $0xc0] sm:$0xff]
    %v3229 = vld [vmem:[%s3203 + $0xc8] sm:$0xff]
    %v3230 = vld [vmem:[%s3203 + $0xd0] sm:$0xff]
    %v3231 = vld [vmem:[%s3203 + $0xd8] sm:$0xff]
    %v3232 = vld [vmem:[%s3203 + $0xe0] sm:$0xff]
    %v3233 = vld [vmem:[%s3203 + $0xe8] sm:$0xff]
    %v3234 = vld [vmem:[%s3203 + $0xf0] sm:$0xff]
    %v3235 = vld [vmem:[%s3203 + $0xf8] sm:$0xff]
    %v3236 = vld [vmem:[%s3203 + $0x100] sm:$0xff]
    %v3237 = vld [vmem:[%s3203 + $0x108] sm:$0xff]
    %v3238 = vld [vmem:[%s3203 + $0x110] sm:$0xff]
    %v3239 = vld [vmem:[%s3203 + $0x118] sm:$0xff]
    %v3240 = vld [vmem:[%s3203 + $0x120] sm:$0xff]
    %v3241 = vld [vmem:[%s3203 + $0x128] sm:$0xff]
    %v3242 = vld [vmem:[%s3203 + $0x130] sm:$0xff]
    %v3243 = vld [vmem:[%s3203 + $0x138] sm:$0xff]
    %v3244 = vld [vmem:[%s3203 + $0x140] sm:$0xff]
    %v3245 = vld [vmem:[%s3203 + $0x148] sm:$0xff]
    %v3246 = vld [vmem:[%s3203 + $0x150] sm:$0xff]
    %v3247 = vld [vmem:[%s3203 + $0x158] sm:$0xff]
    %v3248 = vld [vmem:[%s3203 + $0x160] sm:$0xff]
    %v3249 = vld [vmem:[%s3203 + $0x168] sm:$0xff]
    %v3250 = vld [vmem:[%s3203 + $0x170] sm:$0xff]
    %v3251 = vld [vmem:[%s3203 + $0x178] sm:$0xff]
    %v3300 = vunpack.c.l.b16 %v3204
    %v3301 = vunpack.c.h.b16 %v3204
    %v3302 = vunpack.c.l.b16 %v3205
    %v3303 = vunpack.c.h.b16 %v3205
    %v3304 = vunpack.c.l.b16 %v3206
    %v3305 = vunpack.c.h.b16 %v3206
    %v3306 = vunpack.c.l.b16 %v3207
    %v3307 = vunpack.c.h.b16 %v3207
    %v3308 = vunpack.c.l.b16 %v3208
    %v3309 = vunpack.c.h.b16 %v3208
    %v3310 = vunpack.c.l.b16 %v3209
    %v3311 = vunpack.c.h.b16 %v3209
    %v3312 = vunpack.c.l.b16 %v3210
    %v3313 = vunpack.c.h.b16 %v3210
    %v3314 = vunpack.c.l.b16 %v3211
    %v3315 = vunpack.c.h.b16 %v3211
    %v3316 = vunpack.c.l.b16 %v3212
    %v3317 = vunpack.c.h.b16 %v3212
    %v3318 = vunpack.c.l.b16 %v3213
    %v3319 = vunpack.c.h.b16 %v3213
    %v3320 = vunpack.c.l.b16 %v3214
    %v3321 = vunpack.c.h.b16 %v3214
    %v3322 = vunpack.c.l.b16 %v3215
    %v3323 = vunpack.c.h.b16 %v3215
    %v3324 = vunpack.c.l.b16 %v3216
    %v3325 = vunpack.c.h.b16 %v3216
    %v3326 = vunpack.c.l.b16 %v3217
    %v3327 = vunpack.c.h.b16 %v3217
    %v3328 = vunpack.c.l.b16 %v3218
    %v3329 = vunpack.c.h.b16 %v3218
    %v3330 = vunpack.c.l.b16 %v3219
    %v3331 = vunpack.c.h.b16 %v3219
    %v3332 = vunpack.c.l.b16 %v3220
    %v3333 = vunpack.c.h.b16 %v3220
    %v3334 = vunpack.c.l.b16 %v3221
    %v3335 = vunpack.c.h.b16 %v3221
    %v3336 = vunpack.c.l.b16 %v3222
    %v3337 = vunpack.c.h.b16 %v3222
    %v3338 = vunpack.c.l.b16 %v3223
    %v3339 = vunpack.c.h.b16 %v3223
    %v3340 = vunpack.c.l.b16 %v3224
    %v3341 = vunpack.c.h.b16 %v3224
    %v3342 = vunpack.c.l.b16 %v3225
    %v3343 = vunpack.c.h.b16 %v3225
    %v3344 = vunpack.c.l.b16 %v3226
    %v3345 = vunpack.c.h.b16 %v3226
    %v3346 = vunpack.c.l.b16 %v3227
    %v3347 = vunpack.c.h.b16 %v3227
    %v3348 = vunpack.c.l.b16 %v3228
    %v3349 = vunpack.c.h.b16 %v3228
    %v3350 = vunpack.c.l.b16 %v3229
    %v3351 = vunpack.c.h.b16 %v3229
    %v3352 = vunpack.c.l.b16 %v3230
    %v3353 = vunpack.c.h.b16 %v3230
    %v3354 = vunpack.c.l.b16 %v3231
    %v3355 = vunpack.c.h.b16 %v3231
    %v3356 = vunpack.c.l.b16 %v3232
    %v3357 = vunpack.c.h.b16 %v3232
    %v3358 = vunpack.c.l.b16 %v3233
    %v3359 = vunpack.c.h.b16 %v3233
    %v3360 = vunpack.c.l.b16 %v3234
    %v3361 = vunpack.c.h.b16 %v3234
    %v3362 = vunpack.c.l.b16 %v3235
    %v3363 = vunpack.c.h.b16 %v3235
    %v3364 = vunpack.c.l.b16 %v3236
    %v3365 = vunpack.c.h.b16 %v3236
    %v3366 = vunpack.c.l.b16 %v3237
    %v3367 = vunpack.c.h.b16 %v3237
    %v3368 = vunpack.c.l.b16 %v3238
    %v3369 = vunpack.c.h.b16 %v3238
    %v3370 = vunpack.c.l.b16 %v3239
    %v3371 = vunpack.c.h.b16 %v3239
    %v3372 = vunpack.c.l.b16 %v3240
    %v3373 = vunpack.c.h.b16 %v3240
    %v3374 = vunpack.c.l.b16 %v3241
    %v3375 = vunpack.c.h.b16 %v3241
    %v3376 = vunpack.c.l.b16 %v3242
    %v3377 = vunpack.c.h.b16 %v3242
    %v3378 = vunpack.c.l.b16 %v3243
    %v3379 = vunpack.c.h.b16 %v3243
    %v3380 = vunpack.c.l.b16 %v3244
    %v3381 = vunpack.c.h.b16 %v3244
    %v3382 = vunpack.c.l.b16 %v3245
    %v3383 = vunpack.c.h.b16 %v3245
    %v3384 = vunpack.c.l.b16 %v3246
    %v3385 = vunpack.c.h.b16 %v3246
    %v3386 = vunpack.c.l.b16 %v3247
    %v3387 = vunpack.c.h.b16 %v3247
    %v3388 = vunpack.c.l.b16 %v3248
    %v3389 = vunpack.c.h.b16 %v3248
    %v3390 = vunpack.c.l.b16 %v3249
    %v3391 = vunpack.c.h.b16 %v3249
    %v3392 = vunpack.c.l.b16 %v3250
    %v3393 = vunpack.c.h.b16 %v3250
    %v3394 = vunpack.c.l.b16 %v3251
    %v3395 = vunpack.c.h.b16 %v3251
    %v3396 = vpack.c.b16 %v3308, %v3300
    %v3397 = vpack.c.b16 %v3309, %v3301
    %v3398 = vpack.c.b16 %v3310, %v3302
    %v3399 = vpack.c.b16 %v3311, %v3303
    %v3400 = vpack.c.b16 %v3312, %v3304
    %v3401 = vpack.c.b16 %v3313, %v3305
    %v3402 = vpack.c.b16 %v3314, %v3306
    %v3403 = vpack.c.b16 %v3315, %v3307
    %v3404 = vpack.c.b16 %v3324, %v3316
    %v3405 = vpack.c.b16 %v3325, %v3317
    %v3406 = vpack.c.b16 %v3326, %v3318
    %v3407 = vpack.c.b16 %v3327, %v3319
    %v3408 = vpack.c.b16 %v3328, %v3320
    %v3409 = vpack.c.b16 %v3329, %v3321
    %v3410 = vpack.c.b16 %v3330, %v3322
    %v3411 = vpack.c.b16 %v3331, %v3323
    %v3412 = vpack.c.b16 %v3340, %v3332
    %v3413 = vpack.c.b16 %v3341, %v3333
    %v3414 = vpack.c.b16 %v3342, %v3334
    %v3415 = vpack.c.b16 %v3343, %v3335
    %v3416 = vpack.c.b16 %v3344, %v3336
    %v3417 = vpack.c.b16 %v3345, %v3337
    %v3418 = vpack.c.b16 %v3346, %v3338
    %v3419 = vpack.c.b16 %v3347, %v3339
    %v3420 = vpack.c.b16 %v3356, %v3348
    %v3421 = vpack.c.b16 %v3357, %v3349
    %v3422 = vpack.c.b16 %v3358, %v3350
    %v3423 = vpack.c.b16 %v3359, %v3351
    %v3424 = vpack.c.b16 %v3360, %v3352
    %v3425 = vpack.c.b16 %v3361, %v3353
    %v3426 = vpack.c.b16 %v3362, %v3354
    %v3427 = vpack.c.b16 %v3363, %v3355
    %v3428 = vpack.c.b16 %v3372, %v3364
    %v3429 = vpack.c.b16 %v3373, %v3365
    %v3430 = vpack.c.b16 %v3374, %v3366
    %v3431 = vpack.c.b16 %v3375, %v3367
    %v3432 = vpack.c.b16 %v3376, %v3368
    %v3433 = vpack.c.b16 %v3377, %v3369
    %v3434 = vpack.c.b16 %v3378, %v3370
    %v3435 = vpack.c.b16 %v3379, %v3371
    %v3436 = vpack.c.b16 %v3388, %v3380
    %v3437 = vpack.c.b16 %v3389, %v3381
    %v3438 = vpack.c.b16 %v3390, %v3382
    %v3439 = vpack.c.b16 %v3391, %v3383
    %v3440 = vpack.c.b16 %v3392, %v3384
    %v3441 = vpack.c.b16 %v3393, %v3385
    %v3442 = vpack.c.b16 %v3394, %v3386
    %v3443 = vpack.c.b16 %v3395, %v3387
    %v3493 = vsel %vm3145, %v3202, 0
    %3495 = vmatprep.subr.bf16.mxu0 %v3397
    %3496 = vmatpush1.bf16.msra.mxu0 %v3396
    %3497 = vmatprep.subr.bf16.mxu0 %v3405
    %3498 = vmatpush1.bf16.msra.mxu0 %v3404
    %3499 = vmatprep.subr.bf16.mxu0 %v3413
    %3500 = vmatpush1.bf16.msra.mxu0 %v3412
    %3501 = vmatprep.subr.bf16.mxu0 %v3421
    %3502 = vmatpush1.bf16.msra.mxu0 %v3420
    %3503 = vmatprep.subr.bf16.mxu0 %v3429
    %3504 = vmatpush1.bf16.msra.mxu0 %v3428
    %3505 = vmatprep.subr.bf16.mxu0 %v3437
    %3506 = vmatpush1.bf16.msra.mxu0 %v3436
    %3507 = vmatprep.subr.bf16.mxu0 0
    %3508 = vmatpush1.bf16.msra.mxu0 0
    %3509 = vmatprep.subr.bf16.mxu0 0
    %3510 = vmatpush1.bf16.msra.mxu0 0
    %3511 = vmatprep.subr.bf16.mxu0 0
    %3512 = vmatpush1.bf16.msra.mxu0 0
    %3513 = vmatprep.subr.bf16.mxu0 0
    %3514 = vmatpush1.bf16.msra.mxu0 0
    %3515 = vmatprep.subr.bf16.mxu0 0
    %3516 = vmatpush1.bf16.msra.mxu0 0
    %3517 = vmatprep.subr.bf16.mxu0 0
    %3518 = vmatpush1.bf16.msra.mxu0 0
    %3519 = vmatprep.subr.bf16.mxu0 0
    %3520 = vmatpush1.bf16.msra.mxu0 0
    %3521 = vmatprep.subr.bf16.mxu0 0
    %3522 = vmatpush1.bf16.msra.mxu0 0
    %3523 = vmatprep.subr.bf16.mxu0 0
    %3524 = vmatpush1.bf16.msra.mxu0 0
    %3525 = vmatprep.subr.bf16.mxu0 0
    %3526 = vmatpush1.bf16.msra.mxu0 0
    %3527 = vmatprep.mubr.bf16.mxu0 0
    %3528 = vmatmul.mubr.bf16.gmra.mrb[0].mxu0 %v3493
    %v3529 = vpop.f32.mrb[0].mxu0
    %v3530 = vadd.f32 0.0, %v3529
    %v3531 = vpop.f32.mrb[0].mxu0
    %v3532 = vadd.f32 0.0, %v3531
    %v3533 = vpop.f32.mrb[0].mxu0
    %v3534 = vpop.f32.mrb[0].mxu0
    %3535 = vdwg.mxu0
    %3536 = vmatprep.subr.bf16.mxu0 %v3399
    %3537 = vmatpush1.bf16.msra.mxu0 %v3398
    %3538 = vmatprep.subr.bf16.mxu0 %v3407
    %3539 = vmatpush1.bf16.msra.mxu0 %v3406
    %3540 = vmatprep.subr.bf16.mxu0 %v3415
    %3541 = vmatpush1.bf16.msra.mxu0 %v3414
    %3542 = vmatprep.subr.bf16.mxu0 %v3423
    %3543 = vmatpush1.bf16.msra.mxu0 %v3422
    %3544 = vmatprep.subr.bf16.mxu0 %v3431
    %3545 = vmatpush1.bf16.msra.mxu0 %v3430
    %3546 = vmatprep.subr.bf16.mxu0 %v3439
    %3547 = vmatpush1.bf16.msra.mxu0 %v3438
    %3548 = vmatprep.subr.bf16.mxu0 0
    %3549 = vmatpush1.bf16.msra.mxu0 0
    %3550 = vmatprep.subr.bf16.mxu0 0
    %3551 = vmatpush1.bf16.msra.mxu0 0
    %3552 = vmatprep.subr.bf16.mxu0 0
    %3553 = vmatpush1.bf16.msra.mxu0 0
    %3554 = vmatprep.subr.bf16.mxu0 0
    %3555 = vmatpush1.bf16.msra.mxu0 0
    %3556 = vmatprep.subr.bf16.mxu0 0
    %3557 = vmatpush1.bf16.msra.mxu0 0
    %3558 = vmatprep.subr.bf16.mxu0 0
    %3559 = vmatpush1.bf16.msra.mxu0 0
    %3560 = vmatprep.subr.bf16.mxu0 0
    %3561 = vmatpush1.bf16.msra.mxu0 0
    %3562 = vmatprep.subr.bf16.mxu0 0
    %3563 = vmatpush1.bf16.msra.mxu0 0
    %3564 = vmatprep.subr.bf16.mxu0 0
    %3565 = vmatpush1.bf16.msra.mxu0 0
    %3566 = vmatprep.subr.bf16.mxu0 0
    %3567 = vmatpush1.bf16.msra.mxu0 0
    %3568 = vmatprep.mubr.bf16.mxu0 0
    %3569 = vmatmul.mubr.bf16.gmra.mrb[0].mxu0 %v3493
    %v3570 = vpop.f32.mrb[0].mxu0
    %v3571 = vadd.f32 0.0, %v3570
    %v3572 = vpop.f32.mrb[0].mxu0
    %v3573 = vadd.f32 0.0, %v3572
    %v3574 = vpop.f32.mrb[0].mxu0
    %v3575 = vpop.f32.mrb[0].mxu0
    %3576 = vdwg.mxu0
    %3577 = vmatprep.subr.bf16.mxu0 %v3401
    %3578 = vmatpush1.bf16.msra.mxu0 %v3400
    %3579 = vmatprep.subr.bf16.mxu0 %v3409
    %3580 = vmatpush1.bf16.msra.mxu0 %v3408
    %3581 = vmatprep.subr.bf16.mxu0 %v3417
    %3582 = vmatpush1.bf16.msra.mxu0 %v3416
    %3583 = vmatprep.subr.bf16.mxu0 %v3425
    %3584 = vmatpush1.bf16.msra.mxu0 %v3424
    %3585 = vmatprep.subr.bf16.mxu0 %v3433
    %3586 = vmatpush1.bf16.msra.mxu0 %v3432
    %3587 = vmatprep.subr.bf16.mxu0 %v3441
    %3588 = vmatpush1.bf16.msra.mxu0 %v3440
    %3589 = vmatprep.subr.bf16.mxu0 0
    %3590 = vmatpush1.bf16.msra.mxu0 0
    %3591 = vmatprep.subr.bf16.mxu0 0
    %3592 = vmatpush1.bf16.msra.mxu0 0
    %3593 = vmatprep.subr.bf16.mxu0 0
    %3594 = vmatpush1.bf16.msra.mxu0 0
    %3595 = vmatprep.subr.bf16.mxu0 0
    %3596 = vmatpush1.bf16.msra.mxu0 0
    %3597 = vmatprep.subr.bf16.mxu0 0
    %3598 = vmatpush1.bf16.msra.mxu0 0
    %3599 = vmatprep.subr.bf16.mxu0 0
    %3600 = vmatpush1.bf16.msra.mxu0 0
    %3601 = vmatprep.subr.bf16.mxu0 0
    %3602 = vmatpush1.bf16.msra.mxu0 0
    %3603 = vmatprep.subr.bf16.mxu0 0
    %3604 = vmatpush1.bf16.msra.mxu0 0
    %3605 = vmatprep.subr.bf16.mxu0 0
    %3606 = vmatpush1.bf16.msra.mxu0 0
    %3607 = vmatprep.subr.bf16.mxu0 0
    %3608 = vmatpush1.bf16.msra.mxu0 0
    %3609 = vmatprep.mubr.bf16.mxu0 0
    %3610 = vmatmul.mubr.bf16.gmra.mrb[0].mxu0 %v3493
    %v3611 = vpop.f32.mrb[0].mxu0
    %v3612 = vadd.f32 0.0, %v3611
    %v3613 = vpop.f32.mrb[0].mxu0
    %v3614 = vadd.f32 0.0, %v3613
    %v3615 = vpop.f32.mrb[0].mxu0
    %v3616 = vpop.f32.mrb[0].mxu0
    %3617 = vdwg.mxu0
    %3618 = vmatprep.subr.bf16.mxu0 %v3403
    %3619 = vmatpush1.bf16.msra.mxu0 %v3402
    %3620 = vmatprep.subr.bf16.mxu0 %v3411
    %3621 = vmatpush1.bf16.msra.mxu0 %v3410
    %3622 = vmatprep.subr.bf16.mxu0 %v3419
    %3623 = vmatpush1.bf16.msra.mxu0 %v3418
    %3624 = vmatprep.subr.bf16.mxu0 %v3427
    %3625 = vmatpush1.bf16.msra.mxu0 %v3426
    %3626 = vmatprep.subr.bf16.mxu0 %v3435
    %3627 = vmatpush1.bf16.msra.mxu0 %v3434
    %3628 = vmatprep.subr.bf16.mxu0 %v3443
    %3629 = vmatpush1.bf16.msra.mxu0 %v3442
    %3630 = vmatprep.subr.bf16.mxu0 0
    %3631 = vmatpush1.bf16.msra.mxu0 0
    %3632 = vmatprep.subr.bf16.mxu0 0
    %3633 = vmatpush1.bf16.msra.mxu0 0
    %3634 = vmatprep.subr.bf16.mxu0 0
    %3635 = vmatpush1.bf16.msra.mxu0 0
    %3636 = vmatprep.subr.bf16.mxu0 0
    %3637 = vmatpush1.bf16.msra.mxu0 0
    %3638 = vmatprep.subr.bf16.mxu0 0
    %3639 = vmatpush1.bf16.msra.mxu0 0
    %3640 = vmatprep.subr.bf16.mxu0 0
    %3641 = vmatpush1.bf16.msra.mxu0 0
    %3642 = vmatprep.subr.bf16.mxu0 0
    %3643 = vmatpush1.bf16.msra.mxu0 0
    %3644 = vmatprep.subr.bf16.mxu0 0
    %3645 = vmatpush1.bf16.msra.mxu0 0
    %3646 = vmatprep.subr.bf16.mxu0 0
    %3647 = vmatpush1.bf16.msra.mxu0 0
    %3648 = vmatprep.subr.bf16.mxu0 0
    %3649 = vmatpush1.bf16.msra.mxu0 0
    %3650 = vmatprep.mubr.bf16.mxu0 0
    %3651 = vmatmul.mubr.bf16.gmra.mrb[0].mxu0 %v3493
    %v3652 = vpop.f32.mrb[0].mxu0
    %v3653 = vadd.f32 0.0, %v3652
    %v3654 = vpop.f32.mrb[0].mxu0
    %v3655 = vadd.f32 0.0, %v3654
    %v3656 = vpop.f32.mrb[0].mxu0
    %v3657 = vpop.f32.mrb[0].mxu0
    %3658 = vdwg.mxu0
    %v3707 = vunpack.c.l.b16 %v3152
    %v3708 = vunpack.c.h.b16 %v3152
    %v3709 = vunpack.c.l.b16 %v3153
    %v3710 = vunpack.c.h.b16 %v3153
    %v3711 = vunpack.c.l.b16 %v3154
    %v3712 = vunpack.c.h.b16 %v3154
    %v3713 = vunpack.c.l.b16 %v3155
    %v3714 = vunpack.c.h.b16 %v3155
    %v3715 = vunpack.c.l.b16 %v3156
    %v3716 = vunpack.c.h.b16 %v3156
    %v3717 = vunpack.c.l.b16 %v3157
    %v3718 = vunpack.c.h.b16 %v3157
    %v3719 = vunpack.c.l.b16 %v3158
    %v3720 = vunpack.c.h.b16 %v3158
    %v3721 = vunpack.c.l.b16 %v3159
    %v3722 = vunpack.c.h.b16 %v3159
    %v3723 = vunpack.c.l.b16 %v3160
    %v3724 = vunpack.c.h.b16 %v3160
    %v3725 = vunpack.c.l.b16 %v3161
    %v3726 = vunpack.c.h.b16 %v3161
    %v3727 = vunpack.c.l.b16 %v3162
    %v3728 = vunpack.c.h.b16 %v3162
    %v3729 = vunpack.c.l.b16 %v3163
    %v3730 = vunpack.c.h.b16 %v3163
    %v3731 = vunpack.c.l.b16 %v3164
    %v3732 = vunpack.c.h.b16 %v3164
    %v3733 = vunpack.c.l.b16 %v3165
    %v3734 = vunpack.c.h.b16 %v3165
    %v3735 = vunpack.c.l.b16 %v3166
    %v3736 = vunpack.c.h.b16 %v3166
    %v3737 = vunpack.c.l.b16 %v3167
    %v3738 = vunpack.c.h.b16 %v3167
    %v3739 = vunpack.c.l.b16 %v3168
    %v3740 = vunpack.c.h.b16 %v3168
    %v3741 = vunpack.c.l.b16 %v3169
    %v3742 = vunpack.c.h.b16 %v3169
    %v3743 = vunpack.c.l.b16 %v3170
    %v3744 = vunpack.c.h.b16 %v3170
    %v3745 = vunpack.c.l.b16 %v3171
    %v3746 = vunpack.c.h.b16 %v3171
    %v3747 = vunpack.c.l.b16 %v3172
    %v3748 = vunpack.c.h.b16 %v3172
    %v3749 = vunpack.c.l.b16 %v3173
    %v3750 = vunpack.c.h.b16 %v3173
    %v3751 = vunpack.c.l.b16 %v3174
    %v3752 = vunpack.c.h.b16 %v3174
    %v3753 = vunpack.c.l.b16 %v3175
    %v3754 = vunpack.c.h.b16 %v3175
    %v3755 = vunpack.c.l.b16 %v3176
    %v3756 = vunpack.c.h.b16 %v3176
    %v3757 = vunpack.c.l.b16 %v3177
    %v3758 = vunpack.c.h.b16 %v3177
    %v3759 = vunpack.c.l.b16 %v3178
    %v3760 = vunpack.c.h.b16 %v3178
    %v3761 = vunpack.c.l.b16 %v3179
    %v3762 = vunpack.c.h.b16 %v3179
    %v3763 = vunpack.c.l.b16 %v3180
    %v3764 = vunpack.c.h.b16 %v3180
    %v3765 = vunpack.c.l.b16 %v3181
    %v3766 = vunpack.c.h.b16 %v3181
    %v3767 = vunpack.c.l.b16 %v3182
    %v3768 = vunpack.c.h.b16 %v3182
    %v3769 = vunpack.c.l.b16 %v3183
    %v3770 = vunpack.c.h.b16 %v3183
    %v3771 = vunpack.c.l.b16 %v3184
    %v3772 = vunpack.c.h.b16 %v3184
    %v3773 = vunpack.c.l.b16 %v3185
    %v3774 = vunpack.c.h.b16 %v3185
    %v3775 = vunpack.c.l.b16 %v3186
    %v3776 = vunpack.c.h.b16 %v3186
    %v3777 = vunpack.c.l.b16 %v3187
    %v3778 = vunpack.c.h.b16 %v3187
    %v3779 = vunpack.c.l.b16 %v3188
    %v3780 = vunpack.c.h.b16 %v3188
    %v3781 = vunpack.c.l.b16 %v3189
    %v3782 = vunpack.c.h.b16 %v3189
    %v3783 = vunpack.c.l.b16 %v3190
    %v3784 = vunpack.c.h.b16 %v3190
    %v3785 = vunpack.c.l.b16 %v3191
    %v3786 = vunpack.c.h.b16 %v3191
    %v3787 = vunpack.c.l.b16 %v3192
    %v3788 = vunpack.c.h.b16 %v3192
    %v3789 = vunpack.c.l.b16 %v3193
    %v3790 = vunpack.c.h.b16 %v3193
    %v3791 = vunpack.c.l.b16 %v3194
    %v3792 = vunpack.c.h.b16 %v3194
    %v3793 = vunpack.c.l.b16 %v3195
    %v3794 = vunpack.c.h.b16 %v3195
    %v3795 = vunpack.c.l.b16 %v3196
    %v3796 = vunpack.c.h.b16 %v3196
    %v3797 = vunpack.c.l.b16 %v3197
    %v3798 = vunpack.c.h.b16 %v3197
    %v3799 = vunpack.c.l.b16 %v3198
    %v3800 = vunpack.c.h.b16 %v3198
    %v3801 = vunpack.c.l.b16 %v3199
    %v3802 = vunpack.c.h.b16 %v3199
    %v3803 = vpack.c.b16 %v3715, %v3707
    %v3804 = vpack.c.b16 %v3716, %v3708
    %v3805 = vpack.c.b16 %v3717, %v3709
    %v3806 = vpack.c.b16 %v3718, %v3710
    %v3807 = vpack.c.b16 %v3719, %v3711
    %v3808 = vpack.c.b16 %v3720, %v3712
    %v3809 = vpack.c.b16 %v3721, %v3713
    %v3810 = vpack.c.b16 %v3722, %v3714
    %v3811 = vpack.c.b16 %v3731, %v3723
    %v3812 = vpack.c.b16 %v3732, %v3724
    %v3813 = vpack.c.b16 %v3733, %v3725
    %v3814 = vpack.c.b16 %v3734, %v3726
    %v3815 = vpack.c.b16 %v3735, %v3727
    %v3816 = vpack.c.b16 %v3736, %v3728
    %v3817 = vpack.c.b16 %v3737, %v3729
    %v3818 = vpack.c.b16 %v3738, %v3730
    %v3819 = vpack.c.b16 %v3747, %v3739
    %v3820 = vpack.c.b16 %v3748, %v3740
    %v3821 = vpack.c.b16 %v3749, %v3741
    %v3822 = vpack.c.b16 %v3750, %v3742
    %v3823 = vpack.c.b16 %v3751, %v3743
    %v3824 = vpack.c.b16 %v3752, %v3744
    %v3825 = vpack.c.b16 %v3753, %v3745
    %v3826 = vpack.c.b16 %v3754, %v3746
    %v3827 = vpack.c.b16 %v3763, %v3755
    %v3828 = vpack.c.b16 %v3764, %v3756
    %v3829 = vpack.c.b16 %v3765, %v3757
    %v3830 = vpack.c.b16 %v3766, %v3758
    %v3831 = vpack.c.b16 %v3767, %v3759
    %v3832 = vpack.c.b16 %v3768, %v3760
    %v3833 = vpack.c.b16 %v3769, %v3761
    %v3834 = vpack.c.b16 %v3770, %v3762
    %v3835 = vpack.c.b16 %v3779, %v3771
    %v3836 = vpack.c.b16 %v3780, %v3772
    %v3837 = vpack.c.b16 %v3781, %v3773
    %v3838 = vpack.c.b16 %v3782, %v3774
    %v3839 = vpack.c.b16 %v3783, %v3775
    %v3840 = vpack.c.b16 %v3784, %v3776
    %v3841 = vpack.c.b16 %v3785, %v3777
    %v3842 = vpack.c.b16 %v3786, %v3778
    %v3843 = vpack.c.b16 %v3795, %v3787
    %v3844 = vpack.c.b16 %v3796, %v3788
    %v3845 = vpack.c.b16 %v3797, %v3789
    %v3846 = vpack.c.b16 %v3798, %v3790
    %v3847 = vpack.c.b16 %v3799, %v3791
    %v3848 = vpack.c.b16 %v3800, %v3792
    %v3849 = vpack.c.b16 %v3801, %v3793
    %v3850 = vpack.c.b16 %v3802, %v3794
    %v3900 = vsel %vm3145, %v3151, 0
    %3902 = vmatprep.subr.bf16.mxu0 %v3804
    %3903 = vmatpush1.bf16.msra.mxu0 %v3803
    %3904 = vmatprep.subr.bf16.mxu0 %v3812
    %3905 = vmatpush1.bf16.msra.mxu0 %v3811
    %3906 = vmatprep.subr.bf16.mxu0 %v3820
    %3907 = vmatpush1.bf16.msra.mxu0 %v3819
    %3908 = vmatprep.subr.bf16.mxu0 %v3828
    %3909 = vmatpush1.bf16.msra.mxu0 %v3827
    %3910 = vmatprep.subr.bf16.mxu0 %v3836
    %3911 = vmatpush1.bf16.msra.mxu0 %v3835
    %3912 = vmatprep.subr.bf16.mxu0 %v3844
    %3913 = vmatpush1.bf16.msra.mxu0 %v3843
    %3914 = vmatprep.subr.bf16.mxu0 0
    %3915 = vmatpush1.bf16.msra.mxu0 0
    %3916 = vmatprep.subr.bf16.mxu0 0
    %3917 = vmatpush1.bf16.msra.mxu0 0
    %3918 = vmatprep.subr.bf16.mxu0 0
    %3919 = vmatpush1.bf16.msra.mxu0 0
    %3920 = vmatprep.subr.bf16.mxu0 0
    %3921 = vmatpush1.bf16.msra.mxu0 0
    %3922 = vmatprep.subr.bf16.mxu0 0
    %3923 = vmatpush1.bf16.msra.mxu0 0
    %3924 = vmatprep.subr.bf16.mxu0 0
    %3925 = vmatpush1.bf16.msra.mxu0 0
    %3926 = vmatprep.subr.bf16.mxu0 0
    %3927 = vmatpush1.bf16.msra.mxu0 0
    %3928 = vmatprep.subr.bf16.mxu0 0
    %3929 = vmatpush1.bf16.msra.mxu0 0
    %3930 = vmatprep.subr.bf16.mxu0 0
    %3931 = vmatpush1.bf16.msra.mxu0 0
    %3932 = vmatprep.subr.bf16.mxu0 0
    %3933 = vmatpush1.bf16.msra.mxu0 0
    %3934 = vmatprep.mubr.bf16.mxu0 0
    %3935 = vmatmul.mubr.bf16.gmra.mrb[0].mxu0 %v3900
    %v3936 = vpop.f32.mrb[0].mxu0
    %v3937 = vadd.f32 %v3530, %v3936
    %v3938 = vpop.f32.mrb[0].mxu0
    %v3939 = vadd.f32 %v3532, %v3938
    %v3940 = vpop.f32.mrb[0].mxu0
    %v3941 = vpop.f32.mrb[0].mxu0
    %3942 = vdwg.mxu0
    %3943 = vmatprep.subr.bf16.mxu0 %v3806
    %3944 = vmatpush1.bf16.msra.mxu0 %v3805
    %3945 = vmatprep.subr.bf16.mxu0 %v3814
    %3946 = vmatpush1.bf16.msra.mxu0 %v3813
    %3947 = vmatprep.subr.bf16.mxu0 %v3822
    %3948 = vmatpush1.bf16.msra.mxu0 %v3821
    %3949 = vmatprep.subr.bf16.mxu0 %v3830
    %3950 = vmatpush1.bf16.msra.mxu0 %v3829
    %3951 = vmatprep.subr.bf16.mxu0 %v3838
    %3952 = vmatpush1.bf16.msra.mxu0 %v3837
    %3953 = vmatprep.subr.bf16.mxu0 %v3846
    %3954 = vmatpush1.bf16.msra.mxu0 %v3845
    %3955 = vmatprep.subr.bf16.mxu0 0
    %3956 = vmatpush1.bf16.msra.mxu0 0
    %3957 = vmatprep.subr.bf16.mxu0 0
    %3958 = vmatpush1.bf16.msra.mxu0 0
    %3959 = vmatprep.subr.bf16.mxu0 0
    %3960 = vmatpush1.bf16.msra.mxu0 0
    %3961 = vmatprep.subr.bf16.mxu0 0
    %3962 = vmatpush1.bf16.msra.mxu0 0
    %3963 = vmatprep.subr.bf16.mxu0 0
    %3964 = vmatpush1.bf16.msra.mxu0 0
    %3965 = vmatprep.subr.bf16.mxu0 0
    %3966 = vmatpush1.bf16.msra.mxu0 0
    %3967 = vmatprep.subr.bf16.mxu0 0
    %3968 = vmatpush1.bf16.msra.mxu0 0
    %3969 = vmatprep.subr.bf16.mxu0 0
    %3970 = vmatpush1.bf16.msra.mxu0 0
    %3971 = vmatprep.subr.bf16.mxu0 0
    %3972 = vmatpush1.bf16.msra.mxu0 0
    %3973 = vmatprep.subr.bf16.mxu0 0
    %3974 = vmatpush1.bf16.msra.mxu0 0
    %3975 = vmatprep.mubr.bf16.mxu0 0
    %3976 = vmatmul.mubr.bf16.gmra.mrb[0].mxu0 %v3900
    %v3977 = vpop.f32.mrb[0].mxu0
    %v3978 = vadd.f32 %v3571, %v3977
    %v3979 = vpop.f32.mrb[0].mxu0
    %v3980 = vadd.f32 %v3573, %v3979
    %v3981 = vpop.f32.mrb[0].mxu0
    %v3982 = vpop.f32.mrb[0].mxu0
    %3983 = vdwg.mxu0
    %3984 = vmatprep.subr.bf16.mxu0 %v3808
    %3985 = vmatpush1.bf16.msra.mxu0 %v3807
    %3986 = vmatprep.subr.bf16.mxu0 %v3816
    %3987 = vmatpush1.bf16.msra.mxu0 %v3815
    %3988 = vmatprep.subr.bf16.mxu0 %v3824
    %3989 = vmatpush1.bf16.msra.mxu0 %v3823
    %3990 = vmatprep.subr.bf16.mxu0 %v3832
    %3991 = vmatpush1.bf16.msra.mxu0 %v3831
    %3992 = vmatprep.subr.bf16.mxu0 %v3840
    %3993 = vmatpush1.bf16.msra.mxu0 %v3839
    %3994 = vmatprep.subr.bf16.mxu0 %v3848
    %3995 = vmatpush1.bf16.msra.mxu0 %v3847
    %3996 = vmatprep.subr.bf16.mxu0 0
    %3997 = vmatpush1.bf16.msra.mxu0 0
    %3998 = vmatprep.subr.bf16.mxu0 0
    %3999 = vmatpush1.bf16.msra.mxu0 0
    %4000 = vmatprep.subr.bf16.mxu0 0
    %4001 = vmatpush1.bf16.msra.mxu0 0
    %4002 = vmatprep.subr.bf16.mxu0 0
    %4003 = vmatpush1.bf16.msra.mxu0 0
    %4004 = vmatprep.subr.bf16.mxu0 0
    %4005 = vmatpush1.bf16.msra.mxu0 0
    %4006 = vmatprep.subr.bf16.mxu0 0
    %4007 = vmatpush1.bf16.msra.mxu0 0
    %4008 = vmatprep.subr.bf16.mxu0 0
    %4009 = vmatpush1.bf16.msra.mxu0 0
    %4010 = vmatprep.subr.bf16.mxu0 0
    %4011 = vmatpush1.bf16.msra.mxu0 0
    %4012 = vmatprep.subr.bf16.mxu0 0
    %4013 = vmatpush1.bf16.msra.mxu0 0
    %4014 = vmatprep.subr.bf16.mxu0 0
    %4015 = vmatpush1.bf16.msra.mxu0 0
    %4016 = vmatprep.mubr.bf16.mxu0 0
    %4017 = vmatmul.mubr.bf16.gmra.mrb[0].mxu0 %v3900
    %v4018 = vpop.f32.mrb[0].mxu0
    %v4019 = vadd.f32 %v3612, %v4018
    %v4020 = vpop.f32.mrb[0].mxu0
    %v4021 = vadd.f32 %v3614, %v4020
    %v4022 = vpop.f32.mrb[0].mxu0
    %v4023 = vpop.f32.mrb[0].mxu0
    %4024 = vdwg.mxu0
    %4025 = vmatprep.subr.bf16.mxu0 %v3810
    %4026 = vmatpush1.bf16.msra.mxu0 %v3809
    %4027 = vmatprep.subr.bf16.mxu0 %v3818
    %4028 = vmatpush1.bf16.msra.mxu0 %v3817
    %4029 = vmatprep.subr.bf16.mxu0 %v3826
    %4030 = vmatpush1.bf16.msra.mxu0 %v3825
    %4031 = vmatprep.subr.bf16.mxu0 %v3834
    %4032 = vmatpush1.bf16.msra.mxu0 %v3833
    %4033 = vmatprep.subr.bf16.mxu0 %v3842
    %4034 = vmatpush1.bf16.msra.mxu0 %v3841
    %4035 = vmatprep.subr.bf16.mxu0 %v3850
    %4036 = vmatpush1.bf16.msra.mxu0 %v3849
    %4037 = vmatprep.subr.bf16.mxu0 0
    %4038 = vmatpush1.bf16.msra.mxu0 0
    %4039 = vmatprep.subr.bf16.mxu0 0
    %4040 = vmatpush1.bf16.msra.mxu0 0
    %4041 = vmatprep.subr.bf16.mxu0 0
    %4042 = vmatpush1.bf16.msra.mxu0 0
    %4043 = vmatprep.subr.bf16.mxu0 0
    %4044 = vmatpush1.bf16.msra.mxu0 0
    %4045 = vmatprep.subr.bf16.mxu0 0
    %4046 = vmatpush1.bf16.msra.mxu0 0
    %4047 = vmatprep.subr.bf16.mxu0 0
    %4048 = vmatpush1.bf16.msra.mxu0 0
    %4049 = vmatprep.subr.bf16.mxu0 0
    %4050 = vmatpush1.bf16.msra.mxu0 0
    %4051 = vmatprep.subr.bf16.mxu0 0
    %4052 = vmatpush1.bf16.msra.mxu0 0
    %4053 = vmatprep.subr.bf16.mxu0 0
    %4054 = vmatpush1.bf16.msra.mxu0 0
    %4055 = vmatprep.subr.bf16.mxu0 0
    %4056 = vmatpush1.bf16.msra.mxu0 0
    %4057 = vmatprep.mubr.bf16.mxu0 0
    %4058 = vmatmul.mubr.bf16.gmra.mrb[0].mxu0 %v3900
    %v4059 = vpop.f32.mrb[0].mxu0
    %v4060 = vadd.f32 %v3653, %v4059
    %v4061 = vpop.f32.mrb[0].mxu0
    %v4062 = vadd.f32 %v3655, %v4061
    %v4063 = vpop.f32.mrb[0].mxu0
    %v4064 = vpop.f32.mrb[0].mxu0
    %4065 = vdwg.mxu0
    %s4066 = scalar_lea.vmem [#allocation6], 2
    %v4067 = vld [vmem:[%s4066] ss:$13 sm:$0x3]
    %v4068 = vpack.c.bf16 %v4067, %v4067
    %s4069 = scalar_lea.vmem %s7, 768
    %v4070 = vld [vmem:[%s4069] sm:$0xff]
    %v4071 = vld [vmem:[%s4069 + $0x8] sm:$0xff]
    %v4072 = vld [vmem:[%s4069 + $0x10] sm:$0xff]
    %v4073 = vld [vmem:[%s4069 + $0x18] sm:$0xff]
    %v4074 = vld [vmem:[%s4069 + $0x20] sm:$0xff]
    %v4075 = vld [vmem:[%s4069 + $0x28] sm:$0xff]
    %v4076 = vld [vmem:[%s4069 + $0x30] sm:$0xff]
    %v4077 = vld [vmem:[%s4069 + $0x38] sm:$0xff]
    %v4078 = vld [vmem:[%s4069 + $0x40] sm:$0xff]
    %v4079 = vld [vmem:[%s4069 + $0x48] sm:$0xff]
    %v4080 = vld [vmem:[%s4069 + $0x50] sm:$0xff]
    %v4081 = vld [vmem:[%s4069 + $0x58] sm:$0xff]
    %v4082 = vld [vmem:[%s4069 + $0x60] sm:$0xff]
    %v4083 = vld [vmem:[%s4069 + $0x68] sm:$0xff]
    %v4084 = vld [vmem:[%s4069 + $0x70] sm:$0xff]
    %v4085 = vld [vmem:[%s4069 + $0x78] sm:$0xff]
    %v4086 = vld [vmem:[%s4069 + $0x80] sm:$0xff]
    %v4087 = vld [vmem:[%s4069 + $0x88] sm:$0xff]
    %v4088 = vld [vmem:[%s4069 + $0x90] sm:$0xff]
    %v4089 = vld [vmem:[%s4069 + $0x98] sm:$0xff]
    %v4090 = vld [vmem:[%s4069 + $0xa0] sm:$0xff]
    %v4091 = vld [vmem:[%s4069 + $0xa8] sm:$0xff]
    %v4092 = vld [vmem:[%s4069 + $0xb0] sm:$0xff]
    %v4093 = vld [vmem:[%s4069 + $0xb8] sm:$0xff]
    %v4094 = vld [vmem:[%s4069 + $0xc0] sm:$0xff]
    %v4095 = vld [vmem:[%s4069 + $0xc8] sm:$0xff]
    %v4096 = vld [vmem:[%s4069 + $0xd0] sm:$0xff]
    %v4097 = vld [vmem:[%s4069 + $0xd8] sm:$0xff]
    %v4098 = vld [vmem:[%s4069 + $0xe0] sm:$0xff]
    %v4099 = vld [vmem:[%s4069 + $0xe8] sm:$0xff]
    %v4100 = vld [vmem:[%s4069 + $0xf0] sm:$0xff]
    %v4101 = vld [vmem:[%s4069 + $0xf8] sm:$0xff]
    %v4102 = vld [vmem:[%s4069 + $0x100] sm:$0xff]
    %v4103 = vld [vmem:[%s4069 + $0x108] sm:$0xff]
    %v4104 = vld [vmem:[%s4069 + $0x110] sm:$0xff]
    %v4105 = vld [vmem:[%s4069 + $0x118] sm:$0xff]
    %v4106 = vld [vmem:[%s4069 + $0x120] sm:$0xff]
    %v4107 = vld [vmem:[%s4069 + $0x128] sm:$0xff]
    %v4108 = vld [vmem:[%s4069 + $0x130] sm:$0xff]
    %v4109 = vld [vmem:[%s4069 + $0x138] sm:$0xff]
    %v4110 = vld [vmem:[%s4069 + $0x140] sm:$0xff]
    %v4111 = vld [vmem:[%s4069 + $0x148] sm:$0xff]
    %v4112 = vld [vmem:[%s4069 + $0x150] sm:$0xff]
    %v4113 = vld [vmem:[%s4069 + $0x158] sm:$0xff]
    %v4114 = vld [vmem:[%s4069 + $0x160] sm:$0xff]
    %v4115 = vld [vmem:[%s4069 + $0x168] sm:$0xff]
    %v4116 = vld [vmem:[%s4069 + $0x170] sm:$0xff]
    %v4117 = vld [vmem:[%s4069 + $0x178] sm:$0xff]
    %v4166 = vunpack.c.l.b16 %v4070
    %v4167 = vunpack.c.h.b16 %v4070
    %v4168 = vunpack.c.l.b16 %v4071
    %v4169 = vunpack.c.h.b16 %v4071
    %v4170 = vunpack.c.l.b16 %v4072
    %v4171 = vunpack.c.h.b16 %v4072
    %v4172 = vunpack.c.l.b16 %v4073
    %v4173 = vunpack.c.h.b16 %v4073
    %v4174 = vunpack.c.l.b16 %v4074
    %v4175 = vunpack.c.h.b16 %v4074
    %v4176 = vunpack.c.l.b16 %v4075
    %v4177 = vunpack.c.h.b16 %v4075
    %v4178 = vunpack.c.l.b16 %v4076
    %v4179 = vunpack.c.h.b16 %v4076
    %v4180 = vunpack.c.l.b16 %v4077
    %v4181 = vunpack.c.h.b16 %v4077
    %v4182 = vunpack.c.l.b16 %v4078
    %v4183 = vunpack.c.h.b16 %v4078
    %v4184 = vunpack.c.l.b16 %v4079
    %v4185 = vunpack.c.h.b16 %v4079
    %v4186 = vunpack.c.l.b16 %v4080
    %v4187 = vunpack.c.h.b16 %v4080
    %v4188 = vunpack.c.l.b16 %v4081
    %v4189 = vunpack.c.h.b16 %v4081
    %v4190 = vunpack.c.l.b16 %v4082
    %v4191 = vunpack.c.h.b16 %v4082
    %v4192 = vunpack.c.l.b16 %v4083
    %v4193 = vunpack.c.h.b16 %v4083
    %v4194 = vunpack.c.l.b16 %v4084
    %v4195 = vunpack.c.h.b16 %v4084
    %v4196 = vunpack.c.l.b16 %v4085
    %v4197 = vunpack.c.h.b16 %v4085
    %v4198 = vunpack.c.l.b16 %v4086
    %v4199 = vunpack.c.h.b16 %v4086
    %v4200 = vunpack.c.l.b16 %v4087
    %v4201 = vunpack.c.h.b16 %v4087
    %v4202 = vunpack.c.l.b16 %v4088
    %v4203 = vunpack.c.h.b16 %v4088
    %v4204 = vunpack.c.l.b16 %v4089
    %v4205 = vunpack.c.h.b16 %v4089
    %v4206 = vunpack.c.l.b16 %v4090
    %v4207 = vunpack.c.h.b16 %v4090
    %v4208 = vunpack.c.l.b16 %v4091
    %v4209 = vunpack.c.h.b16 %v4091
    %v4210 = vunpack.c.l.b16 %v4092
    %v4211 = vunpack.c.h.b16 %v4092
    %v4212 = vunpack.c.l.b16 %v4093
    %v4213 = vunpack.c.h.b16 %v4093
    %v4214 = vunpack.c.l.b16 %v4094
    %v4215 = vunpack.c.h.b16 %v4094
    %v4216 = vunpack.c.l.b16 %v4095
    %v4217 = vunpack.c.h.b16 %v4095
    %v4218 = vunpack.c.l.b16 %v4096
    %v4219 = vunpack.c.h.b16 %v4096
    %v4220 = vunpack.c.l.b16 %v4097
    %v4221 = vunpack.c.h.b16 %v4097
    %v4222 = vunpack.c.l.b16 %v4098
    %v4223 = vunpack.c.h.b16 %v4098
    %v4224 = vunpack.c.l.b16 %v4099
    %v4225 = vunpack.c.h.b16 %v4099
    %v4226 = vunpack.c.l.b16 %v4100
    %v4227 = vunpack.c.h.b16 %v4100
    %v4228 = vunpack.c.l.b16 %v4101
    %v4229 = vunpack.c.h.b16 %v4101
    %v4230 = vunpack.c.l.b16 %v4102
    %v4231 = vunpack.c.h.b16 %v4102
    %v4232 = vunpack.c.l.b16 %v4103
    %v4233 = vunpack.c.h.b16 %v4103
    %v4234 = vunpack.c.l.b16 %v4104
    %v4235 = vunpack.c.h.b16 %v4104
    %v4236 = vunpack.c.l.b16 %v4105
    %v4237 = vunpack.c.h.b16 %v4105
    %v4238 = vunpack.c.l.b16 %v4106
    %v4239 = vunpack.c.h.b16 %v4106
    %v4240 = vunpack.c.l.b16 %v4107
    %v4241 = vunpack.c.h.b16 %v4107
    %v4242 = vunpack.c.l.b16 %v4108
    %v4243 = vunpack.c.h.b16 %v4108
    %v4244 = vunpack.c.l.b16 %v4109
    %v4245 = vunpack.c.h.b16 %v4109
    %v4246 = vunpack.c.l.b16 %v4110
    %v4247 = vunpack.c.h.b16 %v4110
    %v4248 = vunpack.c.l.b16 %v4111
    %v4249 = vunpack.c.h.b16 %v4111
    %v4250 = vunpack.c.l.b16 %v4112
    %v4251 = vunpack.c.h.b16 %v4112
    %v4252 = vunpack.c.l.b16 %v4113
    %v4253 = vunpack.c.h.b16 %v4113
    %v4254 = vunpack.c.l.b16 %v4114
    %v4255 = vunpack.c.h.b16 %v4114
    %v4256 = vunpack.c.l.b16 %v4115
    %v4257 = vunpack.c.h.b16 %v4115
    %v4258 = vunpack.c.l.b16 %v4116
    %v4259 = vunpack.c.h.b16 %v4116
    %v4260 = vunpack.c.l.b16 %v4117
    %v4261 = vunpack.c.h.b16 %v4117
    %v4262 = vpack.c.b16 %v4174, %v4166
    %v4263 = vpack.c.b16 %v4175, %v4167
    %v4264 = vpack.c.b16 %v4176, %v4168
    %v4265 = vpack.c.b16 %v4177, %v4169
    %v4266 = vpack.c.b16 %v4178, %v4170
    %v4267 = vpack.c.b16 %v4179, %v4171
    %v4268 = vpack.c.b16 %v4180, %v4172
    %v4269 = vpack.c.b16 %v4181, %v4173
    %v4270 = vpack.c.b16 %v4190, %v4182
    %v4271 = vpack.c.b16 %v4191, %v4183
    %v4272 = vpack.c.b16 %v4192, %v4184
    %v4273 = vpack.c.b16 %v4193, %v4185
    %v4274 = vpack.c.b16 %v4194, %v4186
    %v4275 = vpack.c.b16 %v4195, %v4187
    %v4276 = vpack.c.b16 %v4196, %v4188
    %v4277 = vpack.c.b16 %v4197, %v4189
    %v4278 = vpack.c.b16 %v4206, %v4198
    %v4279 = vpack.c.b16 %v4207, %v4199
    %v4280 = vpack.c.b16 %v4208, %v4200
    %v4281 = vpack.c.b16 %v4209, %v4201
    %v4282 = vpack.c.b16 %v4210, %v4202
    %v4283 = vpack.c.b16 %v4211, %v4203
    %v4284 = vpack.c.b16 %v4212, %v4204
    %v4285 = vpack.c.b16 %v4213, %v4205
    %v4286 = vpack.c.b16 %v4222, %v4214
    %v4287 = vpack.c.b16 %v4223, %v4215
    %v4288 = vpack.c.b16 %v4224, %v4216
    %v4289 = vpack.c.b16 %v4225, %v4217
    %v4290 = vpack.c.b16 %v4226, %v4218
    %v4291 = vpack.c.b16 %v4227, %v4219
    %v4292 = vpack.c.b16 %v4228, %v4220
    %v4293 = vpack.c.b16 %v4229, %v4221
    %v4294 = vpack.c.b16 %v4238, %v4230
    %v4295 = vpack.c.b16 %v4239, %v4231
    %v4296 = vpack.c.b16 %v4240, %v4232
    %v4297 = vpack.c.b16 %v4241, %v4233
    %v4298 = vpack.c.b16 %v4242, %v4234
    %v4299 = vpack.c.b16 %v4243, %v4235
    %v4300 = vpack.c.b16 %v4244, %v4236
    %v4301 = vpack.c.b16 %v4245, %v4237
    %v4302 = vpack.c.b16 %v4254, %v4246
    %v4303 = vpack.c.b16 %v4255, %v4247
    %v4304 = vpack.c.b16 %v4256, %v4248
    %v4305 = vpack.c.b16 %v4257, %v4249
    %v4306 = vpack.c.b16 %v4258, %v4250
    %v4307 = vpack.c.b16 %v4259, %v4251
    %v4308 = vpack.c.b16 %v4260, %v4252
    %v4309 = vpack.c.b16 %v4261, %v4253
    %v4359 = vsel %vm3145, %v4068, 0
    %4361 = vmatprep.subr.bf16.mxu0 %v4263
    %4362 = vmatpush1.bf16.msra.mxu0 %v4262
    %4363 = vmatprep.subr.bf16.mxu0 %v4271
    %4364 = vmatpush1.bf16.msra.mxu0 %v4270
    %4365 = vmatprep.subr.bf16.mxu0 %v4279
    %4366 = vmatpush1.bf16.msra.mxu0 %v4278
    %4367 = vmatprep.subr.bf16.mxu0 %v4287
    %4368 = vmatpush1.bf16.msra.mxu0 %v4286
    %4369 = vmatprep.subr.bf16.mxu0 %v4295
    %4370 = vmatpush1.bf16.msra.mxu0 %v4294
    %4371 = vmatprep.subr.bf16.mxu0 %v4303
    %4372 = vmatpush1.bf16.msra.mxu0 %v4302
    %4373 = vmatprep.subr.bf16.mxu0 0
    %4374 = vmatpush1.bf16.msra.mxu0 0
    %4375 = vmatprep.subr.bf16.mxu0 0
    %4376 = vmatpush1.bf16.msra.mxu0 0
    %4377 = vmatprep.subr.bf16.mxu0 0
    %4378 = vmatpush1.bf16.msra.mxu0 0
    %4379 = vmatprep.subr.bf16.mxu0 0
    %4380 = vmatpush1.bf16.msra.mxu0 0
    %4381 = vmatprep.subr.bf16.mxu0 0
    %4382 = vmatpush1.bf16.msra.mxu0 0
    %4383 = vmatprep.subr.bf16.mxu0 0
    %4384 = vmatpush1.bf16.msra.mxu0 0
    %4385 = vmatprep.subr.bf16.mxu0 0
    %4386 = vmatpush1.bf16.msra.mxu0 0
    %4387 = vmatprep.subr.bf16.mxu0 0
    %4388 = vmatpush1.bf16.msra.mxu0 0
    %4389 = vmatprep.subr.bf16.mxu0 0
    %4390 = vmatpush1.bf16.msra.mxu0 0
    %4391 = vmatprep.subr.bf16.mxu0 0
    %4392 = vmatpush1.bf16.msra.mxu0 0
    %4393 = vmatprep.mubr.bf16.mxu0 0
    %4394 = vmatmul.mubr.bf16.gmra.mrb[0].mxu0 %v4359
    %v4395 = vpop.f32.mrb[0].mxu0
    %v4396 = vadd.f32 0.0, %v4395
    %v4397 = vpop.f32.mrb[0].mxu0
    %v4398 = vadd.f32 0.0, %v4397
    %v4399 = vpop.f32.mrb[0].mxu0
    %v4400 = vpop.f32.mrb[0].mxu0
    %4401 = vdwg.mxu0
    %4402 = vmatprep.subr.bf16.mxu0 %v4265
    %4403 = vmatpush1.bf16.msra.mxu0 %v4264
    %4404 = vmatprep.subr.bf16.mxu0 %v4273
    %4405 = vmatpush1.bf16.msra.mxu0 %v4272
    %4406 = vmatprep.subr.bf16.mxu0 %v4281
    %4407 = vmatpush1.bf16.msra.mxu0 %v4280
    %4408 = vmatprep.subr.bf16.mxu0 %v4289
    %4409 = vmatpush1.bf16.msra.mxu0 %v4288
    %4410 = vmatprep.subr.bf16.mxu0 %v4297
    %4411 = vmatpush1.bf16.msra.mxu0 %v4296
    %4412 = vmatprep.subr.bf16.mxu0 %v4305
    %4413 = vmatpush1.bf16.msra.mxu0 %v4304
    %4414 = vmatprep.subr.bf16.mxu0 0
    %4415 = vmatpush1.bf16.msra.mxu0 0
    %4416 = vmatprep.subr.bf16.mxu0 0
    %4417 = vmatpush1.bf16.msra.mxu0 0
    %4418 = vmatprep.subr.bf16.mxu0 0
    %4419 = vmatpush1.bf16.msra.mxu0 0
    %4420 = vmatprep.subr.bf16.mxu0 0
    %4421 = vmatpush1.bf16.msra.mxu0 0
    %4422 = vmatprep.subr.bf16.mxu0 0
    %4423 = vmatpush1.bf16.msra.mxu0 0
    %4424 = vmatprep.subr.bf16.mxu0 0
    %4425 = vmatpush1.bf16.msra.mxu0 0
    %4426 = vmatprep.subr.bf16.mxu0 0
    %4427 = vmatpush1.bf16.msra.mxu0 0
    %4428 = vmatprep.subr.bf16.mxu0 0
    %4429 = vmatpush1.bf16.msra.mxu0 0
    %4430 = vmatprep.subr.bf16.mxu0 0
    %4431 = vmatpush1.bf16.msra.mxu0 0
    %4432 = vmatprep.subr.bf16.mxu0 0
    %4433 = vmatpush1.bf16.msra.mxu0 0
    %4434 = vmatprep.mubr.bf16.mxu0 0
    %4435 = vmatmul.mubr.bf16.gmra.mrb[0].mxu0 %v4359
    %v4436 = vpop.f32.mrb[0].mxu0
    %v4437 = vadd.f32 0.0, %v4436
    %v4438 = vpop.f32.mrb[0].mxu0
    %v4439 = vadd.f32 0.0, %v4438
    %v4440 = vpop.f32.mrb[0].mxu0
    %v4441 = vpop.f32.mrb[0].mxu0
    %4442 = vdwg.mxu0
    %4443 = vmatprep.subr.bf16.mxu0 %v4267
    %4444 = vmatpush1.bf16.msra.mxu0 %v4266
    %4445 = vmatprep.subr.bf16.mxu0 %v4275
    %4446 = vmatpush1.bf16.msra.mxu0 %v4274
    %4447 = vmatprep.subr.bf16.mxu0 %v4283
    %4448 = vmatpush1.bf16.msra.mxu0 %v4282
    %4449 = vmatprep.subr.bf16.mxu0 %v4291
    %4450 = vmatpush1.bf16.msra.mxu0 %v4290
    %4451 = vmatprep.subr.bf16.mxu0 %v4299
    %4452 = vmatpush1.bf16.msra.mxu0 %v4298
    %4453 = vmatprep.subr.bf16.mxu0 %v4307
    %4454 = vmatpush1.bf16.msra.mxu0 %v4306
    %4455 = vmatprep.subr.bf16.mxu0 0
    %4456 = vmatpush1.bf16.msra.mxu0 0
    %4457 = vmatprep.subr.bf16.mxu0 0
    %4458 = vmatpush1.bf16.msra.mxu0 0
    %4459 = vmatprep.subr.bf16.mxu0 0
    %4460 = vmatpush1.bf16.msra.mxu0 0
    %4461 = vmatprep.subr.bf16.mxu0 0
    %4462 = vmatpush1.bf16.msra.mxu0 0
    %4463 = vmatprep.subr.bf16.mxu0 0
    %4464 = vmatpush1.bf16.msra.mxu0 0
    %4465 = vmatprep.subr.bf16.mxu0 0
    %4466 = vmatpush1.bf16.msra.mxu0 0
    %4467 = vmatprep.subr.bf16.mxu0 0
    %4468 = vmatpush1.bf16.msra.mxu0 0
    %4469 = vmatprep.subr.bf16.mxu0 0
    %4470 = vmatpush1.bf16.msra.mxu0 0
    %4471 = vmatprep.subr.bf16.mxu0 0
    %4472 = vmatpush1.bf16.msra.mxu0 0
    %4473 = vmatprep.subr.bf16.mxu0 0
    %4474 = vmatpush1.bf16.msra.mxu0 0
    %4475 = vmatprep.mubr.bf16.mxu0 0
    %4476 = vmatmul.mubr.bf16.gmra.mrb[0].mxu0 %v4359
    %v4477 = vpop.f32.mrb[0].mxu0
    %v4478 = vadd.f32 0.0, %v4477
    %v4479 = vpop.f32.mrb[0].mxu0
    %v4480 = vadd.f32 0.0, %v4479
    %v4481 = vpop.f32.mrb[0].mxu0
    %v4482 = vpop.f32.mrb[0].mxu0
    %4483 = vdwg.mxu0
    %4484 = vmatprep.subr.bf16.mxu0 %v4269
    %4485 = vmatpush1.bf16.msra.mxu0 %v4268
    %4486 = vmatprep.subr.bf16.mxu0 %v4277
    %4487 = vmatpush1.bf16.msra.mxu0 %v4276
    %4488 = vmatprep.subr.bf16.mxu0 %v4285
    %4489 = vmatpush1.bf16.msra.mxu0 %v4284
    %4490 = vmatprep.subr.bf16.mxu0 %v4293
    %4491 = vmatpush1.bf16.msra.mxu0 %v4292
    %4492 = vmatprep.subr.bf16.mxu0 %v4301
    %4493 = vmatpush1.bf16.msra.mxu0 %v4300
    %4494 = vmatprep.subr.bf16.mxu0 %v4309
    %4495 = vmatpush1.bf16.msra.mxu0 %v4308
    %4496 = vmatprep.subr.bf16.mxu0 0
    %4497 = vmatpush1.bf16.msra.mxu0 0
    %4498 = vmatprep.subr.bf16.mxu0 0
    %4499 = vmatpush1.bf16.msra.mxu0 0
    %4500 = vmatprep.subr.bf16.mxu0 0
    %4501 = vmatpush1.bf16.msra.mxu0 0
    %4502 = vmatprep.subr.bf16.mxu0 0
    %4503 = vmatpush1.bf16.msra.mxu0 0
    %4504 = vmatprep.subr.bf16.mxu0 0
    %4505 = vmatpush1.bf16.msra.mxu0 0
    %4506 = vmatprep.subr.bf16.mxu0 0
    %4507 = vmatpush1.bf16.msra.mxu0 0
    %4508 = vmatprep.subr.bf16.mxu0 0
    %4509 = vmatpush1.bf16.msra.mxu0 0
    %4510 = vmatprep.subr.bf16.mxu0 0
    %4511 = vmatpush1.bf16.msra.mxu0 0
    %4512 = vmatprep.subr.bf16.mxu0 0
    %4513 = vmatpush1.bf16.msra.mxu0 0
    %4514 = vmatprep.subr.bf16.mxu0 0
    %4515 = vmatpush1.bf16.msra.mxu0 0
    %4516 = vmatprep.mubr.bf16.mxu0 0
    %4517 = vmatmul.mubr.bf16.gmra.mrb[0].mxu0 %v4359
    %v4518 = vpop.f32.mrb[0].mxu0
    %v4519 = vadd.f32 0.0, %v4518
    %v4520 = vpop.f32.mrb[0].mxu0
    %v4521 = vadd.f32 0.0, %v4520
    %v4522 = vpop.f32.mrb[0].mxu0
    %v4523 = vpop.f32.mrb[0].mxu0
    %4524 = vdwg.mxu0
    %v4525 = vadd.f32 %v3937, %v4396
    %v4526 = vadd.f32 %v3939, %v4398
    %v4527 = vadd.f32 %v3978, %v4437
    %v4528 = vadd.f32 %v3980, %v4439
    %v4529 = vadd.f32 %v4019, %v4478
    %v4530 = vadd.f32 %v4021, %v4480
    %v4531 = vadd.f32 %v4060, %v4519
    %v4532 = vadd.f32 %v4062, %v4521
    %s4533 = scalar_lea.vmem [#allocation6], 3
    %v4534 = vld [vmem:[%s4533] ss:$13 sm:$0x3]
    %v4535 = vpack.c.bf16 %v4534, %v4534
    %s4536 = scalar_lea.vmem %s7, 1152
    %v4537 = vld [vmem:[%s4536] sm:$0xff]
    %v4538 = vld [vmem:[%s4536 + $0x8] sm:$0xff]
    %v4539 = vld [vmem:[%s4536 + $0x10] sm:$0xff]
    %v4540 = vld [vmem:[%s4536 + $0x18] sm:$0xff]
    %v4541 = vld [vmem:[%s4536 + $0x20] sm:$0xff]
    %v4542 = vld [vmem:[%s4536 + $0x28] sm:$0xff]
    %v4543 = vld [vmem:[%s4536 + $0x30] sm:$0xff]
    %v4544 = vld [vmem:[%s4536 + $0x38] sm:$0xff]
    %v4545 = vld [vmem:[%s4536 + $0x40] sm:$0xff]
    %v4546 = vld [vmem:[%s4536 + $0x48] sm:$0xff]
    %v4547 = vld [vmem:[%s4536 + $0x50] sm:$0xff]
    %v4548 = vld [vmem:[%s4536 + $0x58] sm:$0xff]
    %v4549 = vld [vmem:[%s4536 + $0x60] sm:$0xff]
    %v4550 = vld [vmem:[%s4536 + $0x68] sm:$0xff]
    %v4551 = vld [vmem:[%s4536 + $0x70] sm:$0xff]
    %v4552 = vld [vmem:[%s4536 + $0x78] sm:$0xff]
    %v4553 = vld [vmem:[%s4536 + $0x80] sm:$0xff]
    %v4554 = vld [vmem:[%s4536 + $0x88] sm:$0xff]
    %v4555 = vld [vmem:[%s4536 + $0x90] sm:$0xff]
    %v4556 = vld [vmem:[%s4536 + $0x98] sm:$0xff]
    %v4557 = vld [vmem:[%s4536 + $0xa0] sm:$0xff]
    %v4558 = vld [vmem:[%s4536 + $0xa8] sm:$0xff]
    %v4559 = vld [vmem:[%s4536 + $0xb0] sm:$0xff]
    %v4560 = vld [vmem:[%s4536 + $0xb8] sm:$0xff]
    %v4561 = vld [vmem:[%s4536 + $0xc0] sm:$0xff]
    %v4562 = vld [vmem:[%s4536 + $0xc8] sm:$0xff]
    %v4563 = vld [vmem:[%s4536 + $0xd0] sm:$0xff]
    %v4564 = vld [vmem:[%s4536 + $0xd8] sm:$0xff]
    %v4565 = vld [vmem:[%s4536 + $0xe0] sm:$0xff]
    %v4566 = vld [vmem:[%s4536 + $0xe8] sm:$0xff]
    %v4567 = vld [vmem:[%s4536 + $0xf0] sm:$0xff]
    %v4568 = vld [vmem:[%s4536 + $0xf8] sm:$0xff]
    %v4569 = vld [vmem:[%s4536 + $0x100] sm:$0xff]
    %v4570 = vld [vmem:[%s4536 + $0x108] sm:$0xff]
    %v4571 = vld [vmem:[%s4536 + $0x110] sm:$0xff]
    %v4572 = vld [vmem:[%s4536 + $0x118] sm:$0xff]
    %v4573 = vld [vmem:[%s4536 + $0x120] sm:$0xff]
    %v4574 = vld [vmem:[%s4536 + $0x128] sm:$0xff]
    %v4575 = vld [vmem:[%s4536 + $0x130] sm:$0xff]
    %v4576 = vld [vmem:[%s4536 + $0x138] sm:$0xff]
    %v4577 = vld [vmem:[%s4536 + $0x140] sm:$0xff]
    %v4578 = vld [vmem:[%s4536 + $0x148] sm:$0xff]
    %v4579 = vld [vmem:[%s4536 + $0x150] sm:$0xff]
    %v4580 = vld [vmem:[%s4536 + $0x158] sm:$0xff]
    %v4581 = vld [vmem:[%s4536 + $0x160] sm:$0xff]
    %v4582 = vld [vmem:[%s4536 + $0x168] sm:$0xff]
    %v4583 = vld [vmem:[%s4536 + $0x170] sm:$0xff]
    %v4584 = vld [vmem:[%s4536 + $0x178] sm:$0xff]
    %v4633 = vunpack.c.l.b16 %v4537
    %v4634 = vunpack.c.h.b16 %v4537
    %v4635 = vunpack.c.l.b16 %v4538
    %v4636 = vunpack.c.h.b16 %v4538
    %v4637 = vunpack.c.l.b16 %v4539
    %v4638 = vunpack.c.h.b16 %v4539
    %v4639 = vunpack.c.l.b16 %v4540
    %v4640 = vunpack.c.h.b16 %v4540
    %v4641 = vunpack.c.l.b16 %v4541
    %v4642 = vunpack.c.h.b16 %v4541
    %v4643 = vunpack.c.l.b16 %v4542
    %v4644 = vunpack.c.h.b16 %v4542
    %v4645 = vunpack.c.l.b16 %v4543
    %v4646 = vunpack.c.h.b16 %v4543
    %v4647 = vunpack.c.l.b16 %v4544
    %v4648 = vunpack.c.h.b16 %v4544
    %v4649 = vunpack.c.l.b16 %v4545
    %v4650 = vunpack.c.h.b16 %v4545
    %v4651 = vunpack.c.l.b16 %v4546
    %v4652 = vunpack.c.h.b16 %v4546
    %v4653 = vunpack.c.l.b16 %v4547
    %v4654 = vunpack.c.h.b16 %v4547
    %v4655 = vunpack.c.l.b16 %v4548
    %v4656 = vunpack.c.h.b16 %v4548
    %v4657 = vunpack.c.l.b16 %v4549
    %v4658 = vunpack.c.h.b16 %v4549
    %v4659 = vunpack.c.l.b16 %v4550
    %v4660 = vunpack.c.h.b16 %v4550
    %v4661 = vunpack.c.l.b16 %v4551
    %v4662 = vunpack.c.h.b16 %v4551
    %v4663 = vunpack.c.l.b16 %v4552
    %v4664 = vunpack.c.h.b16 %v4552
    %v4665 = vunpack.c.l.b16 %v4553
    %v4666 = vunpack.c.h.b16 %v4553
    %v4667 = vunpack.c.l.b16 %v4554
    %v4668 = vunpack.c.h.b16 %v4554
    %v4669 = vunpack.c.l.b16 %v4555
    %v4670 = vunpack.c.h.b16 %v4555
    %v4671 = vunpack.c.l.b16 %v4556
    %v4672 = vunpack.c.h.b16 %v4556
    %v4673 = vunpack.c.l.b16 %v4557
    %v4674 = vunpack.c.h.b16 %v4557
    %v4675 = vunpack.c.l.b16 %v4558
    %v4676 = vunpack.c.h.b16 %v4558
    %v4677 = vunpack.c.l.b16 %v4559
    %v4678 = vunpack.c.h.b16 %v4559
    %v4679 = vunpack.c.l.b16 %v4560
    %v4680 = vunpack.c.h.b16 %v4560
    %v4681 = vunpack.c.l.b16 %v4561
    %v4682 = vunpack.c.h.b16 %v4561
    %v4683 = vunpack.c.l.b16 %v4562
    %v4684 = vunpack.c.h.b16 %v4562
    %v4685 = vunpack.c.l.b16 %v4563
    %v4686 = vunpack.c.h.b16 %v4563
    %v4687 = vunpack.c.l.b16 %v4564
    %v4688 = vunpack.c.h.b16 %v4564
    %v4689 = vunpack.c.l.b16 %v4565
    %v4690 = vunpack.c.h.b16 %v4565
    %v4691 = vunpack.c.l.b16 %v4566
    %v4692 = vunpack.c.h.b16 %v4566
    %v4693 = vunpack.c.l.b16 %v4567
    %v4694 = vunpack.c.h.b16 %v4567
    %v4695 = vunpack.c.l.b16 %v4568
    %v4696 = vunpack.c.h.b16 %v4568
    %v4697 = vunpack.c.l.b16 %v4569
    %v4698 = vunpack.c.h.b16 %v4569
    %v4699 = vunpack.c.l.b16 %v4570
    %v4700 = vunpack.c.h.b16 %v4570
    %v4701 = vunpack.c.l.b16 %v4571
    %v4702 = vunpack.c.h.b16 %v4571
    %v4703 = vunpack.c.l.b16 %v4572
    %v4704 = vunpack.c.h.b16 %v4572
    %v4705 = vunpack.c.l.b16 %v4573
    %v4706 = vunpack.c.h.b16 %v4573
    %v4707 = vunpack.c.l.b16 %v4574
    %v4708 = vunpack.c.h.b16 %v4574
    %v4709 = vunpack.c.l.b16 %v4575
    %v4710 = vunpack.c.h.b16 %v4575
    %v4711 = vunpack.c.l.b16 %v4576
    %v4712 = vunpack.c.h.b16 %v4576
    %v4713 = vunpack.c.l.b16 %v4577
    %v4714 = vunpack.c.h.b16 %v4577
    %v4715 = vunpack.c.l.b16 %v4578
    %v4716 = vunpack.c.h.b16 %v4578
    %v4717 = vunpack.c.l.b16 %v4579
    %v4718 = vunpack.c.h.b16 %v4579
    %v4719 = vunpack.c.l.b16 %v4580
    %v4720 = vunpack.c.h.b16 %v4580
    %v4721 = vunpack.c.l.b16 %v4581
    %v4722 = vunpack.c.h.b16 %v4581
    %v4723 = vunpack.c.l.b16 %v4582
    %v4724 = vunpack.c.h.b16 %v4582
    %v4725 = vunpack.c.l.b16 %v4583
    %v4726 = vunpack.c.h.b16 %v4583
    %v4727 = vunpack.c.l.b16 %v4584
    %v4728 = vunpack.c.h.b16 %v4584
    %v4729 = vpack.c.b16 %v4641, %v4633
    %v4730 = vpack.c.b16 %v4642, %v4634
    %v4731 = vpack.c.b16 %v4643, %v4635
    %v4732 = vpack.c.b16 %v4644, %v4636
    %v4733 = vpack.c.b16 %v4645, %v4637
    %v4734 = vpack.c.b16 %v4646, %v4638
    %v4735 = vpack.c.b16 %v4647, %v4639
    %v4736 = vpack.c.b16 %v4648, %v4640
    %v4737 = vpack.c.b16 %v4657, %v4649
    %v4738 = vpack.c.b16 %v4658, %v4650
    %v4739 = vpack.c.b16 %v4659, %v4651
    %v4740 = vpack.c.b16 %v4660, %v4652
    %v4741 = vpack.c.b16 %v4661, %v4653
    %v4742 = vpack.c.b16 %v4662, %v4654
    %v4743 = vpack.c.b16 %v4663, %v4655
    %v4744 = vpack.c.b16 %v4664, %v4656
    %v4745 = vpack.c.b16 %v4673, %v4665
    %v4746 = vpack.c.b16 %v4674, %v4666
    %v4747 = vpack.c.b16 %v4675, %v4667
    %v4748 = vpack.c.b16 %v4676, %v4668
    %v4749 = vpack.c.b16 %v4677, %v4669
    %v4750 = vpack.c.b16 %v4678, %v4670
    %v4751 = vpack.c.b16 %v4679, %v4671
    %v4752 = vpack.c.b16 %v4680, %v4672
    %v4753 = vpack.c.b16 %v4689, %v4681
    %v4754 = vpack.c.b16 %v4690, %v4682
    %v4755 = vpack.c.b16 %v4691, %v4683
    %v4756 = vpack.c.b16 %v4692, %v4684
    %v4757 = vpack.c.b16 %v4693, %v4685
    %v4758 = vpack.c.b16 %v4694, %v4686
    %v4759 = vpack.c.b16 %v4695, %v4687
    %v4760 = vpack.c.b16 %v4696, %v4688
    %v4761 = vpack.c.b16 %v4705, %v4697
    %v4762 = vpack.c.b16 %v4706, %v4698
    %v4763 = vpack.c.b16 %v4707, %v4699
    %v4764 = vpack.c.b16 %v4708, %v4700
    %v4765 = vpack.c.b16 %v4709, %v4701
    %v4766 = vpack.c.b16 %v4710, %v4702
    %v4767 = vpack.c.b16 %v4711, %v4703
    %v4768 = vpack.c.b16 %v4712, %v4704
    %v4769 = vpack.c.b16 %v4721, %v4713
    %v4770 = vpack.c.b16 %v4722, %v4714
    %v4771 = vpack.c.b16 %v4723, %v4715
    %v4772 = vpack.c.b16 %v4724, %v4716
    %v4773 = vpack.c.b16 %v4725, %v4717
    %v4774 = vpack.c.b16 %v4726, %v4718
    %v4775 = vpack.c.b16 %v4727, %v4719
    %v4776 = vpack.c.b16 %v4728, %v4720
    %v4826 = vsel %vm3145, %v4535, 0
    %4828 = vmatprep.subr.bf16.mxu0 %v4730
    %4829 = vmatpush1.bf16.msra.mxu0 %v4729
    %4830 = vmatprep.subr.bf16.mxu0 %v4738
    %4831 = vmatpush1.bf16.msra.mxu0 %v4737
    %4832 = vmatprep.subr.bf16.mxu0 %v4746
    %4833 = vmatpush1.bf16.msra.mxu0 %v4745
    %4834 = vmatprep.subr.bf16.mxu0 %v4754
    %4835 = vmatpush1.bf16.msra.mxu0 %v4753
    %4836 = vmatprep.subr.bf16.mxu0 %v4762
    %4837 = vmatpush1.bf16.msra.mxu0 %v4761
    %4838 = vmatprep.subr.bf16.mxu0 %v4770
    %4839 = vmatpush1.bf16.msra.mxu0 %v4769
    %4840 = vmatprep.subr.bf16.mxu0 0
    %4841 = vmatpush1.bf16.msra.mxu0 0
    %4842 = vmatprep.subr.bf16.mxu0 0
    %4843 = vmatpush1.bf16.msra.mxu0 0
    %4844 = vmatprep.subr.bf16.mxu0 0
    %4845 = vmatpush1.bf16.msra.mxu0 0
    %4846 = vmatprep.subr.bf16.mxu0 0
    %4847 = vmatpush1.bf16.msra.mxu0 0
    %4848 = vmatprep.subr.bf16.mxu0 0
    %4849 = vmatpush1.bf16.msra.mxu0 0
    %4850 = vmatprep.subr.bf16.mxu0 0
    %4851 = vmatpush1.bf16.msra.mxu0 0
    %4852 = vmatprep.subr.bf16.mxu0 0
    %4853 = vmatpush1.bf16.msra.mxu0 0
    %4854 = vmatprep.subr.bf16.mxu0 0
    %4855 = vmatpush1.bf16.msra.mxu0 0
    %4856 = vmatprep.subr.bf16.mxu0 0
    %4857 = vmatpush1.bf16.msra.mxu0 0
    %4858 = vmatprep.subr.bf16.mxu0 0
    %4859 = vmatpush1.bf16.msra.mxu0 0
    %4860 = vmatprep.mubr.bf16.mxu0 0
    %4861 = vmatmul.mubr.bf16.gmra.mrb[0].mxu0 %v4826
    %v4862 = vpop.f32.mrb[0].mxu0
    %v4863 = vadd.f32 0.0, %v4862
    %v4864 = vpop.f32.mrb[0].mxu0
    %v4865 = vadd.f32 0.0, %v4864
    %v4866 = vpop.f32.mrb[0].mxu0
    %v4867 = vpop.f32.mrb[0].mxu0
    %4868 = vdwg.mxu0
    %4869 = vmatprep.subr.bf16.mxu0 %v4732
    %4870 = vmatpush1.bf16.msra.mxu0 %v4731
    %4871 = vmatprep.subr.bf16.mxu0 %v4740
    %4872 = vmatpush1.bf16.msra.mxu0 %v4739
    %4873 = vmatprep.subr.bf16.mxu0 %v4748
    %4874 = vmatpush1.bf16.msra.mxu0 %v4747
    %4875 = vmatprep.subr.bf16.mxu0 %v4756
    %4876 = vmatpush1.bf16.msra.mxu0 %v4755
    %4877 = vmatprep.subr.bf16.mxu0 %v4764
    %4878 = vmatpush1.bf16.msra.mxu0 %v4763
    %4879 = vmatprep.subr.bf16.mxu0 %v4772
    %4880 = vmatpush1.bf16.msra.mxu0 %v4771
    %4881 = vmatprep.subr.bf16.mxu0 0
    %4882 = vmatpush1.bf16.msra.mxu0 0
    %4883 = vmatprep.subr.bf16.mxu0 0
    %4884 = vmatpush1.bf16.msra.mxu0 0
    %4885 = vmatprep.subr.bf16.mxu0 0
    %4886 = vmatpush1.bf16.msra.mxu0 0
    %4887 = vmatprep.subr.bf16.mxu0 0
    %4888 = vmatpush1.bf16.msra.mxu0 0
    %4889 = vmatprep.subr.bf16.mxu0 0
    %4890 = vmatpush1.bf16.msra.mxu0 0
    %4891 = vmatprep.subr.bf16.mxu0 0
    %4892 = vmatpush1.bf16.msra.mxu0 0
    %4893 = vmatprep.subr.bf16.mxu0 0
    %4894 = vmatpush1.bf16.msra.mxu0 0
    %4895 = vmatprep.subr.bf16.mxu0 0
    %4896 = vmatpush1.bf16.msra.mxu0 0
    %4897 = vmatprep.subr.bf16.mxu0 0
    %4898 = vmatpush1.bf16.msra.mxu0 0
    %4899 = vmatprep.subr.bf16.mxu0 0
    %4900 = vmatpush1.bf16.msra.mxu0 0
    %4901 = vmatprep.mubr.bf16.mxu0 0
    %4902 = vmatmul.mubr.bf16.gmra.mrb[0].mxu0 %v4826
    %v4903 = vpop.f32.mrb[0].mxu0
    %v4904 = vadd.f32 0.0, %v4903
    %v4905 = vpop.f32.mrb[0].mxu0
    %v4906 = vadd.f32 0.0, %v4905
    %v4907 = vpop.f32.mrb[0].mxu0
    %v4908 = vpop.f32.mrb[0].mxu0
    %4909 = vdwg.mxu0
    %4910 = vmatprep.subr.bf16.mxu0 %v4734
    %4911 = vmatpush1.bf16.msra.mxu0 %v4733
    %4912 = vmatprep.subr.bf16.mxu0 %v4742
    %4913 = vmatpush1.bf16.msra.mxu0 %v4741
    %4914 = vmatprep.subr.bf16.mxu0 %v4750
    %4915 = vmatpush1.bf16.msra.mxu0 %v4749
    %4916 = vmatprep.subr.bf16.mxu0 %v4758
    %4917 = vmatpush1.bf16.msra.mxu0 %v4757
    %4918 = vmatprep.subr.bf16.mxu0 %v4766
    %4919 = vmatpush1.bf16.msra.mxu0 %v4765
    %4920 = vmatprep.subr.bf16.mxu0 %v4774
    %4921 = vmatpush1.bf16.msra.mxu0 %v4773
    %4922 = vmatprep.subr.bf16.mxu0 0
    %4923 = vmatpush1.bf16.msra.mxu0 0
    %4924 = vmatprep.subr.bf16.mxu0 0
    %4925 = vmatpush1.bf16.msra.mxu0 0
    %4926 = vmatprep.subr.bf16.mxu0 0
    %4927 = vmatpush1.bf16.msra.mxu0 0
    %4928 = vmatprep.subr.bf16.mxu0 0
    %4929 = vmatpush1.bf16.msra.mxu0 0
    %4930 = vmatprep.subr.bf16.mxu0 0
    %4931 = vmatpush1.bf16.msra.mxu0 0
    %4932 = vmatprep.subr.bf16.mxu0 0
    %4933 = vmatpush1.bf16.msra.mxu0 0
    %4934 = vmatprep.subr.bf16.mxu0 0
    %4935 = vmatpush1.bf16.msra.mxu0 0
    %4936 = vmatprep.subr.bf16.mxu0 0
    %4937 = vmatpush1.bf16.msra.mxu0 0
    %4938 = vmatprep.subr.bf16.mxu0 0
    %4939 = vmatpush1.bf16.msra.mxu0 0
    %4940 = vmatprep.subr.bf16.mxu0 0
    %4941 = vmatpush1.bf16.msra.mxu0 0
    %4942 = vmatprep.mubr.bf16.mxu0 0
    %4943 = vmatmul.mubr.bf16.gmra.mrb[0].mxu0 %v4826
    %v4944 = vpop.f32.mrb[0].mxu0
    %v4945 = vadd.f32 0.0, %v4944
    %v4946 = vpop.f32.mrb[0].mxu0
    %v4947 = vadd.f32 0.0, %v4946
    %v4948 = vpop.f32.mrb[0].mxu0
    %v4949 = vpop.f32.mrb[0].mxu0
    %4950 = vdwg.mxu0
    %4951 = vmatprep.subr.bf16.mxu0 %v4736
    %4952 = vmatpush1.bf16.msra.mxu0 %v4735
    %4953 = vmatprep.subr.bf16.mxu0 %v4744
    %4954 = vmatpush1.bf16.msra.mxu0 %v4743
    %4955 = vmatprep.subr.bf16.mxu0 %v4752
    %4956 = vmatpush1.bf16.msra.mxu0 %v4751
    %4957 = vmatprep.subr.bf16.mxu0 %v4760
    %4958 = vmatpush1.bf16.msra.mxu0 %v4759
    %4959 = vmatprep.subr.bf16.mxu0 %v4768
    %4960 = vmatpush1.bf16.msra.mxu0 %v4767
    %4961 = vmatprep.subr.bf16.mxu0 %v4776
    %4962 = vmatpush1.bf16.msra.mxu0 %v4775
    %4963 = vmatprep.subr.bf16.mxu0 0
    %4964 = vmatpush1.bf16.msra.mxu0 0
    %4965 = vmatprep.subr.bf16.mxu0 0
    %4966 = vmatpush1.bf16.msra.mxu0 0
    %4967 = vmatprep.subr.bf16.mxu0 0
    %4968 = vmatpush1.bf16.msra.mxu0 0
    %4969 = vmatprep.subr.bf16.mxu0 0
    %4970 = vmatpush1.bf16.msra.mxu0 0
    %4971 = vmatprep.subr.bf16.mxu0 0
    %4972 = vmatpush1.bf16.msra.mxu0 0
    %4973 = vmatprep.subr.bf16.mxu0 0
    %4974 = vmatpush1.bf16.msra.mxu0 0
    %4975 = vmatprep.subr.bf16.mxu0 0
    %4976 = vmatpush1.bf16.msra.mxu0 0
    %4977 = vmatprep.subr.bf16.mxu0 0
    %4978 = vmatpush1.bf16.msra.mxu0 0
    %4979 = vmatprep.subr.bf16.mxu0 0
    %4980 = vmatpush1.bf16.msra.mxu0 0
    %4981 = vmatprep.subr.bf16.mxu0 0
    %4982 = vmatpush1.bf16.msra.mxu0 0
    %4983 = vmatprep.mubr.bf16.mxu0 0
    %4984 = vmatmul.mubr.bf16.gmra.mrb[0].mxu0 %v4826
    %v4985 = vpop.f32.mrb[0].mxu0
    %v4986 = vadd.f32 0.0, %v4985
    %v4987 = vpop.f32.mrb[0].mxu0
    %v4988 = vadd.f32 0.0, %v4987
    %v4989 = vpop.f32.mrb[0].mxu0
    %v4990 = vpop.f32.mrb[0].mxu0
    %4991 = vdwg.mxu0
    %v4992 = vadd.f32 %v4525, %v4863
    %v4993 = vadd.f32 %v4526, %v4865
    %v4994 = vadd.f32 %v4527, %v4904
    %v4995 = vadd.f32 %v4528, %v4906
    %v4996 = vadd.f32 %v4529, %v4945
    %v4997 = vadd.f32 %v4530, %v4947
    %v4998 = vadd.f32 %v4531, %v4986
    %v4999 = vadd.f32 %v4532, %v4988
    %s5000 = scalar_lea.vmem [#allocation6], 4
    %v5001 = vld [vmem:[%s5000] ss:$13 sm:$0x3]
    %v5002 = vpack.c.bf16 %v5001, %v5001
    %s5003 = scalar_lea.vmem %s7, 1536
    %v5004 = vld [vmem:[%s5003] sm:$0xff]
    %v5005 = vld [vmem:[%s5003 + $0x8] sm:$0xff]
    %v5006 = vld [vmem:[%s5003 + $0x10] sm:$0xff]
    %v5007 = vld [vmem:[%s5003 + $0x18] sm:$0xff]
    %v5008 = vld [vmem:[%s5003 + $0x20] sm:$0xff]
    %v5009 = vld [vmem:[%s5003 + $0x28] sm:$0xff]
    %v5010 = vld [vmem:[%s5003 + $0x30] sm:$0xff]
    %v5011 = vld [vmem:[%s5003 + $0x38] sm:$0xff]
    %v5012 = vld [vmem:[%s5003 + $0x40] sm:$0xff]
    %v5013 = vld [vmem:[%s5003 + $0x48] sm:$0xff]
    %v5014 = vld [vmem:[%s5003 + $0x50] sm:$0xff]
    %v5015 = vld [vmem:[%s5003 + $0x58] sm:$0xff]
    %v5016 = vld [vmem:[%s5003 + $0x60] sm:$0xff]
    %v5017 = vld [vmem:[%s5003 + $0x68] sm:$0xff]
    %v5018 = vld [vmem:[%s5003 + $0x70] sm:$0xff]
    %v5019 = vld [vmem:[%s5003 + $0x78] sm:$0xff]
    %v5020 = vld [vmem:[%s5003 + $0x80] sm:$0xff]
    %v5021 = vld [vmem:[%s5003 + $0x88] sm:$0xff]
    %v5022 = vld [vmem:[%s5003 + $0x90] sm:$0xff]
    %v5023 = vld [vmem:[%s5003 + $0x98] sm:$0xff]
    %v5024 = vld [vmem:[%s5003 + $0xa0] sm:$0xff]
    %v5025 = vld [vmem:[%s5003 + $0xa8] sm:$0xff]
    %v5026 = vld [vmem:[%s5003 + $0xb0] sm:$0xff]
    %v5027 = vld [vmem:[%s5003 + $0xb8] sm:$0xff]
    %v5028 = vld [vmem:[%s5003 + $0xc0] sm:$0xff]
    %v5029 = vld [vmem:[%s5003 + $0xc8] sm:$0xff]
    %v5030 = vld [vmem:[%s5003 + $0xd0] sm:$0xff]
    %v5031 = vld [vmem:[%s5003 + $0xd8] sm:$0xff]
    %v5032 = vld [vmem:[%s5003 + $0xe0] sm:$0xff]
    %v5033 = vld [vmem:[%s5003 + $0xe8] sm:$0xff]
    %v5034 = vld [vmem:[%s5003 + $0xf0] sm:$0xff]
    %v5035 = vld [vmem:[%s5003 + $0xf8] sm:$0xff]
    %v5036 = vld [vmem:[%s5003 + $0x100] sm:$0xff]
    %v5037 = vld [vmem:[%s5003 + $0x108] sm:$0xff]
    %v5038 = vld [vmem:[%s5003 + $0x110] sm:$0xff]
    %v5039 = vld [vmem:[%s5003 + $0x118] sm:$0xff]
    %v5040 = vld [vmem:[%s5003 + $0x120] sm:$0xff]
    %v5041 = vld [vmem:[%s5003 + $0x128] sm:$0xff]
    %v5042 = vld [vmem:[%s5003 + $0x130] sm:$0xff]
    %v5043 = vld [vmem:[%s5003 + $0x138] sm:$0xff]
    %v5044 = vld [vmem:[%s5003 + $0x140] sm:$0xff]
    %v5045 = vld [vmem:[%s5003 + $0x148] sm:$0xff]
    %v5046 = vld [vmem:[%s5003 + $0x150] sm:$0xff]
    %v5047 = vld [vmem:[%s5003 + $0x158] sm:$0xff]
    %v5048 = vld [vmem:[%s5003 + $0x160] sm:$0xff]
    %v5049 = vld [vmem:[%s5003 + $0x168] sm:$0xff]
    %v5050 = vld [vmem:[%s5003 + $0x170] sm:$0xff]
    %v5051 = vld [vmem:[%s5003 + $0x178] sm:$0xff]
    %v5100 = vunpack.c.l.b16 %v5004
    %v5101 = vunpack.c.h.b16 %v5004
    %v5102 = vunpack.c.l.b16 %v5005
    %v5103 = vunpack.c.h.b16 %v5005
    %v5104 = vunpack.c.l.b16 %v5006
    %v5105 = vunpack.c.h.b16 %v5006
    %v5106 = vunpack.c.l.b16 %v5007
    %v5107 = vunpack.c.h.b16 %v5007
    %v5108 = vunpack.c.l.b16 %v5008
    %v5109 = vunpack.c.h.b16 %v5008
    %v5110 = vunpack.c.l.b16 %v5009
    %v5111 = vunpack.c.h.b16 %v5009
    %v5112 = vunpack.c.l.b16 %v5010
    %v5113 = vunpack.c.h.b16 %v5010
    %v5114 = vunpack.c.l.b16 %v5011
    %v5115 = vunpack.c.h.b16 %v5011
    %v5116 = vunpack.c.l.b16 %v5012
    %v5117 = vunpack.c.h.b16 %v5012
    %v5118 = vunpack.c.l.b16 %v5013
    %v5119 = vunpack.c.h.b16 %v5013
    %v5120 = vunpack.c.l.b16 %v5014
    %v5121 = vunpack.c.h.b16 %v5014
    %v5122 = vunpack.c.l.b16 %v5015
    %v5123 = vunpack.c.h.b16 %v5015
    %v5124 = vunpack.c.l.b16 %v5016
    %v5125 = vunpack.c.h.b16 %v5016
    %v5126 = vunpack.c.l.b16 %v5017
    %v5127 = vunpack.c.h.b16 %v5017
    %v5128 = vunpack.c.l.b16 %v5018
    %v5129 = vunpack.c.h.b16 %v5018
    %v5130 = vunpack.c.l.b16 %v5019
    %v5131 = vunpack.c.h.b16 %v5019
    %v5132 = vunpack.c.l.b16 %v5020
    %v5133 = vunpack.c.h.b16 %v5020
    %v5134 = vunpack.c.l.b16 %v5021
    %v5135 = vunpack.c.h.b16 %v5021
    %v5136 = vunpack.c.l.b16 %v5022
    %v5137 = vunpack.c.h.b16 %v5022
    %v5138 = vunpack.c.l.b16 %v5023
    %v5139 = vunpack.c.h.b16 %v5023
    %v5140 = vunpack.c.l.b16 %v5024
    %v5141 = vunpack.c.h.b16 %v5024
    %v5142 = vunpack.c.l.b16 %v5025
    %v5143 = vunpack.c.h.b16 %v5025
    %v5144 = vunpack.c.l.b16 %v5026
    %v5145 = vunpack.c.h.b16 %v5026
    %v5146 = vunpack.c.l.b16 %v5027
    %v5147 = vunpack.c.h.b16 %v5027
    %v5148 = vunpack.c.l.b16 %v5028
    %v5149 = vunpack.c.h.b16 %v5028
    %v5150 = vunpack.c.l.b16 %v5029
    %v5151 = vunpack.c.h.b16 %v5029
    %v5152 = vunpack.c.l.b16 %v5030
    %v5153 = vunpack.c.h.b16 %v5030
    %v5154 = vunpack.c.l.b16 %v5031
    %v5155 = vunpack.c.h.b16 %v5031
    %v5156 = vunpack.c.l.b16 %v5032
    %v5157 = vunpack.c.h.b16 %v5032
    %v5158 = vunpack.c.l.b16 %v5033
    %v5159 = vunpack.c.h.b16 %v5033
    %v5160 = vunpack.c.l.b16 %v5034
    %v5161 = vunpack.c.h.b16 %v5034
    %v5162 = vunpack.c.l.b16 %v5035
    %v5163 = vunpack.c.h.b16 %v5035
    %v5164 = vunpack.c.l.b16 %v5036
    %v5165 = vunpack.c.h.b16 %v5036
    %v5166 = vunpack.c.l.b16 %v5037
    %v5167 = vunpack.c.h.b16 %v5037
    %v5168 = vunpack.c.l.b16 %v5038
    %v5169 = vunpack.c.h.b16 %v5038
    %v5170 = vunpack.c.l.b16 %v5039
    %v5171 = vunpack.c.h.b16 %v5039
    %v5172 = vunpack.c.l.b16 %v5040
    %v5173 = vunpack.c.h.b16 %v5040
    %v5174 = vunpack.c.l.b16 %v5041
    %v5175 = vunpack.c.h.b16 %v5041
    %v5176 = vunpack.c.l.b16 %v5042
    %v5177 = vunpack.c.h.b16 %v5042
    %v5178 = vunpack.c.l.b16 %v5043
    %v5179 = vunpack.c.h.b16 %v5043
    %v5180 = vunpack.c.l.b16 %v5044
    %v5181 = vunpack.c.h.b16 %v5044
    %v5182 = vunpack.c.l.b16 %v5045
    %v5183 = vunpack.c.h.b16 %v5045
    %v5184 = vunpack.c.l.b16 %v5046
    %v5185 = vunpack.c.h.b16 %v5046
    %v5186 = vunpack.c.l.b16 %v5047
    %v5187 = vunpack.c.h.b16 %v5047
    %v5188 = vunpack.c.l.b16 %v5048
    %v5189 = vunpack.c.h.b16 %v5048
    %v5190 = vunpack.c.l.b16 %v5049
    %v5191 = vunpack.c.h.b16 %v5049
    %v5192 = vunpack.c.l.b16 %v5050
    %v5193 = vunpack.c.h.b16 %v5050
    %v5194 = vunpack.c.l.b16 %v5051
    %v5195 = vunpack.c.h.b16 %v5051
    %v5196 = vpack.c.b16 %v5108, %v5100
    %v5197 = vpack.c.b16 %v5109, %v5101
    %v5198 = vpack.c.b16 %v5110, %v5102
    %v5199 = vpack.c.b16 %v5111, %v5103
    %v5200 = vpack.c.b16 %v5112, %v5104
    %v5201 = vpack.c.b16 %v5113, %v5105
    %v5202 = vpack.c.b16 %v5114, %v5106
    %v5203 = vpack.c.b16 %v5115, %v5107
    %v5204 = vpack.c.b16 %v5124, %v5116
    %v5205 = vpack.c.b16 %v5125, %v5117
    %v5206 = vpack.c.b16 %v5126, %v5118
    %v5207 = vpack.c.b16 %v5127, %v5119
    %v5208 = vpack.c.b16 %v5128, %v5120
    %v5209 = vpack.c.b16 %v5129, %v5121
    %v5210 = vpack.c.b16 %v5130, %v5122
    %v5211 = vpack.c.b16 %v5131, %v5123
    %v5212 = vpack.c.b16 %v5140, %v5132
    %v5213 = vpack.c.b16 %v5141, %v5133
    %v5214 = vpack.c.b16 %v5142, %v5134
    %v5215 = vpack.c.b16 %v5143, %v5135
    %v5216 = vpack.c.b16 %v5144, %v5136
    %v5217 = vpack.c.b16 %v5145, %v5137
    %v5218 = vpack.c.b16 %v5146, %v5138
    %v5219 = vpack.c.b16 %v5147, %v5139
    %v5220 = vpack.c.b16 %v5156, %v5148
    %v5221 = vpack.c.b16 %v5157, %v5149
    %v5222 = vpack.c.b16 %v5158, %v5150
    %v5223 = vpack.c.b16 %v5159, %v5151
    %v5224 = vpack.c.b16 %v5160, %v5152
    %v5225 = vpack.c.b16 %v5161, %v5153
    %v5226 = vpack.c.b16 %v5162, %v5154
    %v5227 = vpack.c.b16 %v5163, %v5155
    %v5228 = vpack.c.b16 %v5172, %v5164
    %v5229 = vpack.c.b16 %v5173, %v5165
    %v5230 = vpack.c.b16 %v5174, %v5166
    %v5231 = vpack.c.b16 %v5175, %v5167
    %v5232 = vpack.c.b16 %v5176, %v5168
    %v5233 = vpack.c.b16 %v5177, %v5169
    %v5234 = vpack.c.b16 %v5178, %v5170
    %v5235 = vpack.c.b16 %v5179, %v5171
    %v5236 = vpack.c.b16 %v5188, %v5180
    %v5237 = vpack.c.b16 %v5189, %v5181
    %v5238 = vpack.c.b16 %v5190, %v5182
    %v5239 = vpack.c.b16 %v5191, %v5183
    %v5240 = vpack.c.b16 %v5192, %v5184
    %v5241 = vpack.c.b16 %v5193, %v5185
    %v5242 = vpack.c.b16 %v5194, %v5186
    %v5243 = vpack.c.b16 %v5195, %v5187
    %v5293 = vsel %vm3145, %v5002, 0
    %5295 = vmatprep.subr.bf16.mxu0 %v5197
    %5296 = vmatpush1.bf16.msra.mxu0 %v5196
    %5297 = vmatprep.subr.bf16.mxu0 %v5205
    %5298 = vmatpush1.bf16.msra.mxu0 %v5204
    %5299 = vmatprep.subr.bf16.mxu0 %v5213
    %5300 = vmatpush1.bf16.msra.mxu0 %v5212
    %5301 = vmatprep.subr.bf16.mxu0 %v5221
    %5302 = vmatpush1.bf16.msra.mxu0 %v5220
    %5303 = vmatprep.subr.bf16.mxu0 %v5229
    %5304 = vmatpush1.bf16.msra.mxu0 %v5228
    %5305 = vmatprep.subr.bf16.mxu0 %v5237
    %5306 = vmatpush1.bf16.msra.mxu0 %v5236
    %5307 = vmatprep.subr.bf16.mxu0 0
    %5308 = vmatpush1.bf16.msra.mxu0 0
    %5309 = vmatprep.subr.bf16.mxu0 0
    %5310 = vmatpush1.bf16.msra.mxu0 0
    %5311 = vmatprep.subr.bf16.mxu0 0
    %5312 = vmatpush1.bf16.msra.mxu0 0
    %5313 = vmatprep.subr.bf16.mxu0 0
    %5314 = vmatpush1.bf16.msra.mxu0 0
    %5315 = vmatprep.subr.bf16.mxu0 0
    %5316 = vmatpush1.bf16.msra.mxu0 0
    %5317 = vmatprep.subr.bf16.mxu0 0
    %5318 = vmatpush1.bf16.msra.mxu0 0
    %5319 = vmatprep.subr.bf16.mxu0 0
    %5320 = vmatpush1.bf16.msra.mxu0 0
    %5321 = vmatprep.subr.bf16.mxu0 0
    %5322 = vmatpush1.bf16.msra.mxu0 0
    %5323 = vmatprep.subr.bf16.mxu0 0
    %5324 = vmatpush1.bf16.msra.mxu0 0
    %5325 = vmatprep.subr.bf16.mxu0 0
    %5326 = vmatpush1.bf16.msra.mxu0 0
    %5327 = vmatprep.mubr.bf16.mxu0 0
    %5328 = vmatmul.mubr.bf16.gmra.mrb[0].mxu0 %v5293
    %v5329 = vpop.f32.mrb[0].mxu0
    %v5330 = vadd.f32 0.0, %v5329
    %v5331 = vpop.f32.mrb[0].mxu0
    %v5332 = vadd.f32 0.0, %v5331
    %v5333 = vpop.f32.mrb[0].mxu0
    %v5334 = vpop.f32.mrb[0].mxu0
    %5335 = vdwg.mxu0
    %5336 = vmatprep.subr.bf16.mxu0 %v5199
    %5337 = vmatpush1.bf16.msra.mxu0 %v5198
    %5338 = vmatprep.subr.bf16.mxu0 %v5207
    %5339 = vmatpush1.bf16.msra.mxu0 %v5206
    %5340 = vmatprep.subr.bf16.mxu0 %v5215
    %5341 = vmatpush1.bf16.msra.mxu0 %v5214
    %5342 = vmatprep.subr.bf16.mxu0 %v5223
    %5343 = vmatpush1.bf16.msra.mxu0 %v5222
    %5344 = vmatprep.subr.bf16.mxu0 %v5231
    %5345 = vmatpush1.bf16.msra.mxu0 %v5230
    %5346 = vmatprep.subr.bf16.mxu0 %v5239
    %5347 = vmatpush1.bf16.msra.mxu0 %v5238
    %5348 = vmatprep.subr.bf16.mxu0 0
    %5349 = vmatpush1.bf16.msra.mxu0 0
    %5350 = vmatprep.subr.bf16.mxu0 0
    %5351 = vmatpush1.bf16.msra.mxu0 0
    %5352 = vmatprep.subr.bf16.mxu0 0
    %5353 = vmatpush1.bf16.msra.mxu0 0
    %5354 = vmatprep.subr.bf16.mxu0 0
    %5355 = vmatpush1.bf16.msra.mxu0 0
    %5356 = vmatprep.subr.bf16.mxu0 0
    %5357 = vmatpush1.bf16.msra.mxu0 0
    %5358 = vmatprep.subr.bf16.mxu0 0
    %5359 = vmatpush1.bf16.msra.mxu0 0
    %5360 = vmatprep.subr.bf16.mxu0 0
    %5361 = vmatpush1.bf16.msra.mxu0 0
    %5362 = vmatprep.subr.bf16.mxu0 0
    %5363 = vmatpush1.bf16.msra.mxu0 0
    %5364 = vmatprep.subr.bf16.mxu0 0
    %5365 = vmatpush1.bf16.msra.mxu0 0
    %5366 = vmatprep.subr.bf16.mxu0 0
    %5367 = vmatpush1.bf16.msra.mxu0 0
    %5368 = vmatprep.mubr.bf16.mxu0 0
    %5369 = vmatmul.mubr.bf16.gmra.mrb[0].mxu0 %v5293
    %v5370 = vpop.f32.mrb[0].mxu0
    %v5371 = vadd.f32 0.0, %v5370
    %v5372 = vpop.f32.mrb[0].mxu0
    %v5373 = vadd.f32 0.0, %v5372
    %v5374 = vpop.f32.mrb[0].mxu0
    %v5375 = vpop.f32.mrb[0].mxu0
    %5376 = vdwg.mxu0
    %5377 = vmatprep.subr.bf16.mxu0 %v5201
    %5378 = vmatpush1.bf16.msra.mxu0 %v5200
    %5379 = vmatprep.subr.bf16.mxu0 %v5209
    %5380 = vmatpush1.bf16.msra.mxu0 %v5208
    %5381 = vmatprep.subr.bf16.mxu0 %v5217
    %5382 = vmatpush1.bf16.msra.mxu0 %v5216
    %5383 = vmatprep.subr.bf16.mxu0 %v5225
    %5384 = vmatpush1.bf16.msra.mxu0 %v5224
    %5385 = vmatprep.subr.bf16.mxu0 %v5233
    %5386 = vmatpush1.bf16.msra.mxu0 %v5232
    %5387 = vmatprep.subr.bf16.mxu0 %v5241
    %5388 = vmatpush1.bf16.msra.mxu0 %v5240
    %5389 = vmatprep.subr.bf16.mxu0 0
    %5390 = vmatpush1.bf16.msra.mxu0 0
    %5391 = vmatprep.subr.bf16.mxu0 0
    %5392 = vmatpush1.bf16.msra.mxu0 0
    %5393 = vmatprep.subr.bf16.mxu0 0
    %5394 = vmatpush1.bf16.msra.mxu0 0
    %5395 = vmatprep.subr.bf16.mxu0 0
    %5396 = vmatpush1.bf16.msra.mxu0 0
    %5397 = vmatprep.subr.bf16.mxu0 0
    %5398 = vmatpush1.bf16.msra.mxu0 0
    %5399 = vmatprep.subr.bf16.mxu0 0
    %5400 = vmatpush1.bf16.msra.mxu0 0
    %5401 = vmatprep.subr.bf16.mxu0 0
    %5402 = vmatpush1.bf16.msra.mxu0 0
    %5403 = vmatprep.subr.bf16.mxu0 0
    %5404 = vmatpush1.bf16.msra.mxu0 0
    %5405 = vmatprep.subr.bf16.mxu0 0
    %5406 = vmatpush1.bf16.msra.mxu0 0
    %5407 = vmatprep.subr.bf16.mxu0 0
    %5408 = vmatpush1.bf16.msra.mxu0 0
    %5409 = vmatprep.mubr.bf16.mxu0 0
    %5410 = vmatmul.mubr.bf16.gmra.mrb[0].mxu0 %v5293
    %v5411 = vpop.f32.mrb[0].mxu0
    %v5412 = vadd.f32 0.0, %v5411
    %v5413 = vpop.f32.mrb[0].mxu0
    %v5414 = vadd.f32 0.0, %v5413
    %v5415 = vpop.f32.mrb[0].mxu0
    %v5416 = vpop.f32.mrb[0].mxu0
    %5417 = vdwg.mxu0
    %5418 = vmatprep.subr.bf16.mxu0 %v5203
    %5419 = vmatpush1.bf16.msra.mxu0 %v5202
    %5420 = vmatprep.subr.bf16.mxu0 %v5211
    %5421 = vmatpush1.bf16.msra.mxu0 %v5210
    %5422 = vmatprep.subr.bf16.mxu0 %v5219
    %5423 = vmatpush1.bf16.msra.mxu0 %v5218
    %5424 = vmatprep.subr.bf16.mxu0 %v5227
    %5425 = vmatpush1.bf16.msra.mxu0 %v5226
    %5426 = vmatprep.subr.bf16.mxu0 %v5235
    %5427 = vmatpush1.bf16.msra.mxu0 %v5234
    %5428 = vmatprep.subr.bf16.mxu0 %v5243
    %5429 = vmatpush1.bf16.msra.mxu0 %v5242
    %5430 = vmatprep.subr.bf16.mxu0 0
    %5431 = vmatpush1.bf16.msra.mxu0 0
    %5432 = vmatprep.subr.bf16.mxu0 0
    %5433 = vmatpush1.bf16.msra.mxu0 0
    %5434 = vmatprep.subr.bf16.mxu0 0
    %5435 = vmatpush1.bf16.msra.mxu0 0
    %5436 = vmatprep.subr.bf16.mxu0 0
    %5437 = vmatpush1.bf16.msra.mxu0 0
    %5438 = vmatprep.subr.bf16.mxu0 0
    %5439 = vmatpush1.bf16.msra.mxu0 0
    %5440 = vmatprep.subr.bf16.mxu0 0
    %5441 = vmatpush1.bf16.msra.mxu0 0
    %5442 = vmatprep.subr.bf16.mxu0 0
    %5443 = vmatpush1.bf16.msra.mxu0 0
    %5444 = vmatprep.subr.bf16.mxu0 0
    %5445 = vmatpush1.bf16.msra.mxu0 0
    %5446 = vmatprep.subr.bf16.mxu0 0
    %5447 = vmatpush1.bf16.msra.mxu0 0
    %5448 = vmatprep.subr.bf16.mxu0 0
    %5449 = vmatpush1.bf16.msra.mxu0 0
    %5450 = vmatprep.mubr.bf16.mxu0 0
    %5451 = vmatmul.mubr.bf16.gmra.mrb[0].mxu0 %v5293
    %v5452 = vpop.f32.mrb[0].mxu0
    %v5453 = vadd.f32 0.0, %v5452
    %v5454 = vpop.f32.mrb[0].mxu0
    %v5455 = vadd.f32 0.0, %v5454
    %v5456 = vpop.f32.mrb[0].mxu0
    %v5457 = vpop.f32.mrb[0].mxu0
    %5458 = vdwg.mxu0
    %v5459 = vadd.f32 %v4992, %v5330
    %v5460 = vadd.f32 %v4993, %v5332
    %v5461 = vadd.f32 %v4994, %v5371
    %v5462 = vadd.f32 %v4995, %v5373
    %v5463 = vadd.f32 %v4996, %v5412
    %v5464 = vadd.f32 %v4997, %v5414
    %v5465 = vadd.f32 %v4998, %v5453
    %v5466 = vadd.f32 %v4999, %v5455
    %s5467 = scalar_lea.vmem [#allocation6], 5
    %v5468 = vld [vmem:[%s5467] ss:$13 sm:$0x3]
    %v5469 = vpack.c.bf16 %v5468, %v5468
    %s5470 = scalar_lea.vmem %s7, 1920
    %v5471 = vld [vmem:[%s5470] sm:$0xff]
    %v5472 = vld [vmem:[%s5470 + $0x8] sm:$0xff]
    %v5473 = vld [vmem:[%s5470 + $0x10] sm:$0xff]
    %v5474 = vld [vmem:[%s5470 + $0x18] sm:$0xff]
    %v5475 = vld [vmem:[%s5470 + $0x20] sm:$0xff]
    %v5476 = vld [vmem:[%s5470 + $0x28] sm:$0xff]
    %v5477 = vld [vmem:[%s5470 + $0x30] sm:$0xff]
    %v5478 = vld [vmem:[%s5470 + $0x38] sm:$0xff]
    %v5479 = vld [vmem:[%s5470 + $0x40] sm:$0xff]
    %v5480 = vld [vmem:[%s5470 + $0x48] sm:$0xff]
    %v5481 = vld [vmem:[%s5470 + $0x50] sm:$0xff]
    %v5482 = vld [vmem:[%s5470 + $0x58] sm:$0xff]
    %v5483 = vld [vmem:[%s5470 + $0x60] sm:$0xff]
    %v5484 = vld [vmem:[%s5470 + $0x68] sm:$0xff]
    %v5485 = vld [vmem:[%s5470 + $0x70] sm:$0xff]
    %v5486 = vld [vmem:[%s5470 + $0x78] sm:$0xff]
    %v5487 = vld [vmem:[%s5470 + $0x80] sm:$0xff]
    %v5488 = vld [vmem:[%s5470 + $0x88] sm:$0xff]
    %v5489 = vld [vmem:[%s5470 + $0x90] sm:$0xff]
    %v5490 = vld [vmem:[%s5470 + $0x98] sm:$0xff]
    %v5491 = vld [vmem:[%s5470 + $0xa0] sm:$0xff]
    %v5492 = vld [vmem:[%s5470 + $0xa8] sm:$0xff]
    %v5493 = vld [vmem:[%s5470 + $0xb0] sm:$0xff]
    %v5494 = vld [vmem:[%s5470 + $0xb8] sm:$0xff]
    %v5495 = vld [vmem:[%s5470 + $0xc0] sm:$0xff]
    %v5496 = vld [vmem:[%s5470 + $0xc8] sm:$0xff]
    %v5497 = vld [vmem:[%s5470 + $0xd0] sm:$0xff]
    %v5498 = vld [vmem:[%s5470 + $0xd8] sm:$0xff]
    %v5499 = vld [vmem:[%s5470 + $0xe0] sm:$0xff]
    %v5500 = vld [vmem:[%s5470 + $0xe8] sm:$0xff]
    %v5501 = vld [vmem:[%s5470 + $0xf0] sm:$0xff]
    %v5502 = vld [vmem:[%s5470 + $0xf8] sm:$0xff]
    %v5503 = vld [vmem:[%s5470 + $0x100] sm:$0xff]
    %v5504 = vld [vmem:[%s5470 + $0x108] sm:$0xff]
    %v5505 = vld [vmem:[%s5470 + $0x110] sm:$0xff]
    %v5506 = vld [vmem:[%s5470 + $0x118] sm:$0xff]
    %v5507 = vld [vmem:[%s5470 + $0x120] sm:$0xff]
    %v5508 = vld [vmem:[%s5470 + $0x128] sm:$0xff]
    %v5509 = vld [vmem:[%s5470 + $0x130] sm:$0xff]
    %v5510 = vld [vmem:[%s5470 + $0x138] sm:$0xff]
    %v5511 = vld [vmem:[%s5470 + $0x140] sm:$0xff]
    %v5512 = vld [vmem:[%s5470 + $0x148] sm:$0xff]
    %v5513 = vld [vmem:[%s5470 + $0x150] sm:$0xff]
    %v5514 = vld [vmem:[%s5470 + $0x158] sm:$0xff]
    %v5515 = vld [vmem:[%s5470 + $0x160] sm:$0xff]
    %v5516 = vld [vmem:[%s5470 + $0x168] sm:$0xff]
    %v5517 = vld [vmem:[%s5470 + $0x170] sm:$0xff]
    %v5518 = vld [vmem:[%s5470 + $0x178] sm:$0xff]
    %v5567 = vunpack.c.l.b16 %v5471
    %v5568 = vunpack.c.h.b16 %v5471
    %v5569 = vunpack.c.l.b16 %v5472
    %v5570 = vunpack.c.h.b16 %v5472
    %v5571 = vunpack.c.l.b16 %v5473
    %v5572 = vunpack.c.h.b16 %v5473
    %v5573 = vunpack.c.l.b16 %v5474
    %v5574 = vunpack.c.h.b16 %v5474
    %v5575 = vunpack.c.l.b16 %v5475
    %v5576 = vunpack.c.h.b16 %v5475
    %v5577 = vunpack.c.l.b16 %v5476
    %v5578 = vunpack.c.h.b16 %v5476
    %v5579 = vunpack.c.l.b16 %v5477
    %v5580 = vunpack.c.h.b16 %v5477
    %v5581 = vunpack.c.l.b16 %v5478
    %v5582 = vunpack.c.h.b16 %v5478
    %v5583 = vunpack.c.l.b16 %v5479
    %v5584 = vunpack.c.h.b16 %v5479
    %v5585 = vunpack.c.l.b16 %v5480
    %v5586 = vunpack.c.h.b16 %v5480
    %v5587 = vunpack.c.l.b16 %v5481
    %v5588 = vunpack.c.h.b16 %v5481
    %v5589 = vunpack.c.l.b16 %v5482
    %v5590 = vunpack.c.h.b16 %v5482
    %v5591 = vunpack.c.l.b16 %v5483
    %v5592 = vunpack.c.h.b16 %v5483
    %v5593 = vunpack.c.l.b16 %v5484
    %v5594 = vunpack.c.h.b16 %v5484
    %v5595 = vunpack.c.l.b16 %v5485
    %v5596 = vunpack.c.h.b16 %v5485
    %v5597 = vunpack.c.l.b16 %v5486
    %v5598 = vunpack.c.h.b16 %v5486
    %v5599 = vunpack.c.l.b16 %v5487
    %v5600 = vunpack.c.h.b16 %v5487
    %v5601 = vunpack.c.l.b16 %v5488
    %v5602 = vunpack.c.h.b16 %v5488
    %v5603 = vunpack.c.l.b16 %v5489
    %v5604 = vunpack.c.h.b16 %v5489
    %v5605 = vunpack.c.l.b16 %v5490
    %v5606 = vunpack.c.h.b16 %v5490
    %v5607 = vunpack.c.l.b16 %v5491
    %v5608 = vunpack.c.h.b16 %v5491
    %v5609 = vunpack.c.l.b16 %v5492
    %v5610 = vunpack.c.h.b16 %v5492
    %v5611 = vunpack.c.l.b16 %v5493
    %v5612 = vunpack.c.h.b16 %v5493
    %v5613 = vunpack.c.l.b16 %v5494
    %v5614 = vunpack.c.h.b16 %v5494
    %v5615 = vunpack.c.l.b16 %v5495
    %v5616 = vunpack.c.h.b16 %v5495
    %v5617 = vunpack.c.l.b16 %v5496
    %v5618 = vunpack.c.h.b16 %v5496
    %v5619 = vunpack.c.l.b16 %v5497
    %v5620 = vunpack.c.h.b16 %v5497
    %v5621 = vunpack.c.l.b16 %v5498
    %v5622 = vunpack.c.h.b16 %v5498
    %v5623 = vunpack.c.l.b16 %v5499
    %v5624 = vunpack.c.h.b16 %v5499
    %v5625 = vunpack.c.l.b16 %v5500
    %v5626 = vunpack.c.h.b16 %v5500
    %v5627 = vunpack.c.l.b16 %v5501
    %v5628 = vunpack.c.h.b16 %v5501
    %v5629 = vunpack.c.l.b16 %v5502
    %v5630 = vunpack.c.h.b16 %v5502
    %v5631 = vunpack.c.l.b16 %v5503
    %v5632 = vunpack.c.h.b16 %v5503
    %v5633 = vunpack.c.l.b16 %v5504
    %v5634 = vunpack.c.h.b16 %v5504
    %v5635 = vunpack.c.l.b16 %v5505
    %v5636 = vunpack.c.h.b16 %v5505
    %v5637 = vunpack.c.l.b16 %v5506
    %v5638 = vunpack.c.h.b16 %v5506
    %v5639 = vunpack.c.l.b16 %v5507
    %v5640 = vunpack.c.h.b16 %v5507
    %v5641 = vunpack.c.l.b16 %v5508
    %v5642 = vunpack.c.h.b16 %v5508
    %v5643 = vunpack.c.l.b16 %v5509
    %v5644 = vunpack.c.h.b16 %v5509
    %v5645 = vunpack.c.l.b16 %v5510
    %v5646 = vunpack.c.h.b16 %v5510
    %v5647 = vunpack.c.l.b16 %v5511
    %v5648 = vunpack.c.h.b16 %v5511
    %v5649 = vunpack.c.l.b16 %v5512
    %v5650 = vunpack.c.h.b16 %v5512
    %v5651 = vunpack.c.l.b16 %v5513
    %v5652 = vunpack.c.h.b16 %v5513
    %v5653 = vunpack.c.l.b16 %v5514
    %v5654 = vunpack.c.h.b16 %v5514
    %v5655 = vunpack.c.l.b16 %v5515
    %v5656 = vunpack.c.h.b16 %v5515
    %v5657 = vunpack.c.l.b16 %v5516
    %v5658 = vunpack.c.h.b16 %v5516
    %v5659 = vunpack.c.l.b16 %v5517
    %v5660 = vunpack.c.h.b16 %v5517
    %v5661 = vunpack.c.l.b16 %v5518
    %v5662 = vunpack.c.h.b16 %v5518
    %v5663 = vpack.c.b16 %v5575, %v5567
    %v5664 = vpack.c.b16 %v5576, %v5568
    %v5665 = vpack.c.b16 %v5577, %v5569
    %v5666 = vpack.c.b16 %v5578, %v5570
    %v5667 = vpack.c.b16 %v5579, %v5571
    %v5668 = vpack.c.b16 %v5580, %v5572
    %v5669 = vpack.c.b16 %v5581, %v5573
    %v5670 = vpack.c.b16 %v5582, %v5574
    %v5671 = vpack.c.b16 %v5591, %v5583
    %v5672 = vpack.c.b16 %v5592, %v5584
    %v5673 = vpack.c.b16 %v5593, %v5585
    %v5674 = vpack.c.b16 %v5594, %v5586
    %v5675 = vpack.c.b16 %v5595, %v5587
    %v5676 = vpack.c.b16 %v5596, %v5588
    %v5677 = vpack.c.b16 %v5597, %v5589
    %v5678 = vpack.c.b16 %v5598, %v5590
    %v5679 = vpack.c.b16 %v5607, %v5599
    %v5680 = vpack.c.b16 %v5608, %v5600
    %v5681 = vpack.c.b16 %v5609, %v5601
    %v5682 = vpack.c.b16 %v5610, %v5602
    %v5683 = vpack.c.b16 %v5611, %v5603
    %v5684 = vpack.c.b16 %v5612, %v5604
    %v5685 = vpack.c.b16 %v5613, %v5605
    %v5686 = vpack.c.b16 %v5614, %v5606
    %v5687 = vpack.c.b16 %v5623, %v5615
    %v5688 = vpack.c.b16 %v5624, %v5616
    %v5689 = vpack.c.b16 %v5625, %v5617
    %v5690 = vpack.c.b16 %v5626, %v5618
    %v5691 = vpack.c.b16 %v5627, %v5619
    %v5692 = vpack.c.b16 %v5628, %v5620
    %v5693 = vpack.c.b16 %v5629, %v5621
    %v5694 = vpack.c.b16 %v5630, %v5622
    %v5695 = vpack.c.b16 %v5639, %v5631
    %v5696 = vpack.c.b16 %v5640, %v5632
    %v5697 = vpack.c.b16 %v5641, %v5633
    %v5698 = vpack.c.b16 %v5642, %v5634
    %v5699 = vpack.c.b16 %v5643, %v5635
    %v5700 = vpack.c.b16 %v5644, %v5636
    %v5701 = vpack.c.b16 %v5645, %v5637
    %v5702 = vpack.c.b16 %v5646, %v5638
    %v5703 = vpack.c.b16 %v5655, %v5647
    %v5704 = vpack.c.b16 %v5656, %v5648
    %v5705 = vpack.c.b16 %v5657, %v5649
    %v5706 = vpack.c.b16 %v5658, %v5650
    %v5707 = vpack.c.b16 %v5659, %v5651
    %v5708 = vpack.c.b16 %v5660, %v5652
    %v5709 = vpack.c.b16 %v5661, %v5653
    %v5710 = vpack.c.b16 %v5662, %v5654
    %v5760 = vsel %vm3145, %v5469, 0
    %5762 = vmatprep.subr.bf16.mxu0 %v5664
    %5763 = vmatpush1.bf16.msra.mxu0 %v5663
    %5764 = vmatprep.subr.bf16.mxu0 %v5672
    %5765 = vmatpush1.bf16.msra.mxu0 %v5671
    %5766 = vmatprep.subr.bf16.mxu0 %v5680
    %5767 = vmatpush1.bf16.msra.mxu0 %v5679
    %5768 = vmatprep.subr.bf16.mxu0 %v5688
    %5769 = vmatpush1.bf16.msra.mxu0 %v5687
    %5770 = vmatprep.subr.bf16.mxu0 %v5696
    %5771 = vmatpush1.bf16.msra.mxu0 %v5695
    %5772 = vmatprep.subr.bf16.mxu0 %v5704
    %5773 = vmatpush1.bf16.msra.mxu0 %v5703
    %5774 = vmatprep.subr.bf16.mxu0 0
    %5775 = vmatpush1.bf16.msra.mxu0 0
    %5776 = vmatprep.subr.bf16.mxu0 0
    %5777 = vmatpush1.bf16.msra.mxu0 0
    %5778 = vmatprep.subr.bf16.mxu0 0
    %5779 = vmatpush1.bf16.msra.mxu0 0
    %5780 = vmatprep.subr.bf16.mxu0 0
    %5781 = vmatpush1.bf16.msra.mxu0 0
    %5782 = vmatprep.subr.bf16.mxu0 0
    %5783 = vmatpush1.bf16.msra.mxu0 0
    %5784 = vmatprep.subr.bf16.mxu0 0
    %5785 = vmatpush1.bf16.msra.mxu0 0
    %5786 = vmatprep.subr.bf16.mxu0 0
    %5787 = vmatpush1.bf16.msra.mxu0 0
    %5788 = vmatprep.subr.bf16.mxu0 0
    %5789 = vmatpush1.bf16.msra.mxu0 0
    %5790 = vmatprep.subr.bf16.mxu0 0
    %5791 = vmatpush1.bf16.msra.mxu0 0
    %5792 = vmatprep.subr.bf16.mxu0 0
    %5793 = vmatpush1.bf16.msra.mxu0 0
    %5794 = vmatprep.mubr.bf16.mxu0 0
    %5795 = vmatmul.mubr.bf16.gmra.mrb[0].mxu0 %v5760
    %v5796 = vpop.f32.mrb[0].mxu0
    %v5797 = vadd.f32 0.0, %v5796
    %v5798 = vpop.f32.mrb[0].mxu0
    %v5799 = vadd.f32 0.0, %v5798
    %v5800 = vpop.f32.mrb[0].mxu0
    %v5801 = vpop.f32.mrb[0].mxu0
    %5802 = vdwg.mxu0
    %5803 = vmatprep.subr.bf16.mxu0 %v5666
    %5804 = vmatpush1.bf16.msra.mxu0 %v5665
    %5805 = vmatprep.subr.bf16.mxu0 %v5674
    %5806 = vmatpush1.bf16.msra.mxu0 %v5673
    %5807 = vmatprep.subr.bf16.mxu0 %v5682
    %5808 = vmatpush1.bf16.msra.mxu0 %v5681
    %5809 = vmatprep.subr.bf16.mxu0 %v5690
    %5810 = vmatpush1.bf16.msra.mxu0 %v5689
    %5811 = vmatprep.subr.bf16.mxu0 %v5698
    %5812 = vmatpush1.bf16.msra.mxu0 %v5697
    %5813 = vmatprep.subr.bf16.mxu0 %v5706
    %5814 = vmatpush1.bf16.msra.mxu0 %v5705
    %5815 = vmatprep.subr.bf16.mxu0 0
    %5816 = vmatpush1.bf16.msra.mxu0 0
    %5817 = vmatprep.subr.bf16.mxu0 0
    %5818 = vmatpush1.bf16.msra.mxu0 0
    %5819 = vmatprep.subr.bf16.mxu0 0
    %5820 = vmatpush1.bf16.msra.mxu0 0
    %5821 = vmatprep.subr.bf16.mxu0 0
    %5822 = vmatpush1.bf16.msra.mxu0 0
    %5823 = vmatprep.subr.bf16.mxu0 0
    %5824 = vmatpush1.bf16.msra.mxu0 0
    %5825 = vmatprep.subr.bf16.mxu0 0
    %5826 = vmatpush1.bf16.msra.mxu0 0
    %5827 = vmatprep.subr.bf16.mxu0 0
    %5828 = vmatpush1.bf16.msra.mxu0 0
    %5829 = vmatprep.subr.bf16.mxu0 0
    %5830 = vmatpush1.bf16.msra.mxu0 0
    %5831 = vmatprep.subr.bf16.mxu0 0
    %5832 = vmatpush1.bf16.msra.mxu0 0
    %5833 = vmatprep.subr.bf16.mxu0 0
    %5834 = vmatpush1.bf16.msra.mxu0 0
    %5835 = vmatprep.mubr.bf16.mxu0 0
    %5836 = vmatmul.mubr.bf16.gmra.mrb[0].mxu0 %v5760
    %v5837 = vpop.f32.mrb[0].mxu0
    %v5838 = vadd.f32 0.0, %v5837
    %v5839 = vpop.f32.mrb[0].mxu0
    %v5840 = vadd.f32 0.0, %v5839
    %v5841 = vpop.f32.mrb[0].mxu0
    %v5842 = vpop.f32.mrb[0].mxu0
    %5843 = vdwg.mxu0
    %5844 = vmatprep.subr.bf16.mxu0 %v5668
    %5845 = vmatpush1.bf16.msra.mxu0 %v5667
    %5846 = vmatprep.subr.bf16.mxu0 %v5676
    %5847 = vmatpush1.bf16.msra.mxu0 %v5675
    %5848 = vmatprep.subr.bf16.mxu0 %v5684
    %5849 = vmatpush1.bf16.msra.mxu0 %v5683
    %5850 = vmatprep.subr.bf16.mxu0 %v5692
    %5851 = vmatpush1.bf16.msra.mxu0 %v5691
    %5852 = vmatprep.subr.bf16.mxu0 %v5700
    %5853 = vmatpush1.bf16.msra.mxu0 %v5699
    %5854 = vmatprep.subr.bf16.mxu0 %v5708
    %5855 = vmatpush1.bf16.msra.mxu0 %v5707
    %5856 = vmatprep.subr.bf16.mxu0 0
    %5857 = vmatpush1.bf16.msra.mxu0 0
    %5858 = vmatprep.subr.bf16.mxu0 0
    %5859 = vmatpush1.bf16.msra.mxu0 0
    %5860 = vmatprep.subr.bf16.mxu0 0
    %5861 = vmatpush1.bf16.msra.mxu0 0
    %5862 = vmatprep.subr.bf16.mxu0 0
    %5863 = vmatpush1.bf16.msra.mxu0 0
    %5864 = vmatprep.subr.bf16.mxu0 0
    %5865 = vmatpush1.bf16.msra.mxu0 0
    %5866 = vmatprep.subr.bf16.mxu0 0
    %5867 = vmatpush1.bf16.msra.mxu0 0
    %5868 = vmatprep.subr.bf16.mxu0 0
    %5869 = vmatpush1.bf16.msra.mxu0 0
    %5870 = vmatprep.subr.bf16.mxu0 0
    %5871 = vmatpush1.bf16.msra.mxu0 0
    %5872 = vmatprep.subr.bf16.mxu0 0
    %5873 = vmatpush1.bf16.msra.mxu0 0
    %5874 = vmatprep.subr.bf16.mxu0 0
    %5875 = vmatpush1.bf16.msra.mxu0 0
    %5876 = vmatprep.mubr.bf16.mxu0 0
    %5877 = vmatmul.mubr.bf16.gmra.mrb[0].mxu0 %v5760
    %v5878 = vpop.f32.mrb[0].mxu0
    %v5879 = vadd.f32 0.0, %v5878
    %v5880 = vpop.f32.mrb[0].mxu0
    %v5881 = vadd.f32 0.0, %v5880
    %v5882 = vpop.f32.mrb[0].mxu0
    %v5883 = vpop.f32.mrb[0].mxu0
    %5884 = vdwg.mxu0
    %5885 = vmatprep.subr.bf16.mxu0 %v5670
    %5886 = vmatpush1.bf16.msra.mxu0 %v5669
    %5887 = vmatprep.subr.bf16.mxu0 %v5678
    %5888 = vmatpush1.bf16.msra.mxu0 %v5677
    %5889 = vmatprep.subr.bf16.mxu0 %v5686
    %5890 = vmatpush1.bf16.msra.mxu0 %v5685
    %5891 = vmatprep.subr.bf16.mxu0 %v5694
    %5892 = vmatpush1.bf16.msra.mxu0 %v5693
    %5893 = vmatprep.subr.bf16.mxu0 %v5702
    %5894 = vmatpush1.bf16.msra.mxu0 %v5701
    %5895 = vmatprep.subr.bf16.mxu0 %v5710
    %5896 = vmatpush1.bf16.msra.mxu0 %v5709
    %5897 = vmatprep.subr.bf16.mxu0 0
    %5898 = vmatpush1.bf16.msra.mxu0 0
    %5899 = vmatprep.subr.bf16.mxu0 0
    %5900 = vmatpush1.bf16.msra.mxu0 0
    %5901 = vmatprep.subr.bf16.mxu0 0
    %5902 = vmatpush1.bf16.msra.mxu0 0
    %5903 = vmatprep.subr.bf16.mxu0 0
    %5904 = vmatpush1.bf16.msra.mxu0 0
    %5905 = vmatprep.subr.bf16.mxu0 0
    %5906 = vmatpush1.bf16.msra.mxu0 0
    %5907 = vmatprep.subr.bf16.mxu0 0
    %5908 = vmatpush1.bf16.msra.mxu0 0
    %5909 = vmatprep.subr.bf16.mxu0 0
    %5910 = vmatpush1.bf16.msra.mxu0 0
    %5911 = vmatprep.subr.bf16.mxu0 0
    %5912 = vmatpush1.bf16.msra.mxu0 0
    %5913 = vmatprep.subr.bf16.mxu0 0
    %5914 = vmatpush1.bf16.msra.mxu0 0
    %5915 = vmatprep.subr.bf16.mxu0 0
    %5916 = vmatpush1.bf16.msra.mxu0 0
    %5917 = vmatprep.mubr.bf16.mxu0 0
    %5918 = vmatmul.mubr.bf16.gmra.mrb[0].mxu0 %v5760
    %v5919 = vpop.f32.mrb[0].mxu0
    %v5920 = vadd.f32 0.0, %v5919
    %v5921 = vpop.f32.mrb[0].mxu0
    %v5922 = vadd.f32 0.0, %v5921
    %v5923 = vpop.f32.mrb[0].mxu0
    %v5924 = vpop.f32.mrb[0].mxu0
    %5925 = vdwg.mxu0
    %v5926 = vadd.f32 %v5459, %v5797
    %v5927 = vadd.f32 %v5460, %v5799
    %v5928 = vadd.f32 %v5461, %v5838
    %v5929 = vadd.f32 %v5462, %v5840
    %v5930 = vadd.f32 %v5463, %v5879
    %v5931 = vadd.f32 %v5464, %v5881
    %v5932 = vadd.f32 %v5465, %v5920
    %v5933 = vadd.f32 %v5466, %v5922
    %v5934 = vld [vmem:[%s8] sm:$0xff]
    %v5936 = vlaneseq
    %v5937 = vshrl.u32 %v5936, 7
    %v5938 = vsub.s32 0, %v5937
    %v5939 = vrot.slane %v5934, %v5938
    %v5940 = vlaneseq
    %v5941 = vshrl.u32 %v5940, 7
    %v5942 = vsub.s32 1, %v5941
    %v5943 = vrot.slane %v5934, %v5942
    %v5944 = vlaneseq
    %v5945 = vshrl.u32 %v5944, 7
    %v5946 = vsub.s32 2, %v5945
    %v5947 = vrot.slane %v5934, %v5946
    %v5948 = vlaneseq
    %v5949 = vshrl.u32 %v5948, 7
    %v5950 = vsub.s32 3, %v5949
    %v5951 = vrot.slane %v5934, %v5950
    %v5952 = vlaneseq
    %v5953 = vshrl.u32 %v5952, 7
    %v5954 = vsub.s32 4, %v5953
    %v5955 = vrot.slane %v5934, %v5954
    %v5956 = vlaneseq
    %v5957 = vshrl.u32 %v5956, 7
    %v5958 = vsub.s32 5, %v5957
    %v5959 = vrot.slane %v5934, %v5958
    %v5960 = vlaneseq
    %v5961 = vshrl.u32 %v5960, 7
    %v5962 = vsub.s32 6, %v5961
    %v5963 = vrot.slane %v5934, %v5962
    %v5964 = vlaneseq
    %v5965 = vshrl.u32 %v5964, 7
    %v5966 = vsub.s32 7, %v5965
    %v5967 = vrot.slane %v5934, %v5966
    %v5976 = vadd.f32 %v5926, %v5939
    %v5977 = vadd.f32 %v5927, %v5943
    %v5978 = vadd.f32 %v5928, %v5947
    %v5979 = vadd.f32 %v5929, %v5951
    %v5980 = vadd.f32 %v5930, %v5955
    %v5981 = vadd.f32 %v5931, %v5959
    %v5982 = vadd.f32 %v5932, %v5963
    %v5983 = vadd.f32 %v5933, %v5967
    %v5984 = vmax.f32 %v5976, 0.0
    %v5985 = vmax.f32 %v5977, 0.0
    %v5986 = vmax.f32 %v5978, 0.0
    %v5987 = vmax.f32 %v5979, 0.0
    %v5988 = vmax.f32 %v5980, 0.0
    %v5989 = vmax.f32 %v5981, 0.0
    %v5990 = vmax.f32 %v5982, 0.0
    %v5991 = vmax.f32 %v5983, 0.0
    %v5992 = vpack.c.bf16 %v5984, %v5984
    %v5993 = vpack.c.bf16 %v5985, %v5985
    %v5994 = vpack.c.bf16 %v5986, %v5986
    %v5995 = vpack.c.bf16 %v5987, %v5987
    %v5996 = vpack.c.bf16 %v5988, %v5988
    %v5997 = vpack.c.bf16 %v5989, %v5989
    %v5998 = vpack.c.bf16 %v5990, %v5990
    %v5999 = vpack.c.bf16 %v5991, %v5991
    %v6000 = vld [vmem:[%s9] sm:$0xff]
    %v6001 = vld [vmem:[%s10] sm:$0x1]
    %v6003 = vlaneseq
    %v6004 = vshrl.u32 %v6003, 7
    %v6005 = vsub.s32 0, %v6004
    %v6006 = vrot.slane %v6001, %v6005
    %v6009 = vcombine.high %v6000, %v6000
    %v6011 = vunpack.c.l.s4 1966171168
    %v6012 = vunpack.c.0.s8 %v6011
    %v6013 = vlaneseq
    %v6014 = vshrl.u32 %v6013, 7
    %v6015 = vsub.s32 %v6012, %v6014
    %v6016 = vrot.slane %v6000, %v6015
    %v6018 = vunpack.c.l.s4 1966171168
    %v6019 = vunpack.c.0.s8 %v6018
    %v6020 = vlaneseq
    %v6021 = vshrl.u32 %v6020, 7
    %v6022 = vsub.s32 %v6019, %v6021
    %v6023 = vrot.slane %v6009, %v6022
    %v6024 = vcombine.high %v6016, %v6016
    %v6025 = vcombine.high %v6023, %v6023
    %v6027 = vunpack.c.l.s4 1966171168
    %v6028 = vunpack.c.0.s8 %v6027
    %v6029 = vlaneseq
    %v6030 = vshrl.u32 %v6029, 7
    %v6031 = vsub.s32 %v6028, %v6030
    %v6032 = vrot.slane %v6016, %v6031
    %v6034 = vunpack.c.l.s4 1966171168
    %v6035 = vunpack.c.0.s8 %v6034
    %v6036 = vlaneseq
    %v6037 = vshrl.u32 %v6036, 7
    %v6038 = vsub.s32 %v6035, %v6037
    %v6039 = vrot.slane %v6023, %v6038
    %v6041 = vunpack.c.l.s4 1966171168
    %v6042 = vunpack.c.0.s8 %v6041
    %v6043 = vlaneseq
    %v6044 = vshrl.u32 %v6043, 7
    %v6045 = vsub.s32 %v6042, %v6044
    %v6046 = vrot.slane %v6024, %v6045
    %v6048 = vunpack.c.l.s4 1966171168
    %v6049 = vunpack.c.0.s8 %v6048
    %v6050 = vlaneseq
    %v6051 = vshrl.u32 %v6050, 7
    %v6052 = vsub.s32 %v6049, %v6051
    %v6053 = vrot.slane %v6025, %v6052
    %v6054 = vcombine.high %v6032, %v6032
    %v6055 = vcombine.high %v6039, %v6039
    %v6056 = vcombine.high %v6046, %v6046
    %v6057 = vcombine.high %v6053, %v6053
    %6066 = vmatprep.subr.bf16.mxu0 %v6046
    %6067 = vmatpush1.bf16.xpose.msra.mxu0 %v6032
    %6068 = vmatprep.subr.bf16.mxu0 0
    %6069 = vmatpush1.bf16.xpose.msra.mxu0 0
    %6070 = vmatprep.subr.bf16.mxu0 0
    %6071 = vmatpush1.bf16.xpose.msra.mxu0 0
    %6072 = vmatprep.subr.bf16.mxu0 0
    %6073 = vmatpush1.bf16.xpose.msra.mxu0 0
    %6074 = vmatprep.subr.bf16.mxu0 0
    %6075 = vmatpush1.bf16.xpose.msra.mxu0 0
    %6076 = vmatprep.subr.bf16.mxu0 0
    %6077 = vmatpush1.bf16.xpose.msra.mxu0 0
    %6078 = vmatprep.subr.bf16.mxu0 0
    %6079 = vmatpush1.bf16.xpose.msra.mxu0 0
    %6080 = vmatprep.subr.bf16.mxu0 0
    %6081 = vmatpush1.bf16.xpose.msra.mxu0 0
    %6082 = vmatprep.subr.bf16.mxu0 0
    %6083 = vmatpush1.bf16.xpose.msra.mxu0 0
    %6084 = vmatprep.subr.bf16.mxu0 0
    %6085 = vmatpush1.bf16.xpose.msra.mxu0 0
    %6086 = vmatprep.subr.bf16.mxu0 0
    %6087 = vmatpush1.bf16.xpose.msra.mxu0 0
    %6088 = vmatprep.subr.bf16.mxu0 0
    %6089 = vmatpush1.bf16.xpose.msra.mxu0 0
    %6090 = vmatprep.subr.bf16.mxu0 0
    %6091 = vmatpush1.bf16.xpose.msra.mxu0 0
    %6092 = vmatprep.subr.bf16.mxu0 0
    %6093 = vmatpush1.bf16.xpose.msra.mxu0 0
    %6094 = vmatprep.subr.bf16.mxu0 0
    %6095 = vmatpush1.bf16.xpose.msra.mxu0 0
    %6096 = vmatprep.subr.bf16.mxu0 0
    %6097 = vmatpush1.bf16.xpose.msra.mxu0 0
    %6098 = vmatprep.mubr.bf16.mxu0 %v5993
    %6099 = vmatmul.mubr.bf16.gmra.mrb[0].mxu0 %v5992
    %v6100 = vpop.f32.mrb[0].mxu0
    %v6101 = vadd.f32 %v6006, %v6100
    %v6102 = vpop.f32.mrb[0].mxu0
    %v6103 = vpop.f32.mrb[0].mxu0
    %v6104 = vpop.f32.mrb[0].mxu0
    %6105 = vdwg.mxu0
    %6106 = vmatprep.subr.bf16.mxu0 %v6056
    %6107 = vmatpush1.bf16.xpose.msra.mxu0 %v6054
    %6108 = vmatprep.subr.bf16.mxu0 0
    %6109 = vmatpush1.bf16.xpose.msra.mxu0 0
    %6110 = vmatprep.subr.bf16.mxu0 0
    %6111 = vmatpush1.bf16.xpose.msra.mxu0 0
    %6112 = vmatprep.subr.bf16.mxu0 0
    %6113 = vmatpush1.bf16.xpose.msra.mxu0 0
    %6114 = vmatprep.subr.bf16.mxu0 0
    %6115 = vmatpush1.bf16.xpose.msra.mxu0 0
    %6116 = vmatprep.subr.bf16.mxu0 0
    %6117 = vmatpush1.bf16.xpose.msra.mxu0 0
    %6118 = vmatprep.subr.bf16.mxu0 0
    %6119 = vmatpush1.bf16.xpose.msra.mxu0 0
    %6120 = vmatprep.subr.bf16.mxu0 0
    %6121 = vmatpush1.bf16.xpose.msra.mxu0 0
    %6122 = vmatprep.subr.bf16.mxu0 0
    %6123 = vmatpush1.bf16.xpose.msra.mxu0 0
    %6124 = vmatprep.subr.bf16.mxu0 0
    %6125 = vmatpush1.bf16.xpose.msra.mxu0 0
    %6126 = vmatprep.subr.bf16.mxu0 0
    %6127 = vmatpush1.bf16.xpose.msra.mxu0 0
    %6128 = vmatprep.subr.bf16.mxu0 0
    %6129 = vmatpush1.bf16.xpose.msra.mxu0 0
    %6130 = vmatprep.subr.bf16.mxu0 0
    %6131 = vmatpush1.bf16.xpose.msra.mxu0 0
    %6132 = vmatprep.subr.bf16.mxu0 0
    %6133 = vmatpush1.bf16.xpose.msra.mxu0 0
    %6134 = vmatprep.subr.bf16.mxu0 0
    %6135 = vmatpush1.bf16.xpose.msra.mxu0 0
    %6136 = vmatprep.subr.bf16.mxu0 0
    %6137 = vmatpush1.bf16.xpose.msra.mxu0 0
    %6138 = vmatprep.mubr.bf16.mxu0 %v5995
    %6139 = vmatmul.mubr.bf16.gmra.mrb[0].mxu0 %v5994
    %v6140 = vpop.f32.mrb[0].mxu0
    %v6141 = vadd.f32 %v6101, %v6140
    %v6142 = vpop.f32.mrb[0].mxu0
    %v6143 = vpop.f32.mrb[0].mxu0
    %v6144 = vpop.f32.mrb[0].mxu0
    %6145 = vdwg.mxu0
    %6146 = vmatprep.subr.bf16.mxu0 %v6053
    %6147 = vmatpush1.bf16.xpose.msra.mxu0 %v6039
    %6148 = vmatprep.subr.bf16.mxu0 0
    %6149 = vmatpush1.bf16.xpose.msra.mxu0 0
    %6150 = vmatprep.subr.bf16.mxu0 0
    %6151 = vmatpush1.bf16.xpose.msra.mxu0 0
    %6152 = vmatprep.subr.bf16.mxu0 0
    %6153 = vmatpush1.bf16.xpose.msra.mxu0 0
    %6154 = vmatprep.subr.bf16.mxu0 0
    %6155 = vmatpush1.bf16.xpose.msra.mxu0 0
    %6156 = vmatprep.subr.bf16.mxu0 0
    %6157 = vmatpush1.bf16.xpose.msra.mxu0 0
    %6158 = vmatprep.subr.bf16.mxu0 0
    %6159 = vmatpush1.bf16.xpose.msra.mxu0 0
    %6160 = vmatprep.subr.bf16.mxu0 0
    %6161 = vmatpush1.bf16.xpose.msra.mxu0 0
    %6162 = vmatprep.subr.bf16.mxu0 0
    %6163 = vmatpush1.bf16.xpose.msra.mxu0 0
    %6164 = vmatprep.subr.bf16.mxu0 0
    %6165 = vmatpush1.bf16.xpose.msra.mxu0 0
    %6166 = vmatprep.subr.bf16.mxu0 0
    %6167 = vmatpush1.bf16.xpose.msra.mxu0 0
    %6168 = vmatprep.subr.bf16.mxu0 0
    %6169 = vmatpush1.bf16.xpose.msra.mxu0 0
    %6170 = vmatprep.subr.bf16.mxu0 0
    %6171 = vmatpush1.bf16.xpose.msra.mxu0 0
    %6172 = vmatprep.subr.bf16.mxu0 0
    %6173 = vmatpush1.bf16.xpose.msra.mxu0 0
    %6174 = vmatprep.subr.bf16.mxu0 0
    %6175 = vmatpush1.bf16.xpose.msra.mxu0 0
    %6176 = vmatprep.subr.bf16.mxu0 0
    %6177 = vmatpush1.bf16.xpose.msra.mxu0 0
    %6178 = vmatprep.mubr.bf16.mxu0 %v5997
    %6179 = vmatmul.mubr.bf16.gmra.mrb[0].mxu0 %v5996
    %v6180 = vpop.f32.mrb[0].mxu0
    %v6181 = vadd.f32 %v6141, %v6180
    %v6182 = vpop.f32.mrb[0].mxu0
    %v6183 = vpop.f32.mrb[0].mxu0
    %v6184 = vpop.f32.mrb[0].mxu0
    %6185 = vdwg.mxu0
    %6186 = vmatprep.subr.bf16.mxu0 %v6057
    %6187 = vmatpush1.bf16.xpose.msra.mxu0 %v6055
    %6188 = vmatprep.subr.bf16.mxu0 0
    %6189 = vmatpush1.bf16.xpose.msra.mxu0 0
    %6190 = vmatprep.subr.bf16.mxu0 0
    %6191 = vmatpush1.bf16.xpose.msra.mxu0 0
    %6192 = vmatprep.subr.bf16.mxu0 0
    %6193 = vmatpush1.bf16.xpose.msra.mxu0 0
    %6194 = vmatprep.subr.bf16.mxu0 0
    %6195 = vmatpush1.bf16.xpose.msra.mxu0 0
    %6196 = vmatprep.subr.bf16.mxu0 0
    %6197 = vmatpush1.bf16.xpose.msra.mxu0 0
    %6198 = vmatprep.subr.bf16.mxu0 0
    %6199 = vmatpush1.bf16.xpose.msra.mxu0 0
    %6200 = vmatprep.subr.bf16.mxu0 0
    %6201 = vmatpush1.bf16.xpose.msra.mxu0 0
    %6202 = vmatprep.subr.bf16.mxu0 0
    %6203 = vmatpush1.bf16.xpose.msra.mxu0 0
    %6204 = vmatprep.subr.bf16.mxu0 0
    %6205 = vmatpush1.bf16.xpose.msra.mxu0 0
    %6206 = vmatprep.subr.bf16.mxu0 0
    %6207 = vmatpush1.bf16.xpose.msra.mxu0 0
    %6208 = vmatprep.subr.bf16.mxu0 0
    %6209 = vmatpush1.bf16.xpose.msra.mxu0 0
    %6210 = vmatprep.subr.bf16.mxu0 0
    %6211 = vmatpush1.bf16.xpose.msra.mxu0 0
    %6212 = vmatprep.subr.bf16.mxu0 0
    %6213 = vmatpush1.bf16.xpose.msra.mxu0 0
    %6214 = vmatprep.subr.bf16.mxu0 0
    %6215 = vmatpush1.bf16.xpose.msra.mxu0 0
    %6216 = vmatprep.subr.bf16.mxu0 0
    %6217 = vmatpush1.bf16.xpose.msra.mxu0 0
    %6218 = vmatprep.mubr.bf16.mxu0 %v5999
    %6219 = vmatmul.mubr.bf16.gmra.mrb[0].mxu0 %v5998
    %v6220 = vpop.f32.mrb[0].mxu0
    %v6221 = vadd.f32 %v6181, %v6220
    %v6222 = vpop.f32.mrb[0].mxu0
    %v6223 = vpop.f32.mrb[0].mxu0
    %v6224 = vpop.f32.mrb[0].mxu0
    %6225 = vdwg.mxu0
    %vm6226 = vcmask 9216
    %6227 = vst.msk [vmem:[#allocation7] sm:$0x3] %vm6226, %v6221
    // Predicated region
    $region46: #{deepsea_forward.1} parent=1 // pred_check
      _
    $region47: #{deepsea_forward.1} parent=1 // pred_check_branch
      %6229 = sbr.rel (0) target = $region49
    $region48: #{deepsea_forward.1} parent=1 // pred_region
      %s6231 = ssub.s32 32, 32
      %6232 = vsyncadd [#allocation8], %s6231
      %s6234 = sshll.u32 [#allocation7], 4
      %s6235 = int_to_ptr.vmem [resolvable:$true] %s6234
      %6237 = dma.vmem_to_hbm [thread:$0]  %s6235, 32, %s11, [#allocation8]
    $region49: #{deepsea_forward.1} parent=1 // pred_fallthru
      _
    // Predicated region
    $region50: #{deepsea_forward.1} parent=1 // pred_check
      _
    $region51: #{deepsea_forward.1} parent=1 // pred_check_branch
      %6239 = sbr.rel (0) target = $region53
    $region52: #{deepsea_forward.1} parent=1 // pred_region
      %6240 = dma.done [#allocation8], 32
    $region53: #{deepsea_forward.1} parent=1 // pred_fallthru
      _
    %6241 = vsyncpa [#allocation8], 1

</llo_original>
